<compile_context>
chip_gen: v7x
topology: tpu7x:2x2x1
jax: 0.10.0
libtpu: 0.0.40
codegen_flags: <defaults>
</compile_context>

<pallas_src>
import math
import functools

import jax
import jax.numpy as jnp
from jax import lax
from jax.experimental import pallas as pl
from jax.experimental.pallas import tpu as pltpu


# ----------------------------------------------------------------------------
# Pallas kernel: one grid step == one batch tile of TB samples (batch on lanes)
# ----------------------------------------------------------------------------
def _det_kernel(step_ref, y_ref, H_ref, x0_ref, h0_ref,
                wh_ref, bh_ref, wx_ref, bx_ref,
                x_out_ref, h_out_ref, outs_ref,
                *, project_times, iterations, k_winners):
    M, N, TB = H_ref.shape          # static block shape: (M, N, batch_tile)
    HID = h0_ref.shape[0]
    f32 = jnp.float32

    s = step_ref[0, 0]              # scalar step size (SMEM)
    two_s = 2.0 * s                 # hoisted: invariant across all iterations

    x = x0_ref[...]                 # (N,   TB)
    wh = wh_ref[...]                # (HID, N + HID)  fused [x | h] weight
    bh = bh_ref[...]                # (HID, 1)
    wx = wx_ref[...]                # (N,   HID)
    bx = bx_ref[...]                # (N,   1)

    # --- H^T y and H^T H in rolled-diagonal (symmetric) form ----------------
    # hthr[s][n, b] = HtH[n, (n+s) % N, b] = sum_m H[m, n, b] * H[m, (n+s)%N, b]
    # Only s = 0..N//2 is accumulated on the VPU; s > N//2 is recovered from
    # symmetry (HtH[n,k] == HtH[k,n]) with a single sublane roll per diagonal.
    nhalf = N // 2
    Hty = jnp.zeros((N, TB), f32)
    hthr = [jnp.zeros((N, TB), f32) for _ in range(nhalf + 1)]
    for m in range(M):
        Hm = H_ref[m]                               # (N, TB) tile load
        Hty = Hty + Hm * y_ref[m:m + 1, :]          # sublane-broadcast FMA
        hthr[0] = hthr[0] + Hm * Hm                 # main diagonal
        for sft in range(1, nhalf + 1):             # upper diagonals only
            hthr[sft] = hthr[sft] + Hm * pltpu.roll(Hm, N - sft, axis=0)
    for sft in range(nhalf + 1, N):                 # mirror the lower half
        hthr.append(pltpu.roll(hthr[N - sft], N - sft, axis=0))

    gHty = two_s * Hty                              # hoisted: 2*s*H^T y
    g = [two_s * t for t in hthr]                   # fold 2*s into HtH once

    for p in range(project_times):
        # --- projected gradient descent: x <- x + 2s*Hty - (2s*HtH) x -------
        # (2s*HtH) x computed from the rolled diagonals; the rolls of x run on
        # the XLU slot which has slack, the FMAs stay on the VPU.
        for _ in range(iterations):
            acc = g[0] * x
            for sft in range(1, N):
                acc = acc + g[sft] * pltpu.roll(x, N - sft, axis=0)
            x = x + gHty - acc

        # --- RecurrentCell.linear_h(cat([x, h_prev])) : one fused MXU matmul
        h_prev = h0_ref[...] if p == 0 else h_out_ref[...]
        cat = jnp.concatenate([x, h_prev], axis=0)                 # (N+HID, TB)
        h_lin = jnp.dot(wh, cat, preferred_element_type=f32) + bh  # (HID, TB)

        # --- ActivationSparsity: k-winners-take-all over the feature axis ---
        # keep h_lin[i] iff #{j : h_lin[j] > h_lin[i]} < k_winners, i.e.
        # h_lin[i] >= k-th largest value (ties kept), matching the reference.
        # TODO(synk): training-time boosting (duty cycles) of ActivationSparsity
        # and SparseWeights.rezeroWeights() are training-only and not modeled.
        rank = jnp.zeros((HID, TB), f32)
        for j in range(HID):
            rank = rank + (h_lin[j:j + 1, :] > h_lin).astype(f32)
        h = jnp.where(rank < float(k_winners), h_lin, 0.0)
        h_out_ref[...] = h              # park h in the output VMEM block

        # --- RecurrentCell.linear_x(h) : MXU matmul -------------------------
        x = jnp.dot(wx, h, preferred_element_type=f32) + bx        # (N, TB)
        outs_ref[p] = x                 # lane-dense (N, TB) store

    if project_times == 0:              # degenerate case: pass h through
        h_out_ref[...] = h0_ref[...]
    x_out_ref[...] = x


# ----------------------------------------------------------------------------
# Wrapper: layout plumbing (transpose/pad once), grid over batch tiles
# ----------------------------------------------------------------------------
def det_model_forward(y, H, x, h, params, step_size, iterations,
                      project_times, k_winners, batch_tile=None):
    wh, bh, wx, bx = params
    B, M = y.shape
    N = H.shape[-1]
    HID = h.shape[-1]
    if x.ndim == 3:                       # PyTorch passes x as (B, 2tx, 1)
        x = x[..., 0]

    if batch_tile is None:
        # Keep lanes full (>=128) while giving v7x's two TensorCores at least
        # two grid steps whenever the batch allows it; TB=256 for large B
        # keeps the strided H DMA rows >= 1 KiB (helps v5e HBM efficiency).
        # TODO(synk): TB=512 is feasible if the 2s*HtH slabs are parked in a
        # pltpu.VMEM scratch; not worth it at these model sizes.
        batch_tile = 128 if B <= 256 else 256
    TB = batch_tile
    B_pad = pl.cdiv(B, TB) * TB
    pad = B_pad - B

    f32 = jnp.float32
    # Batch-on-lanes layout: features on sublanes, batch on the lane axis.
    # (Producing this layout upstream would save one extra HBM round-trip of
    #  H; here it is done once in the wrapper.)
    y_t = jnp.pad(y.astype(f32).T, ((0, 0), (0, pad)))                    # (M, Bp)
    H_t = jnp.pad(jnp.transpose(H.astype(f32), (1, 2, 0)),
                  ((0, 0), (0, 0), (0, pad)))                             # (M, N, Bp)
    x_t = jnp.pad(x.astype(f32).T, ((0, 0), (0, pad)))                    # (N, Bp)
    h_t = jnp.pad(h.astype(f32).T, ((0, 0), (0, pad)))                    # (HID, Bp)
    wh_c = wh.astype(f32)                                                 # (HID, N+HID)
    bh_c = bh.astype(f32).reshape(HID, 1)
    wx_c = wx.astype(f32)                                                 # (N, HID)
    bx_c = bx.astype(f32).reshape(N, 1)
    step = jnp.full((1, 1), step_size, dtype=f32)

    kern = functools.partial(_det_kernel, project_times=project_times,
                             iterations=iterations, k_winners=k_winners)

    # Advisory cost hint for XLA's scheduler (VPU-dominated; MXU negligible).
    flops_per_col = (
        2 * M * N * (N // 2 + 2)                               # Hty + symmetric HtH
        + project_times * iterations * (2 * N * N + 4 * N)     # PGD updates
        + project_times * (2 * HID * (N + HID) + 2 * N * HID   # recurrent linears
                           + 3 * HID * HID)                    # k-WTA ranking
    )
    bytes_accessed = 4 * (y_t.size + H_t.size + x_t.size + h_t.size
                          + wh_c.size + bh_c.size + wx_c.size + bx_c.size
                          + B_pad * (N + HID + project_times * N))

    out_shape = (
        jax.ShapeDtypeStruct((N, B_pad), f32),                    # final x^T
        jax.ShapeDtypeStruct((HID, B_pad), f32),                  # final h^T
        jax.ShapeDtypeStruct((project_times, N, B_pad), f32),     # per-projection x^T
    )

    x_out_t, h_out_t, outs_t = pl.pallas_call(
        kern,
        out_shape=out_shape,
        grid=(B_pad // TB,),
        in_specs=[
            pl.BlockSpec(memory_space=pltpu.MemorySpace.SMEM),     # step_size scalar
            pl.BlockSpec((M, TB), lambda b: (0, b)),               # y^T
            pl.BlockSpec((M, N, TB), lambda b: (0, 0, b)),         # H  (M, N, B)
            pl.BlockSpec((N, TB), lambda b: (0, b)),               # x0^T
            pl.BlockSpec((HID, TB), lambda b: (0, b)),             # h0^T
            pl.BlockSpec((HID, N + HID), lambda b: (0, 0)),        # Wh (fused [x|h])
            pl.BlockSpec((HID, 1), lambda b: (0, 0)),              # bh
            pl.BlockSpec((N, HID), lambda b: (0, 0)),              # Wx
            pl.BlockSpec((N, 1), lambda b: (0, 0)),                # bx
        ],
        out_specs=(
            pl.BlockSpec((N, TB), lambda b: (0, b)),
            pl.BlockSpec((HID, TB), lambda b: (0, b)),
            pl.BlockSpec((project_times, N, TB), lambda b: (0, 0, b)),
        ),
        compiler_params=pltpu.CompilerParams(
            dimension_semantics=("parallel",)),
        cost_estimate=pl.CostEstimate(flops=int(flops_per_col * B_pad),
                                      transcendentals=0,
                                      bytes_accessed=int(bytes_accessed)),
    )(step, y_t, H_t, x_t, h_t, wh_c, bh_c, wx_c, bx_c)

    # Back to the module's batch-major layout, dropping batch padding.
    # Single fused transpose for all projection outputs (item 7 of the review).
    x_out = x_out_t[:, :B].T
    h_out = h_out_t[:, :B].T
    outs_bm = jnp.transpose(outs_t[:, :, :B], (0, 2, 1))
    outputs = [outs_bm[p] for p in range(project_times)]
    return x_out, h_out, outputs


# ----------------------------------------------------------------------------
# Deterministic synthetic parameter init (normalizeSparseWeights + SparseWeights)
# ----------------------------------------------------------------------------
def _init_sparse_linear(key, out_dim, in_dim, weight_sparsity=0.4):
    fan = int(in_dim * weight_sparsity)
    gain = math.sqrt(2.0 / (1.0 + 5.0))            # calculate_gain('leaky_relu', sqrt(5))
    std = gain / math.sqrt(fan)
    bound = math.sqrt(3.0) * std
    kw, kb, km = jax.random.split(key, 3)
    w = jax.random.uniform(kw, (out_dim, in_dim), jnp.float32, -bound, bound)
    b_bound = 1.0 / math.sqrt(fan)
    b = jax.random.uniform(kb, (out_dim,), jnp.float32, -b_bound, b_bound)
    # SparseWeights: zero round((1 - sparsity) * in_dim) weights per output row
    num_zeros = int(round((1.0 - weight_sparsity) * in_dim))
    r = jax.random.uniform(km, (out_dim, in_dim))
    ranks = jnp.argsort(jnp.argsort(r, axis=1), axis=1)
    mask = (ranks >= num_zeros).astype(jnp.float32)
    return w * mask, b


# ----------------------------------------------------------------------------
# Pure-JAX reference for validation
# ----------------------------------------------------------------------------
def reference_forward(y, H, x, h, params, step_size, iterations,
                      project_times, k_winners):
    wh, bh, wx, bx = params
    if x.ndim == 3:
        x = x[..., 0]
    Hty = jnp.einsum('bmn,bm->bn', H, y)
    HtH = jnp.einsum('bmn,bmk->bnk', H, H)
    outs = []
    for _ in range(project_times):
        for _ in range(iterations):
            x = x + 2.0 * step_size * (Hty - jnp.einsum('bnk,bk->bn', HtH, x))
        h_lin = jnp.concatenate([x, h], axis=-1) @ wh.T + bh
        thresh = lax.top_k(h_lin, k_winners)[0][:, -1:]
        h = jnp.where(h_lin >= thresh, h_lin, 0.0)
        x = h @ wx.T + bx
        outs.append(x)
    return x, h, outs


if __name__ == "__main__":
    # Full f32 in the XLA reference so kernel/reference agree tightly.
    jax.config.update("jax_default_matmul_precision", "highest")

    # Small shapes consistent with the module: tx=4 -> 2tx=8, rx=4 -> 2rx+2tx=16
    B, tx, rx, HID = 2, 4, 4, 32
    N = 2 * tx
    M = 2 * rx + 2 * tx
    project_times = 2
    iterations = 3
    step_size = 0.01
    act_sparsity = 0.4
    k_winners = int((1.0 - act_sparsity) * HID)    # ActivationSparsity keep-count

    key = jax.random.PRNGKey(0)
    k_y, k_H, k_x, k_h, k_lh, k_lx = jax.random.split(key, 6)
    y = jax.random.normal(k_y, (B, M), jnp.float32)
    H = jax.random.normal(k_H, (B, M, N), jnp.float32) * 0.5
    x = jax.random.normal(k_x, (B, N, 1), jnp.float32)
    h = jax.random.normal(k_h, (B, HID), jnp.float32)

    # linear_h: (HID, 2tx + HID) acting on cat([x, h]);  linear_x: (2tx, HID)
    wh, bh = _init_sparse_linear(k_lh, HID, N + HID)
    wx, bx = _init_sparse_linear(k_lx, N, HID)
    params = (wh, bh, wx, bx)

    x_out, h_out, outputs = det_model_forward(
        y, H, x, h, params, step_size, iterations, project_times, k_winners)
    jax.block_until_ready((x_out, h_out, outputs))

    x_ref, h_ref, outs_ref = reference_forward(
        y, H, x, h, params, step_size, iterations, project_times, k_winners)
    assert jnp.allclose(x_out, x_ref, rtol=2e-3, atol=2e-3)
    assert jnp.allclose(h_out, h_ref, rtol=2e-3, atol=2e-3)
    for p in range(project_times):
        assert jnp.allclose(outputs[p], outs_ref[p], rtol=2e-3, atol=2e-3)

    print("KERNEL_OK")
</pallas_src>

<mosaic_0001>
module attributes {stable_mosaic.version = 11 : i64} {
  func.func @_det_kernel(%arg0: i32, %arg1: memref<1x1xf32, #tpu.memory_space<smem>>, %arg2: memref<16x128xf32, #tpu.memory_space<vmem>>, %arg3: memref<16x8x128xf32, #tpu.memory_space<vmem>>, %arg4: memref<8x128xf32, #tpu.memory_space<vmem>>, %arg5: memref<32x128xf32, #tpu.memory_space<vmem>>, %arg6: memref<32x40xf32, #tpu.memory_space<vmem>>, %arg7: memref<32x1xf32, #tpu.memory_space<vmem>>, %arg8: memref<8x32xf32, #tpu.memory_space<vmem>>, %arg9: memref<8x1xf32, #tpu.memory_space<vmem>>, %arg10: memref<8x128xf32, #tpu.memory_space<vmem>>, %arg11: memref<32x128xf32, #tpu.memory_space<vmem>>, %arg12: memref<2x8x128xf32, #tpu.memory_space<vmem>>) attributes {dimension_semantics = [#tpu.dimension_semantics<parallel>], iteration_bounds = array<i64: 1>, scalar_prefetch = 0 : i64, scratch_operands = 0 : i64, tpu.core_type = #tpu.core_type<tc>, window_params = [{transform_indices = @transform_0, window_bounds = array<i64: 1, 1>}, {transform_indices = @transform_1, window_bounds = array<i64: 16, 128>}, {transform_indices = @transform_2, window_bounds = array<i64: 16, 8, 128>}, {transform_indices = @transform_3, window_bounds = array<i64: 8, 128>}, {transform_indices = @transform_4, window_bounds = array<i64: 32, 128>}, {pipeline_mode = #tpu.pipeline_mode<synchronous>, transform_indices = @transform_5, window_bounds = array<i64: 32, 40>}, {pipeline_mode = #tpu.pipeline_mode<synchronous>, transform_indices = @transform_6, window_bounds = array<i64: 32, 1>}, {pipeline_mode = #tpu.pipeline_mode<synchronous>, transform_indices = @transform_7, window_bounds = array<i64: 8, 32>}, {pipeline_mode = #tpu.pipeline_mode<synchronous>, transform_indices = @transform_8, window_bounds = array<i64: 8, 1>}, {transform_indices = @transform_9, window_bounds = array<i64: 8, 128>}, {transform_indices = @transform_10, window_bounds = array<i64: 32, 128>}, {transform_indices = @transform_11, window_bounds = array<i64: 2, 8, 128>}]} {
    %c0 = arith.constant 0 : index
    %c0_0 = arith.constant 0 : index
    %0 = memref.load %arg1[%c0, %c0_0] : memref<1x1xf32, #tpu.memory_space<smem>>
    %cst = arith.constant 2.000000e+00 : f32
    %1 = arith.mulf %cst, %0 : f32
    %c0_1 = arith.constant 0 : index
    %c0_2 = arith.constant 0 : index
    %2 = vector.load %arg4[%c0_1, %c0_2] : memref<8x128xf32, #tpu.memory_space<vmem>>, vector<8x128xf32>
    %c0_3 = arith.constant 0 : index
    %c0_4 = arith.constant 0 : index
    %3 = vector.load %arg6[%c0_3, %c0_4] : memref<32x40xf32, #tpu.memory_space<vmem>>, vector<32x40xf32>
    %c0_5 = arith.constant 0 : index
    %c0_6 = arith.constant 0 : index
    %4 = vector.load %arg7[%c0_5, %c0_6] : memref<32x1xf32, #tpu.memory_space<vmem>>, vector<32x1xf32>
    %c0_7 = arith.constant 0 : index
    %c0_8 = arith.constant 0 : index
    %5 = vector.load %arg8[%c0_7, %c0_8] : memref<8x32xf32, #tpu.memory_space<vmem>>, vector<8x32xf32>
    %c0_9 = arith.constant 0 : index
    %c0_10 = arith.constant 0 : index
    %6 = vector.load %arg9[%c0_9, %c0_10] : memref<8x1xf32, #tpu.memory_space<vmem>>, vector<8x1xf32>
    %cst_11 = arith.constant 0.000000e+00 : f32
    %7 = vector.broadcast %cst_11 : f32 to vector<8x128xf32>
    %cst_12 = arith.constant 0.000000e+00 : f32
    %8 = vector.broadcast %cst_12 : f32 to vector<8x128xf32>
    %cst_13 = arith.constant 0.000000e+00 : f32
    %9 = vector.broadcast %cst_13 : f32 to vector<8x128xf32>
    %cst_14 = arith.constant 0.000000e+00 : f32
    %10 = vector.broadcast %cst_14 : f32 to vector<8x128xf32>
    %cst_15 = arith.constant 0.000000e+00 : f32
    %11 = vector.broadcast %cst_15 : f32 to vector<8x128xf32>
    %cst_16 = arith.constant 0.000000e+00 : f32
    %12 = vector.broadcast %cst_16 : f32 to vector<8x128xf32>
    %c0_17 = arith.constant 0 : index
    %c0_18 = arith.constant 0 : index
    %c0_19 = arith.constant 0 : index
    %13 = vector.load %arg3[%c0_17, %c0_18, %c0_19] : memref<16x8x128xf32, #tpu.memory_space<vmem>>, vector<1x8x128xf32>
    %14 = vector.shape_cast %13 : vector<1x8x128xf32> to vector<8x128xf32>
    %c0_20 = arith.constant 0 : index
    %c0_21 = arith.constant 0 : index
    %15 = vector.load %arg2[%c0_20, %c0_21] : memref<16x128xf32, #tpu.memory_space<vmem>>, vector<1x128xf32>
    %16 = vector.broadcast %15 : vector<1x128xf32> to vector<8x128xf32>
    %17 = arith.mulf %14, %16 : vector<8x128xf32>
    %18 = arith.addf %7, %17 : vector<8x128xf32>
    %19 = arith.mulf %14, %14 : vector<8x128xf32>
    %20 = arith.addf %8, %19 : vector<8x128xf32>
    %c7_i32 = arith.constant 7 : i32
    %21 = tpu.dynamic_rotate %14 by %c7_i32 dim 0 : vector<8x128xf32>, i32 -> vector<8x128xf32>
    %22 = arith.mulf %14, %21 : vector<8x128xf32>
    %23 = arith.addf %9, %22 : vector<8x128xf32>
    %c6_i32 = arith.constant 6 : i32
    %24 = tpu.dynamic_rotate %14 by %c6_i32 dim 0 : vector<8x128xf32>, i32 -> vector<8x128xf32>
    %25 = arith.mulf %14, %24 : vector<8x128xf32>
    %26 = arith.addf %10, %25 : vector<8x128xf32>
    %c5_i32 = arith.constant 5 : i32
    %27 = tpu.dynamic_rotate %14 by %c5_i32 dim 0 : vector<8x128xf32>, i32 -> vector<8x128xf32>
    %28 = arith.mulf %14, %27 : vector<8x128xf32>
    %29 = arith.addf %11, %28 : vector<8x128xf32>
    %c4_i32 = arith.constant 4 : i32
    %30 = tpu.dynamic_rotate %14 by %c4_i32 dim 0 : vector<8x128xf32>, i32 -> vector<8x128xf32>
    %31 = arith.mulf %14, %30 : vector<8x128xf32>
    %32 = arith.addf %12, %31 : vector<8x128xf32>
    %c1 = arith.constant 1 : index
    %c0_22 = arith.constant 0 : index
    %c0_23 = arith.constant 0 : index
    %33 = vector.load %arg3[%c1, %c0_22, %c0_23] : memref<16x8x128xf32, #tpu.memory_space<vmem>>, vector<1x8x128xf32>
    %34 = vector.shape_cast %33 : vector<1x8x128xf32> to vector<8x128xf32>
    %c1_24 = arith.constant 1 : index
    %c0_25 = arith.constant 0 : index
    %35 = vector.load %arg2[%c1_24, %c0_25] : memref<16x128xf32, #tpu.memory_space<vmem>>, vector<1x128xf32>
    %36 = vector.broadcast %35 : vector<1x128xf32> to vector<8x128xf32>
    %37 = arith.mulf %34, %36 : vector<8x128xf32>
    %38 = arith.addf %18, %37 : vector<8x128xf32>
    %39 = arith.mulf %34, %34 : vector<8x128xf32>
    %40 = arith.addf %20, %39 : vector<8x128xf32>
    %c7_i32_26 = arith.constant 7 : i32
    %41 = tpu.dynamic_rotate %34 by %c7_i32_26 dim 0 : vector<8x128xf32>, i32 -> vector<8x128xf32>
    %42 = arith.mulf %34, %41 : vector<8x128xf32>
    %43 = arith.addf %23, %42 : vector<8x128xf32>
    %c6_i32_27 = arith.constant 6 : i32
    %44 = tpu.dynamic_rotate %34 by %c6_i32_27 dim 0 : vector<8x128xf32>, i32 -> vector<8x128xf32>
    %45 = arith.mulf %34, %44 : vector<8x128xf32>
    %46 = arith.addf %26, %45 : vector<8x128xf32>
    %c5_i32_28 = arith.constant 5 : i32
    %47 = tpu.dynamic_rotate %34 by %c5_i32_28 dim 0 : vector<8x128xf32>, i32 -> vector<8x128xf32>
    %48 = arith.mulf %34, %47 : vector<8x128xf32>
    %49 = arith.addf %29, %48 : vector<8x128xf32>
    %c4_i32_29 = arith.constant 4 : i32
    %50 = tpu.dynamic_rotate %34 by %c4_i32_29 dim 0 : vector<8x128xf32>, i32 -> vector<8x128xf32>
    %51 = arith.mulf %34, %50 : vector<8x128xf32>
    %52 = arith.addf %32, %51 : vector<8x128xf32>
    %c2 = arith.constant 2 : index
    %c0_30 = arith.constant 0 : index
    %c0_31 = arith.constant 0 : index
    %53 = vector.load %arg3[%c2, %c0_30, %c0_31] : memref<16x8x128xf32, #tpu.memory_space<vmem>>, vector<1x8x128xf32>
    %54 = vector.shape_cast %53 : vector<1x8x128xf32> to vector<8x128xf32>
    %c2_32 = arith.constant 2 : index
    %c0_33 = arith.constant 0 : index
    %55 = vector.load %arg2[%c2_32, %c0_33] : memref<16x128xf32, #tpu.memory_space<vmem>>, vector<1x128xf32>
    %56 = vector.broadcast %55 : vector<1x128xf32> to vector<8x128xf32>
    %57 = arith.mulf %54, %56 : vector<8x128xf32>
    %58 = arith.addf %38, %57 : vector<8x128xf32>
    %59 = arith.mulf %54, %54 : vector<8x128xf32>
    %60 = arith.addf %40, %59 : vector<8x128xf32>
    %c7_i32_34 = arith.constant 7 : i32
    %61 = tpu.dynamic_rotate %54 by %c7_i32_34 dim 0 : vector<8x128xf32>, i32 -> vector<8x128xf32>
    %62 = arith.mulf %54, %61 : vector<8x128xf32>
    %63 = arith.addf %43, %62 : vector<8x128xf32>
    %c6_i32_35 = arith.constant 6 : i32
    %64 = tpu.dynamic_rotate %54 by %c6_i32_35 dim 0 : vector<8x128xf32>, i32 -> vector<8x128xf32>
    %65 = arith.mulf %54, %64 : vector<8x128xf32>
    %66 = arith.addf %46, %65 : vector<8x128xf32>
    %c5_i32_36 = arith.constant 5 : i32
    %67 = tpu.dynamic_rotate %54 by %c5_i32_36 dim 0 : vector<8x128xf32>, i32 -> vector<8x128xf32>
    %68 = arith.mulf %54, %67 : vector<8x128xf32>
    %69 = arith.addf %49, %68 : vector<8x128xf32>
    %c4_i32_37 = arith.constant 4 : i32
    %70 = tpu.dynamic_rotate %54 by %c4_i32_37 dim 0 : vector<8x128xf32>, i32 -> vector<8x128xf32>
    %71 = arith.mulf %54, %70 : vector<8x128xf32>
    %72 = arith.addf %52, %71 : vector<8x128xf32>
    %c3 = arith.constant 3 : index
    %c0_38 = arith.constant 0 : index
    %c0_39 = arith.constant 0 : index
    %73 = vector.load %arg3[%c3, %c0_38, %c0_39] : memref<16x8x128xf32, #tpu.memory_space<vmem>>, vector<1x8x128xf32>
    %74 = vector.shape_cast %73 : vector<1x8x128xf32> to vector<8x128xf32>
    %c3_40 = arith.constant 3 : index
    %c0_41 = arith.constant 0 : index
    %75 = vector.load %arg2[%c3_40, %c0_41] : memref<16x128xf32, #tpu.memory_space<vmem>>, vector<1x128xf32>
    %76 = vector.broadcast %75 : vector<1x128xf32> to vector<8x128xf32>
    %77 = arith.mulf %74, %76 : vector<8x128xf32>
    %78 = arith.addf %58, %77 : vector<8x128xf32>
    %79 = arith.mulf %74, %74 : vector<8x128xf32>
    %80 = arith.addf %60, %79 : vector<8x128xf32>
    %c7_i32_42 = arith.constant 7 : i32
    %81 = tpu.dynamic_rotate %74 by %c7_i32_42 dim 0 : vector<8x128xf32>, i32 -> vector<8x128xf32>
    %82 = arith.mulf %74, %81 : vector<8x128xf32>
    %83 = arith.addf %63, %82 : vector<8x128xf32>
    %c6_i32_43 = arith.constant 6 : i32
    %84 = tpu.dynamic_rotate %74 by %c6_i32_43 dim 0 : vector<8x128xf32>, i32 -> vector<8x128xf32>
    %85 = arith.mulf %74, %84 : vector<8x128xf32>
    %86 = arith.addf %66, %85 : vector<8x128xf32>
    %c5_i32_44 = arith.constant 5 : i32
    %87 = tpu.dynamic_rotate %74 by %c5_i32_44 dim 0 : vector<8x128xf32>, i32 -> vector<8x128xf32>
    %88 = arith.mulf %74, %87 : vector<8x128xf32>
    %89 = arith.addf %69, %88 : vector<8x128xf32>
    %c4_i32_45 = arith.constant 4 : i32
    %90 = tpu.dynamic_rotate %74 by %c4_i32_45 dim 0 : vector<8x128xf32>, i32 -> vector<8x128xf32>
    %91 = arith.mulf %74, %90 : vector<8x128xf32>
    %92 = arith.addf %72, %91 : vector<8x128xf32>
    %c4 = arith.constant 4 : index
    %c0_46 = arith.constant 0 : index
    %c0_47 = arith.constant 0 : index
    %93 = vector.load %arg3[%c4, %c0_46, %c0_47] : memref<16x8x128xf32, #tpu.memory_space<vmem>>, vector<1x8x128xf32>
    %94 = vector.shape_cast %93 : vector<1x8x128xf32> to vector<8x128xf32>
    %c4_48 = arith.constant 4 : index
    %c0_49 = arith.constant 0 : index
    %95 = vector.load %arg2[%c4_48, %c0_49] : memref<16x128xf32, #tpu.memory_space<vmem>>, vector<1x128xf32>
    %96 = vector.broadcast %95 : vector<1x128xf32> to vector<8x128xf32>
    %97 = arith.mulf %94, %96 : vector<8x128xf32>
    %98 = arith.addf %78, %97 : vector<8x128xf32>
    %99 = arith.mulf %94, %94 : vector<8x128xf32>
    %100 = arith.addf %80, %99 : vector<8x128xf32>
    %c7_i32_50 = arith.constant 7 : i32
    %101 = tpu.dynamic_rotate %94 by %c7_i32_50 dim 0 : vector<8x128xf32>, i32 -> vector<8x128xf32>
    %102 = arith.mulf %94, %101 : vector<8x128xf32>
    %103 = arith.addf %83, %102 : vector<8x128xf32>
    %c6_i32_51 = arith.constant 6 : i32
    %104 = tpu.dynamic_rotate %94 by %c6_i32_51 dim 0 : vector<8x128xf32>, i32 -> vector<8x128xf32>
    %105 = arith.mulf %94, %104 : vector<8x128xf32>
    %106 = arith.addf %86, %105 : vector<8x128xf32>
    %c5_i32_52 = arith.constant 5 : i32
    %107 = tpu.dynamic_rotate %94 by %c5_i32_52 dim 0 : vector<8x128xf32>, i32 -> vector<8x128xf32>
    %108 = arith.mulf %94, %107 : vector<8x128xf32>
    %109 = arith.addf %89, %108 : vector<8x128xf32>
    %c4_i32_53 = arith.constant 4 : i32
    %110 = tpu.dynamic_rotate %94 by %c4_i32_53 dim 0 : vector<8x128xf32>, i32 -> vector<8x128xf32>
    %111 = arith.mulf %94, %110 : vector<8x128xf32>
    %112 = arith.addf %92, %111 : vector<8x128xf32>
    %c5 = arith.constant 5 : index
    %c0_54 = arith.constant 0 : index
    %c0_55 = arith.constant 0 : index
    %113 = vector.load %arg3[%c5, %c0_54, %c0_55] : memref<16x8x128xf32, #tpu.memory_space<vmem>>, vector<1x8x128xf32>
    %114 = vector.shape_cast %113 : vector<1x8x128xf32> to vector<8x128xf32>
    %c5_56 = arith.constant 5 : index
    %c0_57 = arith.constant 0 : index
    %115 = vector.load %arg2[%c5_56, %c0_57] : memref<16x128xf32, #tpu.memory_space<vmem>>, vector<1x128xf32>
    %116 = vector.broadcast %115 : vector<1x128xf32> to vector<8x128xf32>
    %117 = arith.mulf %114, %116 : vector<8x128xf32>
    %118 = arith.addf %98, %117 : vector<8x128xf32>
    %119 = arith.mulf %114, %114 : vector<8x128xf32>
    %120 = arith.addf %100, %119 : vector<8x128xf32>
    %c7_i32_58 = arith.constant 7 : i32
    %121 = tpu.dynamic_rotate %114 by %c7_i32_58 dim 0 : vector<8x128xf32>, i32 -> vector<8x128xf32>
    %122 = arith.mulf %114, %121 : vector<8x128xf32>
    %123 = arith.addf %103, %122 : vector<8x128xf32>
    %c6_i32_59 = arith.constant 6 : i32
    %124 = tpu.dynamic_rotate %114 by %c6_i32_59 dim 0 : vector<8x128xf32>, i32 -> vector<8x128xf32>
    %125 = arith.mulf %114, %124 : vector<8x128xf32>
    %126 = arith.addf %106, %125 : vector<8x128xf32>
    %c5_i32_60 = arith.constant 5 : i32
    %127 = tpu.dynamic_rotate %114 by %c5_i32_60 dim 0 : vector<8x128xf32>, i32 -> vector<8x128xf32>
    %128 = arith.mulf %114, %127 : vector<8x128xf32>
    %129 = arith.addf %109, %128 : vector<8x128xf32>
    %c4_i32_61 = arith.constant 4 : i32
    %130 = tpu.dynamic_rotate %114 by %c4_i32_61 dim 0 : vector<8x128xf32>, i32 -> vector<8x128xf32>
    %131 = arith.mulf %114, %130 : vector<8x128xf32>
    %132 = arith.addf %112, %131 : vector<8x128xf32>
    %c6 = arith.constant 6 : index
    %c0_62 = arith.constant 0 : index
    %c0_63 = arith.constant 0 : index
    %133 = vector.load %arg3[%c6, %c0_62, %c0_63] : memref<16x8x128xf32, #tpu.memory_space<vmem>>, vector<1x8x128xf32>
    %134 = vector.shape_cast %133 : vector<1x8x128xf32> to vector<8x128xf32>
    %c6_64 = arith.constant 6 : index
    %c0_65 = arith.constant 0 : index
    %135 = vector.load %arg2[%c6_64, %c0_65] : memref<16x128xf32, #tpu.memory_space<vmem>>, vector<1x128xf32>
    %136 = vector.broadcast %135 : vector<1x128xf32> to vector<8x128xf32>
    %137 = arith.mulf %134, %136 : vector<8x128xf32>
    %138 = arith.addf %118, %137 : vector<8x128xf32>
    %139 = arith.mulf %134, %134 : vector<8x128xf32>
    %140 = arith.addf %120, %139 : vector<8x128xf32>
    %c7_i32_66 = arith.constant 7 : i32
    %141 = tpu.dynamic_rotate %134 by %c7_i32_66 dim 0 : vector<8x128xf32>, i32 -> vector<8x128xf32>
    %142 = arith.mulf %134, %141 : vector<8x128xf32>
    %143 = arith.addf %123, %142 : vector<8x128xf32>
    %c6_i32_67 = arith.constant 6 : i32
    %144 = tpu.dynamic_rotate %134 by %c6_i32_67 dim 0 : vector<8x128xf32>, i32 -> vector<8x128xf32>
    %145 = arith.mulf %134, %144 : vector<8x128xf32>
    %146 = arith.addf %126, %145 : vector<8x128xf32>
    %c5_i32_68 = arith.constant 5 : i32
    %147 = tpu.dynamic_rotate %134 by %c5_i32_68 dim 0 : vector<8x128xf32>, i32 -> vector<8x128xf32>
    %148 = arith.mulf %134, %147 : vector<8x128xf32>
    %149 = arith.addf %129, %148 : vector<8x128xf32>
    %c4_i32_69 = arith.constant 4 : i32
    %150 = tpu.dynamic_rotate %134 by %c4_i32_69 dim 0 : vector<8x128xf32>, i32 -> vector<8x128xf32>
    %151 = arith.mulf %134, %150 : vector<8x128xf32>
    %152 = arith.addf %132, %151 : vector<8x128xf32>
    %c7 = arith.constant 7 : index
    %c0_70 = arith.constant 0 : index
    %c0_71 = arith.constant 0 : index
    %153 = vector.load %arg3[%c7, %c0_70, %c0_71] : memref<16x8x128xf32, #tpu.memory_space<vmem>>, vector<1x8x128xf32>
    %154 = vector.shape_cast %153 : vector<1x8x128xf32> to vector<8x128xf32>
    %c7_72 = arith.constant 7 : index
    %c0_73 = arith.constant 0 : index
    %155 = vector.load %arg2[%c7_72, %c0_73] : memref<16x128xf32, #tpu.memory_space<vmem>>, vector<1x128xf32>
    %156 = vector.broadcast %155 : vector<1x128xf32> to vector<8x128xf32>
    %157 = arith.mulf %154, %156 : vector<8x128xf32>
    %158 = arith.addf %138, %157 : vector<8x128xf32>
    %159 = arith.mulf %154, %154 : vector<8x128xf32>
    %160 = arith.addf %140, %159 : vector<8x128xf32>
    %c7_i32_74 = arith.constant 7 : i32
    %161 = tpu.dynamic_rotate %154 by %c7_i32_74 dim 0 : vector<8x128xf32>, i32 -> vector<8x128xf32>
    %162 = arith.mulf %154, %161 : vector<8x128xf32>
    %163 = arith.addf %143, %162 : vector<8x128xf32>
    %c6_i32_75 = arith.constant 6 : i32
    %164 = tpu.dynamic_rotate %154 by %c6_i32_75 dim 0 : vector<8x128xf32>, i32 -> vector<8x128xf32>
    %165 = arith.mulf %154, %164 : vector<8x128xf32>
    %166 = arith.addf %146, %165 : vector<8x128xf32>
    %c5_i32_76 = arith.constant 5 : i32
    %167 = tpu.dynamic_rotate %154 by %c5_i32_76 dim 0 : vector<8x128xf32>, i32 -> vector<8x128xf32>
    %168 = arith.mulf %154, %167 : vector<8x128xf32>
    %169 = arith.addf %149, %168 : vector<8x128xf32>
    %c4_i32_77 = arith.constant 4 : i32
    %170 = tpu.dynamic_rotate %154 by %c4_i32_77 dim 0 : vector<8x128xf32>, i32 -> vector<8x128xf32>
    %171 = arith.mulf %154, %170 : vector<8x128xf32>
    %172 = arith.addf %152, %171 : vector<8x128xf32>
    %c8 = arith.constant 8 : index
    %c0_78 = arith.constant 0 : index
    %c0_79 = arith.constant 0 : index
    %173 = vector.load %arg3[%c8, %c0_78, %c0_79] : memref<16x8x128xf32, #tpu.memory_space<vmem>>, vector<1x8x128xf32>
    %174 = vector.shape_cast %173 : vector<1x8x128xf32> to vector<8x128xf32>
    %c8_80 = arith.constant 8 : index
    %c0_81 = arith.constant 0 : index
    %175 = vector.load %arg2[%c8_80, %c0_81] : memref<16x128xf32, #tpu.memory_space<vmem>>, vector<1x128xf32>
    %176 = vector.broadcast %175 : vector<1x128xf32> to vector<8x128xf32>
    %177 = arith.mulf %174, %176 : vector<8x128xf32>
    %178 = arith.addf %158, %177 : vector<8x128xf32>
    %179 = arith.mulf %174, %174 : vector<8x128xf32>
    %180 = arith.addf %160, %179 : vector<8x128xf32>
    %c7_i32_82 = arith.constant 7 : i32
    %181 = tpu.dynamic_rotate %174 by %c7_i32_82 dim 0 : vector<8x128xf32>, i32 -> vector<8x128xf32>
    %182 = arith.mulf %174, %181 : vector<8x128xf32>
    %183 = arith.addf %163, %182 : vector<8x128xf32>
    %c6_i32_83 = arith.constant 6 : i32
    %184 = tpu.dynamic_rotate %174 by %c6_i32_83 dim 0 : vector<8x128xf32>, i32 -> vector<8x128xf32>
    %185 = arith.mulf %174, %184 : vector<8x128xf32>
    %186 = arith.addf %166, %185 : vector<8x128xf32>
    %c5_i32_84 = arith.constant 5 : i32
    %187 = tpu.dynamic_rotate %174 by %c5_i32_84 dim 0 : vector<8x128xf32>, i32 -> vector<8x128xf32>
    %188 = arith.mulf %174, %187 : vector<8x128xf32>
    %189 = arith.addf %169, %188 : vector<8x128xf32>
    %c4_i32_85 = arith.constant 4 : i32
    %190 = tpu.dynamic_rotate %174 by %c4_i32_85 dim 0 : vector<8x128xf32>, i32 -> vector<8x128xf32>
    %191 = arith.mulf %174, %190 : vector<8x128xf32>
    %192 = arith.addf %172, %191 : vector<8x128xf32>
    %c9 = arith.constant 9 : index
    %c0_86 = arith.constant 0 : index
    %c0_87 = arith.constant 0 : index
    %193 = vector.load %arg3[%c9, %c0_86, %c0_87] : memref<16x8x128xf32, #tpu.memory_space<vmem>>, vector<1x8x128xf32>
    %194 = vector.shape_cast %193 : vector<1x8x128xf32> to vector<8x128xf32>
    %c9_88 = arith.constant 9 : index
    %c0_89 = arith.constant 0 : index
    %195 = vector.load %arg2[%c9_88, %c0_89] : memref<16x128xf32, #tpu.memory_space<vmem>>, vector<1x128xf32>
    %196 = vector.broadcast %195 : vector<1x128xf32> to vector<8x128xf32>
    %197 = arith.mulf %194, %196 : vector<8x128xf32>
    %198 = arith.addf %178, %197 : vector<8x128xf32>
    %199 = arith.mulf %194, %194 : vector<8x128xf32>
    %200 = arith.addf %180, %199 : vector<8x128xf32>
    %c7_i32_90 = arith.constant 7 : i32
    %201 = tpu.dynamic_rotate %194 by %c7_i32_90 dim 0 : vector<8x128xf32>, i32 -> vector<8x128xf32>
    %202 = arith.mulf %194, %201 : vector<8x128xf32>
    %203 = arith.addf %183, %202 : vector<8x128xf32>
    %c6_i32_91 = arith.constant 6 : i32
    %204 = tpu.dynamic_rotate %194 by %c6_i32_91 dim 0 : vector<8x128xf32>, i32 -> vector<8x128xf32>
    %205 = arith.mulf %194, %204 : vector<8x128xf32>
    %206 = arith.addf %186, %205 : vector<8x128xf32>
    %c5_i32_92 = arith.constant 5 : i32
    %207 = tpu.dynamic_rotate %194 by %c5_i32_92 dim 0 : vector<8x128xf32>, i32 -> vector<8x128xf32>
    %208 = arith.mulf %194, %207 : vector<8x128xf32>
    %209 = arith.addf %189, %208 : vector<8x128xf32>
    %c4_i32_93 = arith.constant 4 : i32
    %210 = tpu.dynamic_rotate %194 by %c4_i32_93 dim 0 : vector<8x128xf32>, i32 -> vector<8x128xf32>
    %211 = arith.mulf %194, %210 : vector<8x128xf32>
    %212 = arith.addf %192, %211 : vector<8x128xf32>
    %c10 = arith.constant 10 : index
    %c0_94 = arith.constant 0 : index
    %c0_95 = arith.constant 0 : index
    %213 = vector.load %arg3[%c10, %c0_94, %c0_95] : memref<16x8x128xf32, #tpu.memory_space<vmem>>, vector<1x8x128xf32>
    %214 = vector.shape_cast %213 : vector<1x8x128xf32> to vector<8x128xf32>
    %c10_96 = arith.constant 10 : index
    %c0_97 = arith.constant 0 : index
    %215 = vector.load %arg2[%c10_96, %c0_97] : memref<16x128xf32, #tpu.memory_space<vmem>>, vector<1x128xf32>
    %216 = vector.broadcast %215 : vector<1x128xf32> to vector<8x128xf32>
    %217 = arith.mulf %214, %216 : vector<8x128xf32>
    %218 = arith.addf %198, %217 : vector<8x128xf32>
    %219 = arith.mulf %214, %214 : vector<8x128xf32>
    %220 = arith.addf %200, %219 : vector<8x128xf32>
    %c7_i32_98 = arith.constant 7 : i32
    %221 = tpu.dynamic_rotate %214 by %c7_i32_98 dim 0 : vector<8x128xf32>, i32 -> vector<8x128xf32>
    %222 = arith.mulf %214, %221 : vector<8x128xf32>
    %223 = arith.addf %203, %222 : vector<8x128xf32>
    %c6_i32_99 = arith.constant 6 : i32
    %224 = tpu.dynamic_rotate %214 by %c6_i32_99 dim 0 : vector<8x128xf32>, i32 -> vector<8x128xf32>
    %225 = arith.mulf %214, %224 : vector<8x128xf32>
    %226 = arith.addf %206, %225 : vector<8x128xf32>
    %c5_i32_100 = arith.constant 5 : i32
    %227 = tpu.dynamic_rotate %214 by %c5_i32_100 dim 0 : vector<8x128xf32>, i32 -> vector<8x128xf32>
    %228 = arith.mulf %214, %227 : vector<8x128xf32>
    %229 = arith.addf %209, %228 : vector<8x128xf32>
    %c4_i32_101 = arith.constant 4 : i32
    %230 = tpu.dynamic_rotate %214 by %c4_i32_101 dim 0 : vector<8x128xf32>, i32 -> vector<8x128xf32>
    %231 = arith.mulf %214, %230 : vector<8x128xf32>
    %232 = arith.addf %212, %231 : vector<8x128xf32>
    %c11 = arith.constant 11 : index
    %c0_102 = arith.constant 0 : index
    %c0_103 = arith.constant 0 : index
    %233 = vector.load %arg3[%c11, %c0_102, %c0_103] : memref<16x8x128xf32, #tpu.memory_space<vmem>>, vector<1x8x128xf32>
    %234 = vector.shape_cast %233 : vector<1x8x128xf32> to vector<8x128xf32>
    %c11_104 = arith.constant 11 : index
    %c0_105 = arith.constant 0 : index
    %235 = vector.load %arg2[%c11_104, %c0_105] : memref<16x128xf32, #tpu.memory_space<vmem>>, vector<1x128xf32>
    %236 = vector.broadcast %235 : vector<1x128xf32> to vector<8x128xf32>
    %237 = arith.mulf %234, %236 : vector<8x128xf32>
    %238 = arith.addf %218, %237 : vector<8x128xf32>
    %239 = arith.mulf %234, %234 : vector<8x128xf32>
    %240 = arith.addf %220, %239 : vector<8x128xf32>
    %c7_i32_106 = arith.constant 7 : i32
    %241 = tpu.dynamic_rotate %234 by %c7_i32_106 dim 0 : vector<8x128xf32>, i32 -> vector<8x128xf32>
    %242 = arith.mulf %234, %241 : vector<8x128xf32>
    %243 = arith.addf %223, %242 : vector<8x128xf32>
    %c6_i32_107 = arith.constant 6 : i32
    %244 = tpu.dynamic_rotate %234 by %c6_i32_107 dim 0 : vector<8x128xf32>, i32 -> vector<8x128xf32>
    %245 = arith.mulf %234, %244 : vector<8x128xf32>
    %246 = arith.addf %226, %245 : vector<8x128xf32>
    %c5_i32_108 = arith.constant 5 : i32
    %247 = tpu.dynamic_rotate %234 by %c5_i32_108 dim 0 : vector<8x128xf32>, i32 -> vector<8x128xf32>
    %248 = arith.mulf %234, %247 : vector<8x128xf32>
    %249 = arith.addf %229, %248 : vector<8x128xf32>
    %c4_i32_109 = arith.constant 4 : i32
    %250 = tpu.dynamic_rotate %234 by %c4_i32_109 dim 0 : vector<8x128xf32>, i32 -> vector<8x128xf32>
    %251 = arith.mulf %234, %250 : vector<8x128xf32>
    %252 = arith.addf %232, %251 : vector<8x128xf32>
    %c12 = arith.constant 12 : index
    %c0_110 = arith.constant 0 : index
    %c0_111 = arith.constant 0 : index
    %253 = vector.load %arg3[%c12, %c0_110, %c0_111] : memref<16x8x128xf32, #tpu.memory_space<vmem>>, vector<1x8x128xf32>
    %254 = vector.shape_cast %253 : vector<1x8x128xf32> to vector<8x128xf32>
    %c12_112 = arith.constant 12 : index
    %c0_113 = arith.constant 0 : index
    %255 = vector.load %arg2[%c12_112, %c0_113] : memref<16x128xf32, #tpu.memory_space<vmem>>, vector<1x128xf32>
    %256 = vector.broadcast %255 : vector<1x128xf32> to vector<8x128xf32>
    %257 = arith.mulf %254, %256 : vector<8x128xf32>
    %258 = arith.addf %238, %257 : vector<8x128xf32>
    %259 = arith.mulf %254, %254 : vector<8x128xf32>
    %260 = arith.addf %240, %259 : vector<8x128xf32>
    %c7_i32_114 = arith.constant 7 : i32
    %261 = tpu.dynamic_rotate %254 by %c7_i32_114 dim 0 : vector<8x128xf32>, i32 -> vector<8x128xf32>
    %262 = arith.mulf %254, %261 : vector<8x128xf32>
    %263 = arith.addf %243, %262 : vector<8x128xf32>
    %c6_i32_115 = arith.constant 6 : i32
    %264 = tpu.dynamic_rotate %254 by %c6_i32_115 dim 0 : vector<8x128xf32>, i32 -> vector<8x128xf32>
    %265 = arith.mulf %254, %264 : vector<8x128xf32>
    %266 = arith.addf %246, %265 : vector<8x128xf32>
    %c5_i32_116 = arith.constant 5 : i32
    %267 = tpu.dynamic_rotate %254 by %c5_i32_116 dim 0 : vector<8x128xf32>, i32 -> vector<8x128xf32>
    %268 = arith.mulf %254, %267 : vector<8x128xf32>
    %269 = arith.addf %249, %268 : vector<8x128xf32>
    %c4_i32_117 = arith.constant 4 : i32
    %270 = tpu.dynamic_rotate %254 by %c4_i32_117 dim 0 : vector<8x128xf32>, i32 -> vector<8x128xf32>
    %271 = arith.mulf %254, %270 : vector<8x128xf32>
    %272 = arith.addf %252, %271 : vector<8x128xf32>
    %c13 = arith.constant 13 : index
    %c0_118 = arith.constant 0 : index
    %c0_119 = arith.constant 0 : index
    %273 = vector.load %arg3[%c13, %c0_118, %c0_119] : memref<16x8x128xf32, #tpu.memory_space<vmem>>, vector<1x8x128xf32>
    %274 = vector.shape_cast %273 : vector<1x8x128xf32> to vector<8x128xf32>
    %c13_120 = arith.constant 13 : index
    %c0_121 = arith.constant 0 : index
    %275 = vector.load %arg2[%c13_120, %c0_121] : memref<16x128xf32, #tpu.memory_space<vmem>>, vector<1x128xf32>
    %276 = vector.broadcast %275 : vector<1x128xf32> to vector<8x128xf32>
    %277 = arith.mulf %274, %276 : vector<8x128xf32>
    %278 = arith.addf %258, %277 : vector<8x128xf32>
    %279 = arith.mulf %274, %274 : vector<8x128xf32>
    %280 = arith.addf %260, %279 : vector<8x128xf32>
    %c7_i32_122 = arith.constant 7 : i32
    %281 = tpu.dynamic_rotate %274 by %c7_i32_122 dim 0 : vector<8x128xf32>, i32 -> vector<8x128xf32>
    %282 = arith.mulf %274, %281 : vector<8x128xf32>
    %283 = arith.addf %263, %282 : vector<8x128xf32>
    %c6_i32_123 = arith.constant 6 : i32
    %284 = tpu.dynamic_rotate %274 by %c6_i32_123 dim 0 : vector<8x128xf32>, i32 -> vector<8x128xf32>
    %285 = arith.mulf %274, %284 : vector<8x128xf32>
    %286 = arith.addf %266, %285 : vector<8x128xf32>
    %c5_i32_124 = arith.constant 5 : i32
    %287 = tpu.dynamic_rotate %274 by %c5_i32_124 dim 0 : vector<8x128xf32>, i32 -> vector<8x128xf32>
    %288 = arith.mulf %274, %287 : vector<8x128xf32>
    %289 = arith.addf %269, %288 : vector<8x128xf32>
    %c4_i32_125 = arith.constant 4 : i32
    %290 = tpu.dynamic_rotate %274 by %c4_i32_125 dim 0 : vector<8x128xf32>, i32 -> vector<8x128xf32>
    %291 = arith.mulf %274, %290 : vector<8x128xf32>
    %292 = arith.addf %272, %291 : vector<8x128xf32>
    %c14 = arith.constant 14 : index
    %c0_126 = arith.constant 0 : index
    %c0_127 = arith.constant 0 : index
    %293 = vector.load %arg3[%c14, %c0_126, %c0_127] : memref<16x8x128xf32, #tpu.memory_space<vmem>>, vector<1x8x128xf32>
    %294 = vector.shape_cast %293 : vector<1x8x128xf32> to vector<8x128xf32>
    %c14_128 = arith.constant 14 : index
    %c0_129 = arith.constant 0 : index
    %295 = vector.load %arg2[%c14_128, %c0_129] : memref<16x128xf32, #tpu.memory_space<vmem>>, vector<1x128xf32>
    %296 = vector.broadcast %295 : vector<1x128xf32> to vector<8x128xf32>
    %297 = arith.mulf %294, %296 : vector<8x128xf32>
    %298 = arith.addf %278, %297 : vector<8x128xf32>
    %299 = arith.mulf %294, %294 : vector<8x128xf32>
    %300 = arith.addf %280, %299 : vector<8x128xf32>
    %c7_i32_130 = arith.constant 7 : i32
    %301 = tpu.dynamic_rotate %294 by %c7_i32_130 dim 0 : vector<8x128xf32>, i32 -> vector<8x128xf32>
    %302 = arith.mulf %294, %301 : vector<8x128xf32>
    %303 = arith.addf %283, %302 : vector<8x128xf32>
    %c6_i32_131 = arith.constant 6 : i32
    %304 = tpu.dynamic_rotate %294 by %c6_i32_131 dim 0 : vector<8x128xf32>, i32 -> vector<8x128xf32>
    %305 = arith.mulf %294, %304 : vector<8x128xf32>
    %306 = arith.addf %286, %305 : vector<8x128xf32>
    %c5_i32_132 = arith.constant 5 : i32
    %307 = tpu.dynamic_rotate %294 by %c5_i32_132 dim 0 : vector<8x128xf32>, i32 -> vector<8x128xf32>
    %308 = arith.mulf %294, %307 : vector<8x128xf32>
    %309 = arith.addf %289, %308 : vector<8x128xf32>
    %c4_i32_133 = arith.constant 4 : i32
    %310 = tpu.dynamic_rotate %294 by %c4_i32_133 dim 0 : vector<8x128xf32>, i32 -> vector<8x128xf32>
    %311 = arith.mulf %294, %310 : vector<8x128xf32>
    %312 = arith.addf %292, %311 : vector<8x128xf32>
    %c15 = arith.constant 15 : index
    %c0_134 = arith.constant 0 : index
    %c0_135 = arith.constant 0 : index
    %313 = vector.load %arg3[%c15, %c0_134, %c0_135] : memref<16x8x128xf32, #tpu.memory_space<vmem>>, vector<1x8x128xf32>
    %314 = vector.shape_cast %313 : vector<1x8x128xf32> to vector<8x128xf32>
    %c15_136 = arith.constant 15 : index
    %c0_137 = arith.constant 0 : index
    %315 = vector.load %arg2[%c15_136, %c0_137] : memref<16x128xf32, #tpu.memory_space<vmem>>, vector<1x128xf32>
    %316 = vector.broadcast %315 : vector<1x128xf32> to vector<8x128xf32>
    %317 = arith.mulf %314, %316 : vector<8x128xf32>
    %318 = arith.addf %298, %317 : vector<8x128xf32>
    %319 = arith.mulf %314, %314 : vector<8x128xf32>
    %320 = arith.addf %300, %319 : vector<8x128xf32>
    %c7_i32_138 = arith.constant 7 : i32
    %321 = tpu.dynamic_rotate %314 by %c7_i32_138 dim 0 : vector<8x128xf32>, i32 -> vector<8x128xf32>
    %322 = arith.mulf %314, %321 : vector<8x128xf32>
    %323 = arith.addf %303, %322 : vector<8x128xf32>
    %c6_i32_139 = arith.constant 6 : i32
    %324 = tpu.dynamic_rotate %314 by %c6_i32_139 dim 0 : vector<8x128xf32>, i32 -> vector<8x128xf32>
    %325 = arith.mulf %314, %324 : vector<8x128xf32>
    %326 = arith.addf %306, %325 : vector<8x128xf32>
    %c5_i32_140 = arith.constant 5 : i32
    %327 = tpu.dynamic_rotate %314 by %c5_i32_140 dim 0 : vector<8x128xf32>, i32 -> vector<8x128xf32>
    %328 = arith.mulf %314, %327 : vector<8x128xf32>
    %329 = arith.addf %309, %328 : vector<8x128xf32>
    %c4_i32_141 = arith.constant 4 : i32
    %330 = tpu.dynamic_rotate %314 by %c4_i32_141 dim 0 : vector<8x128xf32>, i32 -> vector<8x128xf32>
    %331 = arith.mulf %314, %330 : vector<8x128xf32>
    %332 = arith.addf %312, %331 : vector<8x128xf32>
    %c3_i32 = arith.constant 3 : i32
    %333 = tpu.dynamic_rotate %329 by %c3_i32 dim 0 : vector<8x128xf32>, i32 -> vector<8x128xf32>
    %c2_i32 = arith.constant 2 : i32
    %334 = tpu.dynamic_rotate %326 by %c2_i32 dim 0 : vector<8x128xf32>, i32 -> vector<8x128xf32>
    %c1_i32 = arith.constant 1 : i32
    %335 = tpu.dynamic_rotate %323 by %c1_i32 dim 0 : vector<8x128xf32>, i32 -> vector<8x128xf32>
    %336 = vector.broadcast %1 : f32 to vector<8x128xf32>
    %337 = arith.mulf %336, %318 : vector<8x128xf32>
    %338 = vector.broadcast %1 : f32 to vector<8x128xf32>
    %339 = arith.mulf %338, %320 : vector<8x128xf32>
    %340 = vector.broadcast %1 : f32 to vector<8x128xf32>
    %341 = arith.mulf %340, %323 : vector<8x128xf32>
    %342 = vector.broadcast %1 : f32 to vector<8x128xf32>
    %343 = arith.mulf %342, %326 : vector<8x128xf32>
    %344 = vector.broadcast %1 : f32 to vector<8x128xf32>
    %345 = arith.mulf %344, %329 : vector<8x128xf32>
    %346 = vector.broadcast %1 : f32 to vector<8x128xf32>
    %347 = arith.mulf %346, %332 : vector<8x128xf32>
    %348 = vector.broadcast %1 : f32 to vector<8x128xf32>
    %349 = arith.mulf %348, %333 : vector<8x128xf32>
    %350 = vector.broadcast %1 : f32 to vector<8x128xf32>
    %351 = arith.mulf %350, %334 : vector<8x128xf32>
    %352 = vector.broadcast %1 : f32 to vector<8x128xf32>
    %353 = arith.mulf %352, %335 : vector<8x128xf32>
    %354 = arith.mulf %339, %2 : vector<8x128xf32>
    %c7_i32_142 = arith.constant 7 : i32
    %355 = tpu.dynamic_rotate %2 by %c7_i32_142 dim 0 : vector<8x128xf32>, i32 -> vector<8x128xf32>
    %356 = arith.mulf %341, %355 : vector<8x128xf32>
    %357 = arith.addf %354, %356 : vector<8x128xf32>
    %c6_i32_143 = arith.constant 6 : i32
    %358 = tpu.dynamic_rotate %2 by %c6_i32_143 dim 0 : vector<8x128xf32>, i32 -> vector<8x128xf32>
    %359 = arith.mulf %343, %358 : vector<8x128xf32>
    %360 = arith.addf %357, %359 : vector<8x128xf32>
    %c5_i32_144 = arith.constant 5 : i32
    %361 = tpu.dynamic_rotate %2 by %c5_i32_144 dim 0 : vector<8x128xf32>, i32 -> vector<8x128xf32>
    %362 = arith.mulf %345, %361 : vector<8x128xf32>
    %363 = arith.addf %360, %362 : vector<8x128xf32>
    %c4_i32_145 = arith.constant 4 : i32
    %364 = tpu.dynamic_rotate %2 by %c4_i32_145 dim 0 : vector<8x128xf32>, i32 -> vector<8x128xf32>
    %365 = arith.mulf %347, %364 : vector<8x128xf32>
    %366 = arith.addf %363, %365 : vector<8x128xf32>
    %c3_i32_146 = arith.constant 3 : i32
    %367 = tpu.dynamic_rotate %2 by %c3_i32_146 dim 0 : vector<8x128xf32>, i32 -> vector<8x128xf32>
    %368 = arith.mulf %349, %367 : vector<8x128xf32>
    %369 = arith.addf %366, %368 : vector<8x128xf32>
    %c2_i32_147 = arith.constant 2 : i32
    %370 = tpu.dynamic_rotate %2 by %c2_i32_147 dim 0 : vector<8x128xf32>, i32 -> vector<8x128xf32>
    %371 = arith.mulf %351, %370 : vector<8x128xf32>
    %372 = arith.addf %369, %371 : vector<8x128xf32>
    %c1_i32_148 = arith.constant 1 : i32
    %373 = tpu.dynamic_rotate %2 by %c1_i32_148 dim 0 : vector<8x128xf32>, i32 -> vector<8x128xf32>
    %374 = arith.mulf %353, %373 : vector<8x128xf32>
    %375 = arith.addf %372, %374 : vector<8x128xf32>
    %376 = arith.addf %2, %337 : vector<8x128xf32>
    %377 = arith.subf %376, %375 : vector<8x128xf32>
    %378 = arith.mulf %339, %377 : vector<8x128xf32>
    %c7_i32_149 = arith.constant 7 : i32
    %379 = tpu.dynamic_rotate %377 by %c7_i32_149 dim 0 : vector<8x128xf32>, i32 -> vector<8x128xf32>
    %380 = arith.mulf %341, %379 : vector<8x128xf32>
    %381 = arith.addf %378, %380 : vector<8x128xf32>
    %c6_i32_150 = arith.constant 6 : i32
    %382 = tpu.dynamic_rotate %377 by %c6_i32_150 dim 0 : vector<8x128xf32>, i32 -> vector<8x128xf32>
    %383 = arith.mulf %343, %382 : vector<8x128xf32>
    %384 = arith.addf %381, %383 : vector<8x128xf32>
    %c5_i32_151 = arith.constant 5 : i32
    %385 = tpu.dynamic_rotate %377 by %c5_i32_151 dim 0 : vector<8x128xf32>, i32 -> vector<8x128xf32>
    %386 = arith.mulf %345, %385 : vector<8x128xf32>
    %387 = arith.addf %384, %386 : vector<8x128xf32>
    %c4_i32_152 = arith.constant 4 : i32
    %388 = tpu.dynamic_rotate %377 by %c4_i32_152 dim 0 : vector<8x128xf32>, i32 -> vector<8x128xf32>
    %389 = arith.mulf %347, %388 : vector<8x128xf32>
    %390 = arith.addf %387, %389 : vector<8x128xf32>
    %c3_i32_153 = arith.constant 3 : i32
    %391 = tpu.dynamic_rotate %377 by %c3_i32_153 dim 0 : vector<8x128xf32>, i32 -> vector<8x128xf32>
    %392 = arith.mulf %349, %391 : vector<8x128xf32>
    %393 = arith.addf %390, %392 : vector<8x128xf32>
    %c2_i32_154 = arith.constant 2 : i32
    %394 = tpu.dynamic_rotate %377 by %c2_i32_154 dim 0 : vector<8x128xf32>, i32 -> vector<8x128xf32>
    %395 = arith.mulf %351, %394 : vector<8x128xf32>
    %396 = arith.addf %393, %395 : vector<8x128xf32>
    %c1_i32_155 = arith.constant 1 : i32
    %397 = tpu.dynamic_rotate %377 by %c1_i32_155 dim 0 : vector<8x128xf32>, i32 -> vector<8x128xf32>
    %398 = arith.mulf %353, %397 : vector<8x128xf32>
    %399 = arith.addf %396, %398 : vector<8x128xf32>
    %400 = arith.addf %377, %337 : vector<8x128xf32>
    %401 = arith.subf %400, %399 : vector<8x128xf32>
    %402 = arith.mulf %339, %401 : vector<8x128xf32>
    %c7_i32_156 = arith.constant 7 : i32
    %403 = tpu.dynamic_rotate %401 by %c7_i32_156 dim 0 : vector<8x128xf32>, i32 -> vector<8x128xf32>
    %404 = arith.mulf %341, %403 : vector<8x128xf32>
    %405 = arith.addf %402, %404 : vector<8x128xf32>
    %c6_i32_157 = arith.constant 6 : i32
    %406 = tpu.dynamic_rotate %401 by %c6_i32_157 dim 0 : vector<8x128xf32>, i32 -> vector<8x128xf32>
    %407 = arith.mulf %343, %406 : vector<8x128xf32>
    %408 = arith.addf %405, %407 : vector<8x128xf32>
    %c5_i32_158 = arith.constant 5 : i32
    %409 = tpu.dynamic_rotate %401 by %c5_i32_158 dim 0 : vector<8x128xf32>, i32 -> vector<8x128xf32>
    %410 = arith.mulf %345, %409 : vector<8x128xf32>
    %411 = arith.addf %408, %410 : vector<8x128xf32>
    %c4_i32_159 = arith.constant 4 : i32
    %412 = tpu.dynamic_rotate %401 by %c4_i32_159 dim 0 : vector<8x128xf32>, i32 -> vector<8x128xf32>
    %413 = arith.mulf %347, %412 : vector<8x128xf32>
    %414 = arith.addf %411, %413 : vector<8x128xf32>
    %c3_i32_160 = arith.constant 3 : i32
    %415 = tpu.dynamic_rotate %401 by %c3_i32_160 dim 0 : vector<8x128xf32>, i32 -> vector<8x128xf32>
    %416 = arith.mulf %349, %415 : vector<8x128xf32>
    %417 = arith.addf %414, %416 : vector<8x128xf32>
    %c2_i32_161 = arith.constant 2 : i32
    %418 = tpu.dynamic_rotate %401 by %c2_i32_161 dim 0 : vector<8x128xf32>, i32 -> vector<8x128xf32>
    %419 = arith.mulf %351, %418 : vector<8x128xf32>
    %420 = arith.addf %417, %419 : vector<8x128xf32>
    %c1_i32_162 = arith.constant 1 : i32
    %421 = tpu.dynamic_rotate %401 by %c1_i32_162 dim 0 : vector<8x128xf32>, i32 -> vector<8x128xf32>
    %422 = arith.mulf %353, %421 : vector<8x128xf32>
    %423 = arith.addf %420, %422 : vector<8x128xf32>
    %424 = arith.addf %401, %337 : vector<8x128xf32>
    %425 = arith.subf %424, %423 : vector<8x128xf32>
    %c0_163 = arith.constant 0 : index
    %c0_164 = arith.constant 0 : index
    %426 = vector.load %arg5[%c0_163, %c0_164] : memref<32x128xf32, #tpu.memory_space<vmem>>, vector<32x128xf32>
    %427 = tpu.concatenate %425, %426 in 0 : vector<8x128xf32>, vector<32x128xf32> -> vector<40x128xf32>
    %cst_165 = arith.constant dense<0.000000e+00> : vector<32x128xf32>
    %428 = tpu.matmul %3, %427, %cst_165 {dimension_numbers = #tpu.dot_dimension_numbers<[1], [0], [0], [1], [0, 0, 1, 1], [], []>, precision = #tpu.contract_precision<fp32>} : vector<32x40xf32>, vector<40x128xf32>, vector<32x128xf32> -> vector<32x128xf32>
    %429 = vector.broadcast %4 : vector<32x1xf32> to vector<32x128xf32>
    %430 = arith.addf %428, %429 : vector<32x128xf32>
    %cst_166 = arith.constant 0.000000e+00 : f32
    %431 = vector.broadcast %cst_166 : f32 to vector<32x128xf32>
    %432 = vector.extract_strided_slice %430 {offsets = [0, 0], sizes = [1, 128], strides = [1, 1]} : vector<32x128xf32> to vector<1x128xf32>
    %433 = vector.broadcast %432 : vector<1x128xf32> to vector<32x128xf32>
    %434 = arith.cmpf ogt, %433, %430 : vector<32x128xf32>
    %435 = arith.extui %434 : vector<32x128xi1> to vector<32x128xi32>
    %436 = arith.sitofp %435 : vector<32x128xi32> to vector<32x128xf32>
    %437 = arith.addf %431, %436 : vector<32x128xf32>
    %438 = vector.extract_strided_slice %430 {offsets = [1, 0], sizes = [1, 128], strides = [1, 1]} : vector<32x128xf32> to vector<1x128xf32>
    %439 = vector.broadcast %438 : vector<1x128xf32> to vector<32x128xf32>
    %440 = arith.cmpf ogt, %439, %430 : vector<32x128xf32>
    %441 = arith.extui %440 : vector<32x128xi1> to vector<32x128xi32>
    %442 = arith.sitofp %441 : vector<32x128xi32> to vector<32x128xf32>
    %443 = arith.addf %437, %442 : vector<32x128xf32>
    %444 = vector.extract_strided_slice %430 {offsets = [2, 0], sizes = [1, 128], strides = [1, 1]} : vector<32x128xf32> to vector<1x128xf32>
    %445 = vector.broadcast %444 : vector<1x128xf32> to vector<32x128xf32>
    %446 = arith.cmpf ogt, %445, %430 : vector<32x128xf32>
    %447 = arith.extui %446 : vector<32x128xi1> to vector<32x128xi32>
    %448 = arith.sitofp %447 : vector<32x128xi32> to vector<32x128xf32>
    %449 = arith.addf %443, %448 : vector<32x128xf32>
    %450 = vector.extract_strided_slice %430 {offsets = [3, 0], sizes = [1, 128], strides = [1, 1]} : vector<32x128xf32> to vector<1x128xf32>
    %451 = vector.broadcast %450 : vector<1x128xf32> to vector<32x128xf32>
    %452 = arith.cmpf ogt, %451, %430 : vector<32x128xf32>
    %453 = arith.extui %452 : vector<32x128xi1> to vector<32x128xi32>
    %454 = arith.sitofp %453 : vector<32x128xi32> to vector<32x128xf32>
    %455 = arith.addf %449, %454 : vector<32x128xf32>
    %456 = vector.extract_strided_slice %430 {offsets = [4, 0], sizes = [1, 128], strides = [1, 1]} : vector<32x128xf32> to vector<1x128xf32>
    %457 = vector.broadcast %456 : vector<1x128xf32> to vector<32x128xf32>
    %458 = arith.cmpf ogt, %457, %430 : vector<32x128xf32>
    %459 = arith.extui %458 : vector<32x128xi1> to vector<32x128xi32>
    %460 = arith.sitofp %459 : vector<32x128xi32> to vector<32x128xf32>
    %461 = arith.addf %455, %460 : vector<32x128xf32>
    %462 = vector.extract_strided_slice %430 {offsets = [5, 0], sizes = [1, 128], strides = [1, 1]} : vector<32x128xf32> to vector<1x128xf32>
    %463 = vector.broadcast %462 : vector<1x128xf32> to vector<32x128xf32>
    %464 = arith.cmpf ogt, %463, %430 : vector<32x128xf32>
    %465 = arith.extui %464 : vector<32x128xi1> to vector<32x128xi32>
    %466 = arith.sitofp %465 : vector<32x128xi32> to vector<32x128xf32>
    %467 = arith.addf %461, %466 : vector<32x128xf32>
    %468 = vector.extract_strided_slice %430 {offsets = [6, 0], sizes = [1, 128], strides = [1, 1]} : vector<32x128xf32> to vector<1x128xf32>
    %469 = vector.broadcast %468 : vector<1x128xf32> to vector<32x128xf32>
    %470 = arith.cmpf ogt, %469, %430 : vector<32x128xf32>
    %471 = arith.extui %470 : vector<32x128xi1> to vector<32x128xi32>
    %472 = arith.sitofp %471 : vector<32x128xi32> to vector<32x128xf32>
    %473 = arith.addf %467, %472 : vector<32x128xf32>
    %474 = vector.extract_strided_slice %430 {offsets = [7, 0], sizes = [1, 128], strides = [1, 1]} : vector<32x128xf32> to vector<1x128xf32>
    %475 = vector.broadcast %474 : vector<1x128xf32> to vector<32x128xf32>
    %476 = arith.cmpf ogt, %475, %430 : vector<32x128xf32>
    %477 = arith.extui %476 : vector<32x128xi1> to vector<32x128xi32>
    %478 = arith.sitofp %477 : vector<32x128xi32> to vector<32x128xf32>
    %479 = arith.addf %473, %478 : vector<32x128xf32>
    %480 = vector.extract_strided_slice %430 {offsets = [8, 0], sizes = [1, 128], strides = [1, 1]} : vector<32x128xf32> to vector<1x128xf32>
    %481 = vector.broadcast %480 : vector<1x128xf32> to vector<32x128xf32>
    %482 = arith.cmpf ogt, %481, %430 : vector<32x128xf32>
    %483 = arith.extui %482 : vector<32x128xi1> to vector<32x128xi32>
    %484 = arith.sitofp %483 : vector<32x128xi32> to vector<32x128xf32>
    %485 = arith.addf %479, %484 : vector<32x128xf32>
    %486 = vector.extract_strided_slice %430 {offsets = [9, 0], sizes = [1, 128], strides = [1, 1]} : vector<32x128xf32> to vector<1x128xf32>
    %487 = vector.broadcast %486 : vector<1x128xf32> to vector<32x128xf32>
    %488 = arith.cmpf ogt, %487, %430 : vector<32x128xf32>
    %489 = arith.extui %488 : vector<32x128xi1> to vector<32x128xi32>
    %490 = arith.sitofp %489 : vector<32x128xi32> to vector<32x128xf32>
    %491 = arith.addf %485, %490 : vector<32x128xf32>
    %492 = vector.extract_strided_slice %430 {offsets = [10, 0], sizes = [1, 128], strides = [1, 1]} : vector<32x128xf32> to vector<1x128xf32>
    %493 = vector.broadcast %492 : vector<1x128xf32> to vector<32x128xf32>
    %494 = arith.cmpf ogt, %493, %430 : vector<32x128xf32>
    %495 = arith.extui %494 : vector<32x128xi1> to vector<32x128xi32>
    %496 = arith.sitofp %495 : vector<32x128xi32> to vector<32x128xf32>
    %497 = arith.addf %491, %496 : vector<32x128xf32>
    %498 = vector.extract_strided_slice %430 {offsets = [11, 0], sizes = [1, 128], strides = [1, 1]} : vector<32x128xf32> to vector<1x128xf32>
    %499 = vector.broadcast %498 : vector<1x128xf32> to vector<32x128xf32>
    %500 = arith.cmpf ogt, %499, %430 : vector<32x128xf32>
    %501 = arith.extui %500 : vector<32x128xi1> to vector<32x128xi32>
    %502 = arith.sitofp %501 : vector<32x128xi32> to vector<32x128xf32>
    %503 = arith.addf %497, %502 : vector<32x128xf32>
    %504 = vector.extract_strided_slice %430 {offsets = [12, 0], sizes = [1, 128], strides = [1, 1]} : vector<32x128xf32> to vector<1x128xf32>
    %505 = vector.broadcast %504 : vector<1x128xf32> to vector<32x128xf32>
    %506 = arith.cmpf ogt, %505, %430 : vector<32x128xf32>
    %507 = arith.extui %506 : vector<32x128xi1> to vector<32x128xi32>
    %508 = arith.sitofp %507 : vector<32x128xi32> to vector<32x128xf32>
    %509 = arith.addf %503, %508 : vector<32x128xf32>
    %510 = vector.extract_strided_slice %430 {offsets = [13, 0], sizes = [1, 128], strides = [1, 1]} : vector<32x128xf32> to vector<1x128xf32>
    %511 = vector.broadcast %510 : vector<1x128xf32> to vector<32x128xf32>
    %512 = arith.cmpf ogt, %511, %430 : vector<32x128xf32>
    %513 = arith.extui %512 : vector<32x128xi1> to vector<32x128xi32>
    %514 = arith.sitofp %513 : vector<32x128xi32> to vector<32x128xf32>
    %515 = arith.addf %509, %514 : vector<32x128xf32>
    %516 = vector.extract_strided_slice %430 {offsets = [14, 0], sizes = [1, 128], strides = [1, 1]} : vector<32x128xf32> to vector<1x128xf32>
    %517 = vector.broadcast %516 : vector<1x128xf32> to vector<32x128xf32>
    %518 = arith.cmpf ogt, %517, %430 : vector<32x128xf32>
    %519 = arith.extui %518 : vector<32x128xi1> to vector<32x128xi32>
    %520 = arith.sitofp %519 : vector<32x128xi32> to vector<32x128xf32>
    %521 = arith.addf %515, %520 : vector<32x128xf32>
    %522 = vector.extract_strided_slice %430 {offsets = [15, 0], sizes = [1, 128], strides = [1, 1]} : vector<32x128xf32> to vector<1x128xf32>
    %523 = vector.broadcast %522 : vector<1x128xf32> to vector<32x128xf32>
    %524 = arith.cmpf ogt, %523, %430 : vector<32x128xf32>
    %525 = arith.extui %524 : vector<32x128xi1> to vector<32x128xi32>
    %526 = arith.sitofp %525 : vector<32x128xi32> to vector<32x128xf32>
    %527 = arith.addf %521, %526 : vector<32x128xf32>
    %528 = vector.extract_strided_slice %430 {offsets = [16, 0], sizes = [1, 128], strides = [1, 1]} : vector<32x128xf32> to vector<1x128xf32>
    %529 = vector.broadcast %528 : vector<1x128xf32> to vector<32x128xf32>
    %530 = arith.cmpf ogt, %529, %430 : vector<32x128xf32>
    %531 = arith.extui %530 : vector<32x128xi1> to vector<32x128xi32>
    %532 = arith.sitofp %531 : vector<32x128xi32> to vector<32x128xf32>
    %533 = arith.addf %527, %532 : vector<32x128xf32>
    %534 = vector.extract_strided_slice %430 {offsets = [17, 0], sizes = [1, 128], strides = [1, 1]} : vector<32x128xf32> to vector<1x128xf32>
    %535 = vector.broadcast %534 : vector<1x128xf32> to vector<32x128xf32>
    %536 = arith.cmpf ogt, %535, %430 : vector<32x128xf32>
    %537 = arith.extui %536 : vector<32x128xi1> to vector<32x128xi32>
    %538 = arith.sitofp %537 : vector<32x128xi32> to vector<32x128xf32>
    %539 = arith.addf %533, %538 : vector<32x128xf32>
    %540 = vector.extract_strided_slice %430 {offsets = [18, 0], sizes = [1, 128], strides = [1, 1]} : vector<32x128xf32> to vector<1x128xf32>
    %541 = vector.broadcast %540 : vector<1x128xf32> to vector<32x128xf32>
    %542 = arith.cmpf ogt, %541, %430 : vector<32x128xf32>
    %543 = arith.extui %542 : vector<32x128xi1> to vector<32x128xi32>
    %544 = arith.sitofp %543 : vector<32x128xi32> to vector<32x128xf32>
    %545 = arith.addf %539, %544 : vector<32x128xf32>
    %546 = vector.extract_strided_slice %430 {offsets = [19, 0], sizes = [1, 128], strides = [1, 1]} : vector<32x128xf32> to vector<1x128xf32>
    %547 = vector.broadcast %546 : vector<1x128xf32> to vector<32x128xf32>
    %548 = arith.cmpf ogt, %547, %430 : vector<32x128xf32>
    %549 = arith.extui %548 : vector<32x128xi1> to vector<32x128xi32>
    %550 = arith.sitofp %549 : vector<32x128xi32> to vector<32x128xf32>
    %551 = arith.addf %545, %550 : vector<32x128xf32>
    %552 = vector.extract_strided_slice %430 {offsets = [20, 0], sizes = [1, 128], strides = [1, 1]} : vector<32x128xf32> to vector<1x128xf32>
    %553 = vector.broadcast %552 : vector<1x128xf32> to vector<32x128xf32>
    %554 = arith.cmpf ogt, %553, %430 : vector<32x128xf32>
    %555 = arith.extui %554 : vector<32x128xi1> to vector<32x128xi32>
    %556 = arith.sitofp %555 : vector<32x128xi32> to vector<32x128xf32>
    %557 = arith.addf %551, %556 : vector<32x128xf32>
    %558 = vector.extract_strided_slice %430 {offsets = [21, 0], sizes = [1, 128], strides = [1, 1]} : vector<32x128xf32> to vector<1x128xf32>
    %559 = vector.broadcast %558 : vector<1x128xf32> to vector<32x128xf32>
    %560 = arith.cmpf ogt, %559, %430 : vector<32x128xf32>
    %561 = arith.extui %560 : vector<32x128xi1> to vector<32x128xi32>
    %562 = arith.sitofp %561 : vector<32x128xi32> to vector<32x128xf32>
    %563 = arith.addf %557, %562 : vector<32x128xf32>
    %564 = vector.extract_strided_slice %430 {offsets = [22, 0], sizes = [1, 128], strides = [1, 1]} : vector<32x128xf32> to vector<1x128xf32>
    %565 = vector.broadcast %564 : vector<1x128xf32> to vector<32x128xf32>
    %566 = arith.cmpf ogt, %565, %430 : vector<32x128xf32>
    %567 = arith.extui %566 : vector<32x128xi1> to vector<32x128xi32>
    %568 = arith.sitofp %567 : vector<32x128xi32> to vector<32x128xf32>
    %569 = arith.addf %563, %568 : vector<32x128xf32>
    %570 = vector.extract_strided_slice %430 {offsets = [23, 0], sizes = [1, 128], strides = [1, 1]} : vector<32x128xf32> to vector<1x128xf32>
    %571 = vector.broadcast %570 : vector<1x128xf32> to vector<32x128xf32>
    %572 = arith.cmpf ogt, %571, %430 : vector<32x128xf32>
    %573 = arith.extui %572 : vector<32x128xi1> to vector<32x128xi32>
    %574 = arith.sitofp %573 : vector<32x128xi32> to vector<32x128xf32>
    %575 = arith.addf %569, %574 : vector<32x128xf32>
    %576 = vector.extract_strided_slice %430 {offsets = [24, 0], sizes = [1, 128], strides = [1, 1]} : vector<32x128xf32> to vector<1x128xf32>
    %577 = vector.broadcast %576 : vector<1x128xf32> to vector<32x128xf32>
    %578 = arith.cmpf ogt, %577, %430 : vector<32x128xf32>
    %579 = arith.extui %578 : vector<32x128xi1> to vector<32x128xi32>
    %580 = arith.sitofp %579 : vector<32x128xi32> to vector<32x128xf32>
    %581 = arith.addf %575, %580 : vector<32x128xf32>
    %582 = vector.extract_strided_slice %430 {offsets = [25, 0], sizes = [1, 128], strides = [1, 1]} : vector<32x128xf32> to vector<1x128xf32>
    %583 = vector.broadcast %582 : vector<1x128xf32> to vector<32x128xf32>
    %584 = arith.cmpf ogt, %583, %430 : vector<32x128xf32>
    %585 = arith.extui %584 : vector<32x128xi1> to vector<32x128xi32>
    %586 = arith.sitofp %585 : vector<32x128xi32> to vector<32x128xf32>
    %587 = arith.addf %581, %586 : vector<32x128xf32>
    %588 = vector.extract_strided_slice %430 {offsets = [26, 0], sizes = [1, 128], strides = [1, 1]} : vector<32x128xf32> to vector<1x128xf32>
    %589 = vector.broadcast %588 : vector<1x128xf32> to vector<32x128xf32>
    %590 = arith.cmpf ogt, %589, %430 : vector<32x128xf32>
    %591 = arith.extui %590 : vector<32x128xi1> to vector<32x128xi32>
    %592 = arith.sitofp %591 : vector<32x128xi32> to vector<32x128xf32>
    %593 = arith.addf %587, %592 : vector<32x128xf32>
    %594 = vector.extract_strided_slice %430 {offsets = [27, 0], sizes = [1, 128], strides = [1, 1]} : vector<32x128xf32> to vector<1x128xf32>
    %595 = vector.broadcast %594 : vector<1x128xf32> to vector<32x128xf32>
    %596 = arith.cmpf ogt, %595, %430 : vector<32x128xf32>
    %597 = arith.extui %596 : vector<32x128xi1> to vector<32x128xi32>
    %598 = arith.sitofp %597 : vector<32x128xi32> to vector<32x128xf32>
    %599 = arith.addf %593, %598 : vector<32x128xf32>
    %600 = vector.extract_strided_slice %430 {offsets = [28, 0], sizes = [1, 128], strides = [1, 1]} : vector<32x128xf32> to vector<1x128xf32>
    %601 = vector.broadcast %600 : vector<1x128xf32> to vector<32x128xf32>
    %602 = arith.cmpf ogt, %601, %430 : vector<32x128xf32>
    %603 = arith.extui %602 : vector<32x128xi1> to vector<32x128xi32>
    %604 = arith.sitofp %603 : vector<32x128xi32> to vector<32x128xf32>
    %605 = arith.addf %599, %604 : vector<32x128xf32>
    %606 = vector.extract_strided_slice %430 {offsets = [29, 0], sizes = [1, 128], strides = [1, 1]} : vector<32x128xf32> to vector<1x128xf32>
    %607 = vector.broadcast %606 : vector<1x128xf32> to vector<32x128xf32>
    %608 = arith.cmpf ogt, %607, %430 : vector<32x128xf32>
    %609 = arith.extui %608 : vector<32x128xi1> to vector<32x128xi32>
    %610 = arith.sitofp %609 : vector<32x128xi32> to vector<32x128xf32>
    %611 = arith.addf %605, %610 : vector<32x128xf32>
    %612 = vector.extract_strided_slice %430 {offsets = [30, 0], sizes = [1, 128], strides = [1, 1]} : vector<32x128xf32> to vector<1x128xf32>
    %613 = vector.broadcast %612 : vector<1x128xf32> to vector<32x128xf32>
    %614 = arith.cmpf ogt, %613, %430 : vector<32x128xf32>
    %615 = arith.extui %614 : vector<32x128xi1> to vector<32x128xi32>
    %616 = arith.sitofp %615 : vector<32x128xi32> to vector<32x128xf32>
    %617 = arith.addf %611, %616 : vector<32x128xf32>
    %618 = vector.extract_strided_slice %430 {offsets = [31, 0], sizes = [1, 128], strides = [1, 1]} : vector<32x128xf32> to vector<1x128xf32>
    %619 = vector.broadcast %618 : vector<1x128xf32> to vector<32x128xf32>
    %620 = arith.cmpf ogt, %619, %430 : vector<32x128xf32>
    %621 = arith.extui %620 : vector<32x128xi1> to vector<32x128xi32>
    %622 = arith.sitofp %621 : vector<32x128xi32> to vector<32x128xf32>
    %623 = arith.addf %617, %622 : vector<32x128xf32>
    %cst_167 = arith.constant 1.900000e+01 : f32
    %624 = vector.broadcast %cst_167 : f32 to vector<32x128xf32>
    %625 = arith.cmpf olt, %623, %624 : vector<32x128xf32>
    %cst_168 = arith.constant 0.000000e+00 : f32
    %626 = vector.broadcast %cst_168 : f32 to vector<32x128xf32>
    %627 = arith.select %625, %430, %626 : vector<32x128xi1>, vector<32x128xf32>
    %c0_169 = arith.constant 0 : index
    %c0_170 = arith.constant 0 : index
    %628 = vector.load %arg11[%c0_169, %c0_170] : memref<32x128xf32, #tpu.memory_space<vmem>>, vector<32x128xf32>
    tpu.vector_store %arg11[%c0_169, %c0_170], %627 {strides = array<i32>} : memref<32x128xf32, #tpu.memory_space<vmem>>, vector<32x128xf32>,
    %cst_171 = arith.constant dense<0.000000e+00> : vector<8x128xf32>
    %629 = tpu.matmul %5, %627, %cst_171 {dimension_numbers = #tpu.dot_dimension_numbers<[1], [0], [0], [1], [0, 0, 1, 1], [], []>, precision = #tpu.contract_precision<fp32>} : vector<8x32xf32>, vector<32x128xf32>, vector<8x128xf32> -> vector<8x128xf32>
    %630 = vector.broadcast %6 : vector<8x1xf32> to vector<8x128xf32>
    %631 = arith.addf %629, %630 : vector<8x128xf32>
    %c0_172 = arith.constant 0 : index
    %c0_173 = arith.constant 0 : index
    %c0_174 = arith.constant 0 : index
    %632 = vector.load %arg12[%c0_172, %c0_173, %c0_174] : memref<2x8x128xf32, #tpu.memory_space<vmem>>, vector<1x8x128xf32>
    %633 = vector.shape_cast %632 : vector<1x8x128xf32> to vector<8x128xf32>
    %634 = vector.shape_cast %631 : vector<8x128xf32> to vector<1x8x128xf32>
    tpu.vector_store %arg12[%c0_172, %c0_173, %c0_174], %634 {strides = array<i32>} : memref<2x8x128xf32, #tpu.memory_space<vmem>>, vector<1x8x128xf32>,
    %635 = arith.mulf %339, %631 : vector<8x128xf32>
    %c7_i32_175 = arith.constant 7 : i32
    %636 = tpu.dynamic_rotate %631 by %c7_i32_175 dim 0 : vector<8x128xf32>, i32 -> vector<8x128xf32>
    %637 = arith.mulf %341, %636 : vector<8x128xf32>
    %638 = arith.addf %635, %637 : vector<8x128xf32>
    %c6_i32_176 = arith.constant 6 : i32
    %639 = tpu.dynamic_rotate %631 by %c6_i32_176 dim 0 : vector<8x128xf32>, i32 -> vector<8x128xf32>
    %640 = arith.mulf %343, %639 : vector<8x128xf32>
    %641 = arith.addf %638, %640 : vector<8x128xf32>
    %c5_i32_177 = arith.constant 5 : i32
    %642 = tpu.dynamic_rotate %631 by %c5_i32_177 dim 0 : vector<8x128xf32>, i32 -> vector<8x128xf32>
    %643 = arith.mulf %345, %642 : vector<8x128xf32>
    %644 = arith.addf %641, %643 : vector<8x128xf32>
    %c4_i32_178 = arith.constant 4 : i32
    %645 = tpu.dynamic_rotate %631 by %c4_i32_178 dim 0 : vector<8x128xf32>, i32 -> vector<8x128xf32>
    %646 = arith.mulf %347, %645 : vector<8x128xf32>
    %647 = arith.addf %644, %646 : vector<8x128xf32>
    %c3_i32_179 = arith.constant 3 : i32
    %648 = tpu.dynamic_rotate %631 by %c3_i32_179 dim 0 : vector<8x128xf32>, i32 -> vector<8x128xf32>
    %649 = arith.mulf %349, %648 : vector<8x128xf32>
    %650 = arith.addf %647, %649 : vector<8x128xf32>
    %c2_i32_180 = arith.constant 2 : i32
    %651 = tpu.dynamic_rotate %631 by %c2_i32_180 dim 0 : vector<8x128xf32>, i32 -> vector<8x128xf32>
    %652 = arith.mulf %351, %651 : vector<8x128xf32>
    %653 = arith.addf %650, %652 : vector<8x128xf32>
    %c1_i32_181 = arith.constant 1 : i32
    %654 = tpu.dynamic_rotate %631 by %c1_i32_181 dim 0 : vector<8x128xf32>, i32 -> vector<8x128xf32>
    %655 = arith.mulf %353, %654 : vector<8x128xf32>
    %656 = arith.addf %653, %655 : vector<8x128xf32>
    %657 = arith.addf %631, %337 : vector<8x128xf32>
    %658 = arith.subf %657, %656 : vector<8x128xf32>
    %659 = arith.mulf %339, %658 : vector<8x128xf32>
    %c7_i32_182 = arith.constant 7 : i32
    %660 = tpu.dynamic_rotate %658 by %c7_i32_182 dim 0 : vector<8x128xf32>, i32 -> vector<8x128xf32>
    %661 = arith.mulf %341, %660 : vector<8x128xf32>
    %662 = arith.addf %659, %661 : vector<8x128xf32>
    %c6_i32_183 = arith.constant 6 : i32
    %663 = tpu.dynamic_rotate %658 by %c6_i32_183 dim 0 : vector<8x128xf32>, i32 -> vector<8x128xf32>
    %664 = arith.mulf %343, %663 : vector<8x128xf32>
    %665 = arith.addf %662, %664 : vector<8x128xf32>
    %c5_i32_184 = arith.constant 5 : i32
    %666 = tpu.dynamic_rotate %658 by %c5_i32_184 dim 0 : vector<8x128xf32>, i32 -> vector<8x128xf32>
    %667 = arith.mulf %345, %666 : vector<8x128xf32>
    %668 = arith.addf %665, %667 : vector<8x128xf32>
    %c4_i32_185 = arith.constant 4 : i32
    %669 = tpu.dynamic_rotate %658 by %c4_i32_185 dim 0 : vector<8x128xf32>, i32 -> vector<8x128xf32>
    %670 = arith.mulf %347, %669 : vector<8x128xf32>
    %671 = arith.addf %668, %670 : vector<8x128xf32>
    %c3_i32_186 = arith.constant 3 : i32
    %672 = tpu.dynamic_rotate %658 by %c3_i32_186 dim 0 : vector<8x128xf32>, i32 -> vector<8x128xf32>
    %673 = arith.mulf %349, %672 : vector<8x128xf32>
    %674 = arith.addf %671, %673 : vector<8x128xf32>
    %c2_i32_187 = arith.constant 2 : i32
    %675 = tpu.dynamic_rotate %658 by %c2_i32_187 dim 0 : vector<8x128xf32>, i32 -> vector<8x128xf32>
    %676 = arith.mulf %351, %675 : vector<8x128xf32>
    %677 = arith.addf %674, %676 : vector<8x128xf32>
    %c1_i32_188 = arith.constant 1 : i32
    %678 = tpu.dynamic_rotate %658 by %c1_i32_188 dim 0 : vector<8x128xf32>, i32 -> vector<8x128xf32>
    %679 = arith.mulf %353, %678 : vector<8x128xf32>
    %680 = arith.addf %677, %679 : vector<8x128xf32>
    %681 = arith.addf %658, %337 : vector<8x128xf32>
    %682 = arith.subf %681, %680 : vector<8x128xf32>
    %683 = arith.mulf %339, %682 : vector<8x128xf32>
    %c7_i32_189 = arith.constant 7 : i32
    %684 = tpu.dynamic_rotate %682 by %c7_i32_189 dim 0 : vector<8x128xf32>, i32 -> vector<8x128xf32>
    %685 = arith.mulf %341, %684 : vector<8x128xf32>
    %686 = arith.addf %683, %685 : vector<8x128xf32>
    %c6_i32_190 = arith.constant 6 : i32
    %687 = tpu.dynamic_rotate %682 by %c6_i32_190 dim 0 : vector<8x128xf32>, i32 -> vector<8x128xf32>
    %688 = arith.mulf %343, %687 : vector<8x128xf32>
    %689 = arith.addf %686, %688 : vector<8x128xf32>
    %c5_i32_191 = arith.constant 5 : i32
    %690 = tpu.dynamic_rotate %682 by %c5_i32_191 dim 0 : vector<8x128xf32>, i32 -> vector<8x128xf32>
    %691 = arith.mulf %345, %690 : vector<8x128xf32>
    %692 = arith.addf %689, %691 : vector<8x128xf32>
    %c4_i32_192 = arith.constant 4 : i32
    %693 = tpu.dynamic_rotate %682 by %c4_i32_192 dim 0 : vector<8x128xf32>, i32 -> vector<8x128xf32>
    %694 = arith.mulf %347, %693 : vector<8x128xf32>
    %695 = arith.addf %692, %694 : vector<8x128xf32>
    %c3_i32_193 = arith.constant 3 : i32
    %696 = tpu.dynamic_rotate %682 by %c3_i32_193 dim 0 : vector<8x128xf32>, i32 -> vector<8x128xf32>
    %697 = arith.mulf %349, %696 : vector<8x128xf32>
    %698 = arith.addf %695, %697 : vector<8x128xf32>
    %c2_i32_194 = arith.constant 2 : i32
    %699 = tpu.dynamic_rotate %682 by %c2_i32_194 dim 0 : vector<8x128xf32>, i32 -> vector<8x128xf32>
    %700 = arith.mulf %351, %699 : vector<8x128xf32>
    %701 = arith.addf %698, %700 : vector<8x128xf32>
    %c1_i32_195 = arith.constant 1 : i32
    %702 = tpu.dynamic_rotate %682 by %c1_i32_195 dim 0 : vector<8x128xf32>, i32 -> vector<8x128xf32>
    %703 = arith.mulf %353, %702 : vector<8x128xf32>
    %704 = arith.addf %701, %703 : vector<8x128xf32>
    %705 = arith.addf %682, %337 : vector<8x128xf32>
    %706 = arith.subf %705, %704 : vector<8x128xf32>
    %c0_196 = arith.constant 0 : index
    %c0_197 = arith.constant 0 : index
    %707 = vector.load %arg11[%c0_196, %c0_197] : memref<32x128xf32, #tpu.memory_space<vmem>>, vector<32x128xf32>
    %708 = tpu.concatenate %706, %707 in 0 : vector<8x128xf32>, vector<32x128xf32> -> vector<40x128xf32>
    %cst_198 = arith.constant dense<0.000000e+00> : vector<32x128xf32>
    %709 = tpu.matmul %3, %708, %cst_198 {dimension_numbers = #tpu.dot_dimension_numbers<[1], [0], [0], [1], [0, 0, 1, 1], [], []>, precision = #tpu.contract_precision<fp32>} : vector<32x40xf32>, vector<40x128xf32>, vector<32x128xf32> -> vector<32x128xf32>
    %710 = vector.broadcast %4 : vector<32x1xf32> to vector<32x128xf32>
    %711 = arith.addf %709, %710 : vector<32x128xf32>
    %cst_199 = arith.constant 0.000000e+00 : f32
    %712 = vector.broadcast %cst_199 : f32 to vector<32x128xf32>
    %713 = vector.extract_strided_slice %711 {offsets = [0, 0], sizes = [1, 128], strides = [1, 1]} : vector<32x128xf32> to vector<1x128xf32>
    %714 = vector.broadcast %713 : vector<1x128xf32> to vector<32x128xf32>
    %715 = arith.cmpf ogt, %714, %711 : vector<32x128xf32>
    %716 = arith.extui %715 : vector<32x128xi1> to vector<32x128xi32>
    %717 = arith.sitofp %716 : vector<32x128xi32> to vector<32x128xf32>
    %718 = arith.addf %712, %717 : vector<32x128xf32>
    %719 = vector.extract_strided_slice %711 {offsets = [1, 0], sizes = [1, 128], strides = [1, 1]} : vector<32x128xf32> to vector<1x128xf32>
    %720 = vector.broadcast %719 : vector<1x128xf32> to vector<32x128xf32>
    %721 = arith.cmpf ogt, %720, %711 : vector<32x128xf32>
    %722 = arith.extui %721 : vector<32x128xi1> to vector<32x128xi32>
    %723 = arith.sitofp %722 : vector<32x128xi32> to vector<32x128xf32>
    %724 = arith.addf %718, %723 : vector<32x128xf32>
    %725 = vector.extract_strided_slice %711 {offsets = [2, 0], sizes = [1, 128], strides = [1, 1]} : vector<32x128xf32> to vector<1x128xf32>
    %726 = vector.broadcast %725 : vector<1x128xf32> to vector<32x128xf32>
    %727 = arith.cmpf ogt, %726, %711 : vector<32x128xf32>
    %728 = arith.extui %727 : vector<32x128xi1> to vector<32x128xi32>
    %729 = arith.sitofp %728 : vector<32x128xi32> to vector<32x128xf32>
    %730 = arith.addf %724, %729 : vector<32x128xf32>
    %731 = vector.extract_strided_slice %711 {offsets = [3, 0], sizes = [1, 128], strides = [1, 1]} : vector<32x128xf32> to vector<1x128xf32>
    %732 = vector.broadcast %731 : vector<1x128xf32> to vector<32x128xf32>
    %733 = arith.cmpf ogt, %732, %711 : vector<32x128xf32>
    %734 = arith.extui %733 : vector<32x128xi1> to vector<32x128xi32>
    %735 = arith.sitofp %734 : vector<32x128xi32> to vector<32x128xf32>
    %736 = arith.addf %730, %735 : vector<32x128xf32>
    %737 = vector.extract_strided_slice %711 {offsets = [4, 0], sizes = [1, 128], strides = [1, 1]} : vector<32x128xf32> to vector<1x128xf32>
    %738 = vector.broadcast %737 : vector<1x128xf32> to vector<32x128xf32>
    %739 = arith.cmpf ogt, %738, %711 : vector<32x128xf32>
    %740 = arith.extui %739 : vector<32x128xi1> to vector<32x128xi32>
    %741 = arith.sitofp %740 : vector<32x128xi32> to vector<32x128xf32>
    %742 = arith.addf %736, %741 : vector<32x128xf32>
    %743 = vector.extract_strided_slice %711 {offsets = [5, 0], sizes = [1, 128], strides = [1, 1]} : vector<32x128xf32> to vector<1x128xf32>
    %744 = vector.broadcast %743 : vector<1x128xf32> to vector<32x128xf32>
    %745 = arith.cmpf ogt, %744, %711 : vector<32x128xf32>
    %746 = arith.extui %745 : vector<32x128xi1> to vector<32x128xi32>
    %747 = arith.sitofp %746 : vector<32x128xi32> to vector<32x128xf32>
    %748 = arith.addf %742, %747 : vector<32x128xf32>
    %749 = vector.extract_strided_slice %711 {offsets = [6, 0], sizes = [1, 128], strides = [1, 1]} : vector<32x128xf32> to vector<1x128xf32>
    %750 = vector.broadcast %749 : vector<1x128xf32> to vector<32x128xf32>
    %751 = arith.cmpf ogt, %750, %711 : vector<32x128xf32>
    %752 = arith.extui %751 : vector<32x128xi1> to vector<32x128xi32>
    %753 = arith.sitofp %752 : vector<32x128xi32> to vector<32x128xf32>
    %754 = arith.addf %748, %753 : vector<32x128xf32>
    %755 = vector.extract_strided_slice %711 {offsets = [7, 0], sizes = [1, 128], strides = [1, 1]} : vector<32x128xf32> to vector<1x128xf32>
    %756 = vector.broadcast %755 : vector<1x128xf32> to vector<32x128xf32>
    %757 = arith.cmpf ogt, %756, %711 : vector<32x128xf32>
    %758 = arith.extui %757 : vector<32x128xi1> to vector<32x128xi32>
    %759 = arith.sitofp %758 : vector<32x128xi32> to vector<32x128xf32>
    %760 = arith.addf %754, %759 : vector<32x128xf32>
    %761 = vector.extract_strided_slice %711 {offsets = [8, 0], sizes = [1, 128], strides = [1, 1]} : vector<32x128xf32> to vector<1x128xf32>
    %762 = vector.broadcast %761 : vector<1x128xf32> to vector<32x128xf32>
    %763 = arith.cmpf ogt, %762, %711 : vector<32x128xf32>
    %764 = arith.extui %763 : vector<32x128xi1> to vector<32x128xi32>
    %765 = arith.sitofp %764 : vector<32x128xi32> to vector<32x128xf32>
    %766 = arith.addf %760, %765 : vector<32x128xf32>
    %767 = vector.extract_strided_slice %711 {offsets = [9, 0], sizes = [1, 128], strides = [1, 1]} : vector<32x128xf32> to vector<1x128xf32>
    %768 = vector.broadcast %767 : vector<1x128xf32> to vector<32x128xf32>
    %769 = arith.cmpf ogt, %768, %711 : vector<32x128xf32>
    %770 = arith.extui %769 : vector<32x128xi1> to vector<32x128xi32>
    %771 = arith.sitofp %770 : vector<32x128xi32> to vector<32x128xf32>
    %772 = arith.addf %766, %771 : vector<32x128xf32>
    %773 = vector.extract_strided_slice %711 {offsets = [10, 0], sizes = [1, 128], strides = [1, 1]} : vector<32x128xf32> to vector<1x128xf32>
    %774 = vector.broadcast %773 : vector<1x128xf32> to vector<32x128xf32>
    %775 = arith.cmpf ogt, %774, %711 : vector<32x128xf32>
    %776 = arith.extui %775 : vector<32x128xi1> to vector<32x128xi32>
    %777 = arith.sitofp %776 : vector<32x128xi32> to vector<32x128xf32>
    %778 = arith.addf %772, %777 : vector<32x128xf32>
    %779 = vector.extract_strided_slice %711 {offsets = [11, 0], sizes = [1, 128], strides = [1, 1]} : vector<32x128xf32> to vector<1x128xf32>
    %780 = vector.broadcast %779 : vector<1x128xf32> to vector<32x128xf32>
    %781 = arith.cmpf ogt, %780, %711 : vector<32x128xf32>
    %782 = arith.extui %781 : vector<32x128xi1> to vector<32x128xi32>
    %783 = arith.sitofp %782 : vector<32x128xi32> to vector<32x128xf32>
    %784 = arith.addf %778, %783 : vector<32x128xf32>
    %785 = vector.extract_strided_slice %711 {offsets = [12, 0], sizes = [1, 128], strides = [1, 1]} : vector<32x128xf32> to vector<1x128xf32>
    %786 = vector.broadcast %785 : vector<1x128xf32> to vector<32x128xf32>
    %787 = arith.cmpf ogt, %786, %711 : vector<32x128xf32>
    %788 = arith.extui %787 : vector<32x128xi1> to vector<32x128xi32>
    %789 = arith.sitofp %788 : vector<32x128xi32> to vector<32x128xf32>
    %790 = arith.addf %784, %789 : vector<32x128xf32>
    %791 = vector.extract_strided_slice %711 {offsets = [13, 0], sizes = [1, 128], strides = [1, 1]} : vector<32x128xf32> to vector<1x128xf32>
    %792 = vector.broadcast %791 : vector<1x128xf32> to vector<32x128xf32>
    %793 = arith.cmpf ogt, %792, %711 : vector<32x128xf32>
    %794 = arith.extui %793 : vector<32x128xi1> to vector<32x128xi32>
    %795 = arith.sitofp %794 : vector<32x128xi32> to vector<32x128xf32>
    %796 = arith.addf %790, %795 : vector<32x128xf32>
    %797 = vector.extract_strided_slice %711 {offsets = [14, 0], sizes = [1, 128], strides = [1, 1]} : vector<32x128xf32> to vector<1x128xf32>
    %798 = vector.broadcast %797 : vector<1x128xf32> to vector<32x128xf32>
    %799 = arith.cmpf ogt, %798, %711 : vector<32x128xf32>
    %800 = arith.extui %799 : vector<32x128xi1> to vector<32x128xi32>
    %801 = arith.sitofp %800 : vector<32x128xi32> to vector<32x128xf32>
    %802 = arith.addf %796, %801 : vector<32x128xf32>
    %803 = vector.extract_strided_slice %711 {offsets = [15, 0], sizes = [1, 128], strides = [1, 1]} : vector<32x128xf32> to vector<1x128xf32>
    %804 = vector.broadcast %803 : vector<1x128xf32> to vector<32x128xf32>
    %805 = arith.cmpf ogt, %804, %711 : vector<32x128xf32>
    %806 = arith.extui %805 : vector<32x128xi1> to vector<32x128xi32>
    %807 = arith.sitofp %806 : vector<32x128xi32> to vector<32x128xf32>
    %808 = arith.addf %802, %807 : vector<32x128xf32>
    %809 = vector.extract_strided_slice %711 {offsets = [16, 0], sizes = [1, 128], strides = [1, 1]} : vector<32x128xf32> to vector<1x128xf32>
    %810 = vector.broadcast %809 : vector<1x128xf32> to vector<32x128xf32>
    %811 = arith.cmpf ogt, %810, %711 : vector<32x128xf32>
    %812 = arith.extui %811 : vector<32x128xi1> to vector<32x128xi32>
    %813 = arith.sitofp %812 : vector<32x128xi32> to vector<32x128xf32>
    %814 = arith.addf %808, %813 : vector<32x128xf32>
    %815 = vector.extract_strided_slice %711 {offsets = [17, 0], sizes = [1, 128], strides = [1, 1]} : vector<32x128xf32> to vector<1x128xf32>
    %816 = vector.broadcast %815 : vector<1x128xf32> to vector<32x128xf32>
    %817 = arith.cmpf ogt, %816, %711 : vector<32x128xf32>
    %818 = arith.extui %817 : vector<32x128xi1> to vector<32x128xi32>
    %819 = arith.sitofp %818 : vector<32x128xi32> to vector<32x128xf32>
    %820 = arith.addf %814, %819 : vector<32x128xf32>
    %821 = vector.extract_strided_slice %711 {offsets = [18, 0], sizes = [1, 128], strides = [1, 1]} : vector<32x128xf32> to vector<1x128xf32>
    %822 = vector.broadcast %821 : vector<1x128xf32> to vector<32x128xf32>
    %823 = arith.cmpf ogt, %822, %711 : vector<32x128xf32>
    %824 = arith.extui %823 : vector<32x128xi1> to vector<32x128xi32>
    %825 = arith.sitofp %824 : vector<32x128xi32> to vector<32x128xf32>
    %826 = arith.addf %820, %825 : vector<32x128xf32>
    %827 = vector.extract_strided_slice %711 {offsets = [19, 0], sizes = [1, 128], strides = [1, 1]} : vector<32x128xf32> to vector<1x128xf32>
    %828 = vector.broadcast %827 : vector<1x128xf32> to vector<32x128xf32>
    %829 = arith.cmpf ogt, %828, %711 : vector<32x128xf32>
    %830 = arith.extui %829 : vector<32x128xi1> to vector<32x128xi32>
    %831 = arith.sitofp %830 : vector<32x128xi32> to vector<32x128xf32>
    %832 = arith.addf %826, %831 : vector<32x128xf32>
    %833 = vector.extract_strided_slice %711 {offsets = [20, 0], sizes = [1, 128], strides = [1, 1]} : vector<32x128xf32> to vector<1x128xf32>
    %834 = vector.broadcast %833 : vector<1x128xf32> to vector<32x128xf32>
    %835 = arith.cmpf ogt, %834, %711 : vector<32x128xf32>
    %836 = arith.extui %835 : vector<32x128xi1> to vector<32x128xi32>
    %837 = arith.sitofp %836 : vector<32x128xi32> to vector<32x128xf32>
    %838 = arith.addf %832, %837 : vector<32x128xf32>
    %839 = vector.extract_strided_slice %711 {offsets = [21, 0], sizes = [1, 128], strides = [1, 1]} : vector<32x128xf32> to vector<1x128xf32>
    %840 = vector.broadcast %839 : vector<1x128xf32> to vector<32x128xf32>
    %841 = arith.cmpf ogt, %840, %711 : vector<32x128xf32>
    %842 = arith.extui %841 : vector<32x128xi1> to vector<32x128xi32>
    %843 = arith.sitofp %842 : vector<32x128xi32> to vector<32x128xf32>
    %844 = arith.addf %838, %843 : vector<32x128xf32>
    %845 = vector.extract_strided_slice %711 {offsets = [22, 0], sizes = [1, 128], strides = [1, 1]} : vector<32x128xf32> to vector<1x128xf32>
    %846 = vector.broadcast %845 : vector<1x128xf32> to vector<32x128xf32>
    %847 = arith.cmpf ogt, %846, %711 : vector<32x128xf32>
    %848 = arith.extui %847 : vector<32x128xi1> to vector<32x128xi32>
    %849 = arith.sitofp %848 : vector<32x128xi32> to vector<32x128xf32>
    %850 = arith.addf %844, %849 : vector<32x128xf32>
    %851 = vector.extract_strided_slice %711 {offsets = [23, 0], sizes = [1, 128], strides = [1, 1]} : vector<32x128xf32> to vector<1x128xf32>
    %852 = vector.broadcast %851 : vector<1x128xf32> to vector<32x128xf32>
    %853 = arith.cmpf ogt, %852, %711 : vector<32x128xf32>
    %854 = arith.extui %853 : vector<32x128xi1> to vector<32x128xi32>
    %855 = arith.sitofp %854 : vector<32x128xi32> to vector<32x128xf32>
    %856 = arith.addf %850, %855 : vector<32x128xf32>
    %857 = vector.extract_strided_slice %711 {offsets = [24, 0], sizes = [1, 128], strides = [1, 1]} : vector<32x128xf32> to vector<1x128xf32>
    %858 = vector.broadcast %857 : vector<1x128xf32> to vector<32x128xf32>
    %859 = arith.cmpf ogt, %858, %711 : vector<32x128xf32>
    %860 = arith.extui %859 : vector<32x128xi1> to vector<32x128xi32>
    %861 = arith.sitofp %860 : vector<32x128xi32> to vector<32x128xf32>
    %862 = arith.addf %856, %861 : vector<32x128xf32>
    %863 = vector.extract_strided_slice %711 {offsets = [25, 0], sizes = [1, 128], strides = [1, 1]} : vector<32x128xf32> to vector<1x128xf32>
    %864 = vector.broadcast %863 : vector<1x128xf32> to vector<32x128xf32>
    %865 = arith.cmpf ogt, %864, %711 : vector<32x128xf32>
    %866 = arith.extui %865 : vector<32x128xi1> to vector<32x128xi32>
    %867 = arith.sitofp %866 : vector<32x128xi32> to vector<32x128xf32>
    %868 = arith.addf %862, %867 : vector<32x128xf32>
    %869 = vector.extract_strided_slice %711 {offsets = [26, 0], sizes = [1, 128], strides = [1, 1]} : vector<32x128xf32> to vector<1x128xf32>
    %870 = vector.broadcast %869 : vector<1x128xf32> to vector<32x128xf32>
    %871 = arith.cmpf ogt, %870, %711 : vector<32x128xf32>
    %872 = arith.extui %871 : vector<32x128xi1> to vector<32x128xi32>
    %873 = arith.sitofp %872 : vector<32x128xi32> to vector<32x128xf32>
    %874 = arith.addf %868, %873 : vector<32x128xf32>
    %875 = vector.extract_strided_slice %711 {offsets = [27, 0], sizes = [1, 128], strides = [1, 1]} : vector<32x128xf32> to vector<1x128xf32>
    %876 = vector.broadcast %875 : vector<1x128xf32> to vector<32x128xf32>
    %877 = arith.cmpf ogt, %876, %711 : vector<32x128xf32>
    %878 = arith.extui %877 : vector<32x128xi1> to vector<32x128xi32>
    %879 = arith.sitofp %878 : vector<32x128xi32> to vector<32x128xf32>
    %880 = arith.addf %874, %879 : vector<32x128xf32>
    %881 = vector.extract_strided_slice %711 {offsets = [28, 0], sizes = [1, 128], strides = [1, 1]} : vector<32x128xf32> to vector<1x128xf32>
    %882 = vector.broadcast %881 : vector<1x128xf32> to vector<32x128xf32>
    %883 = arith.cmpf ogt, %882, %711 : vector<32x128xf32>
    %884 = arith.extui %883 : vector<32x128xi1> to vector<32x128xi32>
    %885 = arith.sitofp %884 : vector<32x128xi32> to vector<32x128xf32>
    %886 = arith.addf %880, %885 : vector<32x128xf32>
    %887 = vector.extract_strided_slice %711 {offsets = [29, 0], sizes = [1, 128], strides = [1, 1]} : vector<32x128xf32> to vector<1x128xf32>
    %888 = vector.broadcast %887 : vector<1x128xf32> to vector<32x128xf32>
    %889 = arith.cmpf ogt, %888, %711 : vector<32x128xf32>
    %890 = arith.extui %889 : vector<32x128xi1> to vector<32x128xi32>
    %891 = arith.sitofp %890 : vector<32x128xi32> to vector<32x128xf32>
    %892 = arith.addf %886, %891 : vector<32x128xf32>
    %893 = vector.extract_strided_slice %711 {offsets = [30, 0], sizes = [1, 128], strides = [1, 1]} : vector<32x128xf32> to vector<1x128xf32>
    %894 = vector.broadcast %893 : vector<1x128xf32> to vector<32x128xf32>
    %895 = arith.cmpf ogt, %894, %711 : vector<32x128xf32>
    %896 = arith.extui %895 : vector<32x128xi1> to vector<32x128xi32>
    %897 = arith.sitofp %896 : vector<32x128xi32> to vector<32x128xf32>
    %898 = arith.addf %892, %897 : vector<32x128xf32>
    %899 = vector.extract_strided_slice %711 {offsets = [31, 0], sizes = [1, 128], strides = [1, 1]} : vector<32x128xf32> to vector<1x128xf32>
    %900 = vector.broadcast %899 : vector<1x128xf32> to vector<32x128xf32>
    %901 = arith.cmpf ogt, %900, %711 : vector<32x128xf32>
    %902 = arith.extui %901 : vector<32x128xi1> to vector<32x128xi32>
    %903 = arith.sitofp %902 : vector<32x128xi32> to vector<32x128xf32>
    %904 = arith.addf %898, %903 : vector<32x128xf32>
    %cst_200 = arith.constant 1.900000e+01 : f32
    %905 = vector.broadcast %cst_200 : f32 to vector<32x128xf32>
    %906 = arith.cmpf olt, %904, %905 : vector<32x128xf32>
    %cst_201 = arith.constant 0.000000e+00 : f32
    %907 = vector.broadcast %cst_201 : f32 to vector<32x128xf32>
    %908 = arith.select %906, %711, %907 : vector<32x128xi1>, vector<32x128xf32>
    %c0_202 = arith.constant 0 : index
    %c0_203 = arith.constant 0 : index
    %909 = vector.load %arg11[%c0_202, %c0_203] : memref<32x128xf32, #tpu.memory_space<vmem>>, vector<32x128xf32>
    tpu.vector_store %arg11[%c0_202, %c0_203], %908 {strides = array<i32>} : memref<32x128xf32, #tpu.memory_space<vmem>>, vector<32x128xf32>,
    %cst_204 = arith.constant dense<0.000000e+00> : vector<8x128xf32>
    %910 = tpu.matmul %5, %908, %cst_204 {dimension_numbers = #tpu.dot_dimension_numbers<[1], [0], [0], [1], [0, 0, 1, 1], [], []>, precision = #tpu.contract_precision<fp32>} : vector<8x32xf32>, vector<32x128xf32>, vector<8x128xf32> -> vector<8x128xf32>
    %911 = vector.broadcast %6 : vector<8x1xf32> to vector<8x128xf32>
    %912 = arith.addf %910, %911 : vector<8x128xf32>
    %c1_205 = arith.constant 1 : index
    %c0_206 = arith.constant 0 : index
    %c0_207 = arith.constant 0 : index
    %913 = vector.load %arg12[%c1_205, %c0_206, %c0_207] : memref<2x8x128xf32, #tpu.memory_space<vmem>>, vector<1x8x128xf32>
    %914 = vector.shape_cast %913 : vector<1x8x128xf32> to vector<8x128xf32>
    %915 = vector.shape_cast %912 : vector<8x128xf32> to vector<1x8x128xf32>
    tpu.vector_store %arg12[%c1_205, %c0_206, %c0_207], %915 {strides = array<i32>} : memref<2x8x128xf32, #tpu.memory_space<vmem>>, vector<1x8x128xf32>,
    %c0_208 = arith.constant 0 : index
    %c0_209 = arith.constant 0 : index
    %916 = vector.load %arg10[%c0_208, %c0_209] : memref<8x128xf32, #tpu.memory_space<vmem>>, vector<8x128xf32>
    tpu.vector_store %arg10[%c0_208, %c0_209], %912 {strides = array<i32>} : memref<8x128xf32, #tpu.memory_space<vmem>>, vector<8x128xf32>,
    return
  }
  func.func @transform_0(%arg0: i32) -> (i32, i32) {
    %c0_i32 = arith.constant 0 : i32
    %c0_i32_0 = arith.constant 0 : i32
    %c0_i32_1 = arith.constant 0 : i32
    return %c0_i32, %c0_i32_0 : i32, i32
  }
  func.func @transform_1(%arg0: i32) -> (i32, i32) {
    %c0_i32 = arith.constant 0 : i32
    %c0_i32_0 = arith.constant 0 : i32
    return %c0_i32, %arg0 : i32, i32
  }
  func.func @transform_2(%arg0: i32) -> (i32, i32, i32) {
    %c0_i32 = arith.constant 0 : i32
    %c0_i32_0 = arith.constant 0 : i32
    %c0_i32_1 = arith.constant 0 : i32
    return %c0_i32, %c0_i32_0, %arg0 : i32, i32, i32
  }
  func.func @transform_3(%arg0: i32) -> (i32, i32) {
    %c0_i32 = arith.constant 0 : i32
    %c0_i32_0 = arith.constant 0 : i32
    return %c0_i32, %arg0 : i32, i32
  }
  func.func @transform_4(%arg0: i32) -> (i32, i32) {
    %c0_i32 = arith.constant 0 : i32
    %c0_i32_0 = arith.constant 0 : i32
    return %c0_i32, %arg0 : i32, i32
  }
  func.func @transform_5(%arg0: i32) -> (i32, i32) {
    %c0_i32 = arith.constant 0 : i32
    %c0_i32_0 = arith.constant 0 : i32
    %c0_i32_1 = arith.constant 0 : i32
    return %c0_i32, %c0_i32_0 : i32, i32
  }
  func.func @transform_6(%arg0: i32) -> (i32, i32) {
    %c0_i32 = arith.constant 0 : i32
    %c0_i32_0 = arith.constant 0 : i32
    %c0_i32_1 = arith.constant 0 : i32
    return %c0_i32, %c0_i32_0 : i32, i32
  }
  func.func @transform_7(%arg0: i32) -> (i32, i32) {
    %c0_i32 = arith.constant 0 : i32
    %c0_i32_0 = arith.constant 0 : i32
    %c0_i32_1 = arith.constant 0 : i32
    return %c0_i32, %c0_i32_0 : i32, i32
  }
  func.func @transform_8(%arg0: i32) -> (i32, i32) {
    %c0_i32 = arith.constant 0 : i32
    %c0_i32_0 = arith.constant 0 : i32
    %c0_i32_1 = arith.constant 0 : i32
    return %c0_i32, %c0_i32_0 : i32, i32
  }
  func.func @transform_9(%arg0: i32) -> (i32, i32) {
    %c0_i32 = arith.constant 0 : i32
    %c0_i32_0 = arith.constant 0 : i32
    return %c0_i32, %arg0 : i32, i32
  }
  func.func @transform_10(%arg0: i32) -> (i32, i32) {
    %c0_i32 = arith.constant 0 : i32
    %c0_i32_0 = arith.constant 0 : i32
    return %c0_i32, %arg0 : i32, i32
  }
  func.func @transform_11(%arg0: i32) -> (i32, i32, i32) {
    %c0_i32 = arith.constant 0 : i32
    %c0_i32_0 = arith.constant 0 : i32
    %c0_i32_1 = arith.constant 0 : i32
    return %c0_i32, %c0_i32_0, %arg0 : i32, i32, i32
  }
}

</mosaic_0001>

<llo_original>
// kernel: tpu_custom_call.1
$region0: #{tpu_custom_call.1}
  #allocation0 [shape = 'u32[]', space=smem, size = 0x4, offset = 0x4, fixed_abs, tag = 'smem constant byte address 0x4 - core index']
  #allocation1 [shape = 'u32[144,128]{1,0:T(1,128)}', space=vmem, size = 0x12000, scoped, tag = 'internal scratch']
  #allocation2 [shape = 'f32[1,1]{1,0:T(1,128)S(6)}', space=smem, size = 0x200, scoped, tag = 'scoped memory for tpu_custom_call.1']
  %s0 = inlined_call_operand.<no memory space> [shape: f32[1,1], index: 0, kind: input, shape index: {}]
  %s1 = inlined_call_operand.vmem [shape: f32[16,128], index: 1, kind: input, shape index: {}]
  %s2 = inlined_call_operand.hbm [shape: f32[16,8,128], index: 2, kind: input, shape index: {}]
  %s3 = inlined_call_operand.vmem [shape: f32[8,128], index: 3, kind: input, shape index: {}]
  %s4 = inlined_call_operand.vmem [shape: f32[32,128], index: 4, kind: input, shape index: {}]
  %s5 = inlined_call_operand.hbm [shape: f32[32,40], index: 5, kind: input, shape index: {}]
  %s6 = inlined_call_operand.vmem [shape: f32[32,1], index: 6, kind: input, shape index: {}]
  %s7 = inlined_call_operand.vmem [shape: f32[8,32], index: 7, kind: input, shape index: {}]
  %s8 = inlined_call_operand.vmem [shape: f32[8,1], index: 8, kind: input, shape index: {}]
  %s9 = inlined_call_operand.hbm [shape: f32[8,128], index: 9, kind: output, shape index: {0}]
  %s10 = inlined_call_operand.hbm [shape: f32[32,128], index: 10, kind: output, shape index: {1}]
  %s11 = inlined_call_operand.hbm [shape: f32[2,8,128], index: 11, kind: output, shape index: {2}]
  %12 = xla_tuple %s9, %s10, %s11
  %s13 = sld [smem:[#allocation0]]
  $region70: #{tpu_custom_call.1} parent=0
    _
  %s15 = ssub.s32 1, %s13
  %s16 = scalar_select 0, %s15, %s13
  %17 = sst [smem:[#allocation2]] %s0
  $region1: #{tpu_custom_call.1} parent=0
    #allocation3 [shape = 'u8[65536]{0}', space=vmem, size = 0x10000, scoped, tag = 'input window, operand 2, single buffered']
    #allocation4 [shape = 's32[1]{0}', space=sflag, size = 0x4, scoped, tag = 'scoped memory for tpu_custom_call.1']
    #allocation5 [shape = 's32[1]{0}', space=sflag, size = 0x4, scoped, tag = 'scoped memory for tpu_custom_call.1']
    #allocation6 [shape = 'u8[16384]{0}', space=vmem, size = 0x4000, scoped, tag = 'input window, operand 5, single buffered']
    #allocation7 [shape = 's32[1]{0}', space=sflag, size = 0x4, scoped, tag = 'scoped memory for tpu_custom_call.1']
    #allocation8 [shape = 'u8[4096]{0}', space=vmem, size = 0x1000, scoped, tag = 'output window, operand 0, single buffered']
    #allocation9 [shape = 'u8[16384]{0}', space=vmem, size = 0x4000, scoped, tag = 'output window, operand 1, single buffered']
    #allocation10 [shape = 's32[1]{0}', space=sflag, size = 0x4, scoped, tag = 'scoped memory for tpu_custom_call.1']
    #allocation11 [shape = 'u8[8192]{0}', space=vmem, size = 0x2000, scoped, tag = 'output window, operand 2, single buffered']
    %18 = vsyncpa [#allocation4], 0
    %19 = vsyncpa [#allocation7], 0
    %20 = vsyncpa [#allocation5], 0
    %21 = vsyncpa [#allocation10], 0
    // Predicated region
    $region2: #{tpu_custom_call.1} parent=1 // pred_check
      _
    $region3: #{tpu_custom_call.1} parent=1 // pred_check_branch
      %23 = sbr.rel (0) target = $region5
    $region4: #{tpu_custom_call.1} parent=1 // pred_region
      _
    $region5: #{tpu_custom_call.1} parent=1 // pred_fallthru
      _
    // Predicated region
    $region6: #{tpu_custom_call.1} parent=1 // pred_check
      _
    $region7: #{tpu_custom_call.1} parent=1 // pred_check_branch
      %25 = sbr.rel (0) target = $region9
    $region8: #{tpu_custom_call.1} parent=1 // pred_region
      _
    $region9: #{tpu_custom_call.1} parent=1 // pred_fallthru
      _
    // Predicated region
    $region10: #{tpu_custom_call.1} parent=1 // pred_check
      _
    $region11: #{tpu_custom_call.1} parent=1 // pred_check_branch
      %27 = sbr.rel (0) target = $region13
    $region12: #{tpu_custom_call.1} parent=1 // pred_region
      %s29 = ssub.s32 2048, 2048
      %30 = vsyncadd [#allocation4], %s29
      %s31 = sshll.u32 [#allocation3], 4
      %s32 = int_to_ptr.vmem [resolvable:$true] %s31
      %37 = dma.hbm_to_vmem [thread:$0]  %s2, 2048, %s32, [#allocation4], 128, 128, 8
    $region13: #{tpu_custom_call.1} parent=1 // pred_fallthru
      _
    // Predicated region
    $region14: #{tpu_custom_call.1} parent=1 // pred_check
      _
    $region15: #{tpu_custom_call.1} parent=1 // pred_check_branch
      %39 = sbr.rel (0) target = $region17
    $region16: #{tpu_custom_call.1} parent=1 // pred_region
      _
    $region17: #{tpu_custom_call.1} parent=1 // pred_fallthru
      _
    // Predicated region
    $region18: #{tpu_custom_call.1} parent=1 // pred_check
      _
    $region19: #{tpu_custom_call.1} parent=1 // pred_check_branch
      %41 = sbr.rel (0) target = $region21
    $region20: #{tpu_custom_call.1} parent=1 // pred_region
      _
    $region21: #{tpu_custom_call.1} parent=1 // pred_fallthru
      _
    // Predicated region
    $region22: #{tpu_custom_call.1} parent=1 // pred_check
      _
    $region23: #{tpu_custom_call.1} parent=1 // pred_check_branch
      %43 = sbr.rel (0) target = $region25
    $region24: #{tpu_custom_call.1} parent=1 // pred_region
      %s45 = ssub.s32 512, 512
      %46 = vsyncadd [#allocation7], %s45
      %s47 = sshll.u32 [#allocation6], 4
      %s48 = int_to_ptr.vmem [resolvable:$true] %s47
      %53 = dma.hbm_to_vmem [thread:$0]  %s5, 512, %s48, [#allocation7], 128, 128, 8
    $region25: #{tpu_custom_call.1} parent=1 // pred_fallthru
      _
    // Predicated region
    $region26: #{tpu_custom_call.1} parent=1 // pred_check
      _
    $region27: #{tpu_custom_call.1} parent=1 // pred_check_branch
      %55 = sbr.rel (0) target = $region29
    $region28: #{tpu_custom_call.1} parent=1 // pred_region
      _
    $region29: #{tpu_custom_call.1} parent=1 // pred_fallthru
      _
    // Predicated region
    $region30: #{tpu_custom_call.1} parent=1 // pred_check
      _
    $region31: #{tpu_custom_call.1} parent=1 // pred_check_branch
      %57 = sbr.rel (0) target = $region33
    $region32: #{tpu_custom_call.1} parent=1 // pred_region
      _
    $region33: #{tpu_custom_call.1} parent=1 // pred_fallthru
      _
    // Predicated region
    $region34: #{tpu_custom_call.1} parent=1 // pred_check
      _
    $region35: #{tpu_custom_call.1} parent=1 // pred_check_branch
      %59 = sbr.rel (0) target = $region37
    $region36: #{tpu_custom_call.1} parent=1 // pred_region
      _
    $region37: #{tpu_custom_call.1} parent=1 // pred_fallthru
      _
    // Predicated region
    $region38: #{tpu_custom_call.1} parent=1 // pred_check
      _
    $region39: #{tpu_custom_call.1} parent=1 // pred_check_branch
      %61 = sbr.rel (0) target = $region41
    $region40: #{tpu_custom_call.1} parent=1 // pred_region
      %62 = dma.done [#allocation4], 2048
    $region41: #{tpu_custom_call.1} parent=1 // pred_fallthru
      _
    // Predicated region
    $region42: #{tpu_custom_call.1} parent=1 // pred_check
      _
    $region43: #{tpu_custom_call.1} parent=1 // pred_check_branch
      %64 = sbr.rel (0) target = $region45
    $region44: #{tpu_custom_call.1} parent=1 // pred_region
      %65 = dma.done [#allocation7], 512
    $region45: #{tpu_custom_call.1} parent=1 // pred_fallthru
      _
    %s66 = sld [smem:[#allocation2]]
    %s67 = smul.f32 %s66, 2.0
    %v68 = vld [vmem:[%s3] sm:$0xff]
    %v69 = vld [vmem:[#allocation6] sm:$0xff]
    %v70 = vld [vmem:[#allocation6 + $0x8] sm:$0xff]
    %v71 = vld [vmem:[#allocation6 + $0x10] sm:$0xff]
    %v72 = vld [vmem:[#allocation6 + $0x18] sm:$0xff]
    %v73 = vld [vmem:[%s6] sm:$0xff]
    %v74 = vld [vmem:[%s6 + $0x8] sm:$0xff]
    %v75 = vld [vmem:[%s6 + $0x10] sm:$0xff]
    %v76 = vld [vmem:[%s6 + $0x18] sm:$0xff]
    %v77 = vld [vmem:[%s7] sm:$0xff]
    %v78 = vld [vmem:[%s8] sm:$0xff]
    %v79 = vld [vmem:[#allocation3] sm:$0xff]
    %v80 = vld [vmem:[%s1] sm:$0x1]
    %v81 = vlaneseq
    %v82 = vshrl.u32 %v81, 7
    %v83 = vsub.s32 0, %v82
    %v84 = vrot.slane %v80, %v83
    %v85 = vmul.f32 %v79, %v84
    %v86 = vadd.f32 %v85, 0.0
    %v87 = vmul.f32 %v79, %v79
    %v88 = vadd.f32 %v87, 0.0
    %v89 = vrot.slane %v79, 1
    %v90 = vmul.f32 %v79, %v89
    %v91 = vadd.f32 %v90, 0.0
    %v92 = vrot.slane %v79, 2
    %v93 = vmul.f32 %v79, %v92
    %v94 = vadd.f32 %v93, 0.0
    %v95 = vrot.slane %v79, 3
    %v96 = vmul.f32 %v79, %v95
    %v97 = vadd.f32 %v96, 0.0
    %v98 = vrot.slane %v79, 4
    %v99 = vmul.f32 %v79, %v98
    %v100 = vadd.f32 %v99, 0.0
    %s101 = scalar_lea.vmem [#allocation3], 8
    %v102 = vld [vmem:[%s101] sm:$0xff]
    %v103 = vld [vmem:[%s1 + $0x1] sm:$0x1]
    %v104 = vlaneseq
    %v105 = vshrl.u32 %v104, 7
    %v106 = vsub.s32 0, %v105
    %v107 = vrot.slane %v103, %v106
    %v108 = vmul.f32 %v102, %v107
    %v109 = vadd.f32 %v86, %v108
    %v110 = vmul.f32 %v102, %v102
    %v111 = vadd.f32 %v88, %v110
    %v112 = vrot.slane %v102, 1
    %v113 = vmul.f32 %v102, %v112
    %v114 = vadd.f32 %v91, %v113
    %v115 = vrot.slane %v102, 2
    %v116 = vmul.f32 %v102, %v115
    %v117 = vadd.f32 %v94, %v116
    %v118 = vrot.slane %v102, 3
    %v119 = vmul.f32 %v102, %v118
    %v120 = vadd.f32 %v97, %v119
    %v121 = vrot.slane %v102, 4
    %v122 = vmul.f32 %v102, %v121
    %v123 = vadd.f32 %v100, %v122
    %s124 = scalar_lea.vmem [#allocation3], 16
    %v125 = vld [vmem:[%s124] sm:$0xff]
    %v126 = vld [vmem:[%s1 + $0x2] sm:$0x1]
    %v127 = vlaneseq
    %v128 = vshrl.u32 %v127, 7
    %v129 = vsub.s32 0, %v128
    %v130 = vrot.slane %v126, %v129
    %v131 = vmul.f32 %v125, %v130
    %v132 = vadd.f32 %v109, %v131
    %v133 = vmul.f32 %v125, %v125
    %v134 = vadd.f32 %v111, %v133
    %v135 = vrot.slane %v125, 1
    %v136 = vmul.f32 %v125, %v135
    %v137 = vadd.f32 %v114, %v136
    %v138 = vrot.slane %v125, 2
    %v139 = vmul.f32 %v125, %v138
    %v140 = vadd.f32 %v117, %v139
    %v141 = vrot.slane %v125, 3
    %v142 = vmul.f32 %v125, %v141
    %v143 = vadd.f32 %v120, %v142
    %v144 = vrot.slane %v125, 4
    %v145 = vmul.f32 %v125, %v144
    %v146 = vadd.f32 %v123, %v145
    %s147 = scalar_lea.vmem [#allocation3], 24
    %v148 = vld [vmem:[%s147] sm:$0xff]
    %v149 = vld [vmem:[%s1 + $0x3] sm:$0x1]
    %v150 = vlaneseq
    %v151 = vshrl.u32 %v150, 7
    %v152 = vsub.s32 0, %v151
    %v153 = vrot.slane %v149, %v152
    %v154 = vmul.f32 %v148, %v153
    %v155 = vadd.f32 %v132, %v154
    %v156 = vmul.f32 %v148, %v148
    %v157 = vadd.f32 %v134, %v156
    %v158 = vrot.slane %v148, 1
    %v159 = vmul.f32 %v148, %v158
    %v160 = vadd.f32 %v137, %v159
    %v161 = vrot.slane %v148, 2
    %v162 = vmul.f32 %v148, %v161
    %v163 = vadd.f32 %v140, %v162
    %v164 = vrot.slane %v148, 3
    %v165 = vmul.f32 %v148, %v164
    %v166 = vadd.f32 %v143, %v165
    %v167 = vrot.slane %v148, 4
    %v168 = vmul.f32 %v148, %v167
    %v169 = vadd.f32 %v146, %v168
    %s170 = scalar_lea.vmem [#allocation3], 32
    %v171 = vld [vmem:[%s170] sm:$0xff]
    %v172 = vld [vmem:[%s1 + $0x4] sm:$0x1]
    %v173 = vlaneseq
    %v174 = vshrl.u32 %v173, 7
    %v175 = vsub.s32 0, %v174
    %v176 = vrot.slane %v172, %v175
    %v177 = vmul.f32 %v171, %v176
    %v178 = vadd.f32 %v155, %v177
    %v179 = vmul.f32 %v171, %v171
    %v180 = vadd.f32 %v157, %v179
    %v181 = vrot.slane %v171, 1
    %v182 = vmul.f32 %v171, %v181
    %v183 = vadd.f32 %v160, %v182
    %v184 = vrot.slane %v171, 2
    %v185 = vmul.f32 %v171, %v184
    %v186 = vadd.f32 %v163, %v185
    %v187 = vrot.slane %v171, 3
    %v188 = vmul.f32 %v171, %v187
    %v189 = vadd.f32 %v166, %v188
    %v190 = vrot.slane %v171, 4
    %v191 = vmul.f32 %v171, %v190
    %v192 = vadd.f32 %v169, %v191
    %s193 = scalar_lea.vmem [#allocation3], 40
    %v194 = vld [vmem:[%s193] sm:$0xff]
    %v195 = vld [vmem:[%s1 + $0x5] sm:$0x1]
    %v196 = vlaneseq
    %v197 = vshrl.u32 %v196, 7
    %v198 = vsub.s32 0, %v197
    %v199 = vrot.slane %v195, %v198
    %v200 = vmul.f32 %v194, %v199
    %v201 = vadd.f32 %v178, %v200
    %v202 = vmul.f32 %v194, %v194
    %v203 = vadd.f32 %v180, %v202
    %v204 = vrot.slane %v194, 1
    %v205 = vmul.f32 %v194, %v204
    %v206 = vadd.f32 %v183, %v205
    %v207 = vrot.slane %v194, 2
    %v208 = vmul.f32 %v194, %v207
    %v209 = vadd.f32 %v186, %v208
    %v210 = vrot.slane %v194, 3
    %v211 = vmul.f32 %v194, %v210
    %v212 = vadd.f32 %v189, %v211
    %v213 = vrot.slane %v194, 4
    %v214 = vmul.f32 %v194, %v213
    %v215 = vadd.f32 %v192, %v214
    %s216 = scalar_lea.vmem [#allocation3], 48
    %v217 = vld [vmem:[%s216] sm:$0xff]
    %v218 = vld [vmem:[%s1 + $0x6] sm:$0x1]
    %v219 = vlaneseq
    %v220 = vshrl.u32 %v219, 7
    %v221 = vsub.s32 0, %v220
    %v222 = vrot.slane %v218, %v221
    %v223 = vmul.f32 %v217, %v222
    %v224 = vadd.f32 %v201, %v223
    %v225 = vmul.f32 %v217, %v217
    %v226 = vadd.f32 %v203, %v225
    %v227 = vrot.slane %v217, 1
    %v228 = vmul.f32 %v217, %v227
    %v229 = vadd.f32 %v206, %v228
    %v230 = vrot.slane %v217, 2
    %v231 = vmul.f32 %v217, %v230
    %v232 = vadd.f32 %v209, %v231
    %v233 = vrot.slane %v217, 3
    %v234 = vmul.f32 %v217, %v233
    %v235 = vadd.f32 %v212, %v234
    %v236 = vrot.slane %v217, 4
    %v237 = vmul.f32 %v217, %v236
    %v238 = vadd.f32 %v215, %v237
    %s239 = scalar_lea.vmem [#allocation3], 56
    %v240 = vld [vmem:[%s239] sm:$0xff]
    %v241 = vld [vmem:[%s1 + $0x7] sm:$0x1]
    %v242 = vlaneseq
    %v243 = vshrl.u32 %v242, 7
    %v244 = vsub.s32 0, %v243
    %v245 = vrot.slane %v241, %v244
    %v246 = vmul.f32 %v240, %v245
    %v247 = vadd.f32 %v224, %v246
    %v248 = vmul.f32 %v240, %v240
    %v249 = vadd.f32 %v226, %v248
    %v250 = vrot.slane %v240, 1
    %v251 = vmul.f32 %v240, %v250
    %v252 = vadd.f32 %v229, %v251
    %v253 = vrot.slane %v240, 2
    %v254 = vmul.f32 %v240, %v253
    %v255 = vadd.f32 %v232, %v254
    %v256 = vrot.slane %v240, 3
    %v257 = vmul.f32 %v240, %v256
    %v258 = vadd.f32 %v235, %v257
    %v259 = vrot.slane %v240, 4
    %v260 = vmul.f32 %v240, %v259
    %v261 = vadd.f32 %v238, %v260
    %s262 = scalar_lea.vmem [#allocation3], 64
    %v263 = vld [vmem:[%s262] sm:$0xff]
    %v264 = vld [vmem:[%s1 + $0x8] sm:$0x1]
    %v265 = vlaneseq
    %v266 = vshrl.u32 %v265, 7
    %v267 = vsub.s32 0, %v266
    %v268 = vrot.slane %v264, %v267
    %v269 = vmul.f32 %v263, %v268
    %v270 = vadd.f32 %v247, %v269
    %v271 = vmul.f32 %v263, %v263
    %v272 = vadd.f32 %v249, %v271
    %v273 = vrot.slane %v263, 1
    %v274 = vmul.f32 %v263, %v273
    %v275 = vadd.f32 %v252, %v274
    %v276 = vrot.slane %v263, 2
    %v277 = vmul.f32 %v263, %v276
    %v278 = vadd.f32 %v255, %v277
    %v279 = vrot.slane %v263, 3
    %v280 = vmul.f32 %v263, %v279
    %v281 = vadd.f32 %v258, %v280
    %v282 = vrot.slane %v263, 4
    %v283 = vmul.f32 %v263, %v282
    %v284 = vadd.f32 %v261, %v283
    %s285 = scalar_lea.vmem [#allocation3], 72
    %v286 = vld [vmem:[%s285] sm:$0xff]
    %v287 = vld [vmem:[%s1 + $0x9] sm:$0x1]
    %v288 = vlaneseq
    %v289 = vshrl.u32 %v288, 7
    %v290 = vsub.s32 0, %v289
    %v291 = vrot.slane %v287, %v290
    %v292 = vmul.f32 %v286, %v291
    %v293 = vadd.f32 %v270, %v292
    %v294 = vmul.f32 %v286, %v286
    %v295 = vadd.f32 %v272, %v294
    %v296 = vrot.slane %v286, 1
    %v297 = vmul.f32 %v286, %v296
    %v298 = vadd.f32 %v275, %v297
    %v299 = vrot.slane %v286, 2
    %v300 = vmul.f32 %v286, %v299
    %v301 = vadd.f32 %v278, %v300
    %v302 = vrot.slane %v286, 3
    %v303 = vmul.f32 %v286, %v302
    %v304 = vadd.f32 %v281, %v303
    %v305 = vrot.slane %v286, 4
    %v306 = vmul.f32 %v286, %v305
    %v307 = vadd.f32 %v284, %v306
    %s308 = scalar_lea.vmem [#allocation3], 80
    %v309 = vld [vmem:[%s308] sm:$0xff]
    %v310 = vld [vmem:[%s1 + $0xa] sm:$0x1]
    %v311 = vlaneseq
    %v312 = vshrl.u32 %v311, 7
    %v313 = vsub.s32 0, %v312
    %v314 = vrot.slane %v310, %v313
    %v315 = vmul.f32 %v309, %v314
    %v316 = vadd.f32 %v293, %v315
    %v317 = vmul.f32 %v309, %v309
    %v318 = vadd.f32 %v295, %v317
    %v319 = vrot.slane %v309, 1
    %v320 = vmul.f32 %v309, %v319
    %v321 = vadd.f32 %v298, %v320
    %v322 = vrot.slane %v309, 2
    %v323 = vmul.f32 %v309, %v322
    %v324 = vadd.f32 %v301, %v323
    %v325 = vrot.slane %v309, 3
    %v326 = vmul.f32 %v309, %v325
    %v327 = vadd.f32 %v304, %v326
    %v328 = vrot.slane %v309, 4
    %v329 = vmul.f32 %v309, %v328
    %v330 = vadd.f32 %v307, %v329
    %s331 = scalar_lea.vmem [#allocation3], 88
    %v332 = vld [vmem:[%s331] sm:$0xff]
    %v333 = vld [vmem:[%s1 + $0xb] sm:$0x1]
    %v334 = vlaneseq
    %v335 = vshrl.u32 %v334, 7
    %v336 = vsub.s32 0, %v335
    %v337 = vrot.slane %v333, %v336
    %v338 = vmul.f32 %v332, %v337
    %v339 = vadd.f32 %v316, %v338
    %v340 = vmul.f32 %v332, %v332
    %v341 = vadd.f32 %v318, %v340
    %v342 = vrot.slane %v332, 1
    %v343 = vmul.f32 %v332, %v342
    %v344 = vadd.f32 %v321, %v343
    %v345 = vrot.slane %v332, 2
    %v346 = vmul.f32 %v332, %v345
    %v347 = vadd.f32 %v324, %v346
    %v348 = vrot.slane %v332, 3
    %v349 = vmul.f32 %v332, %v348
    %v350 = vadd.f32 %v327, %v349
    %v351 = vrot.slane %v332, 4
    %v352 = vmul.f32 %v332, %v351
    %v353 = vadd.f32 %v330, %v352
    %s354 = scalar_lea.vmem [#allocation3], 96
    %v355 = vld [vmem:[%s354] sm:$0xff]
    %v356 = vld [vmem:[%s1 + $0xc] sm:$0x1]
    %v357 = vlaneseq
    %v358 = vshrl.u32 %v357, 7
    %v359 = vsub.s32 0, %v358
    %v360 = vrot.slane %v356, %v359
    %v361 = vmul.f32 %v355, %v360
    %v362 = vadd.f32 %v339, %v361
    %v363 = vmul.f32 %v355, %v355
    %v364 = vadd.f32 %v341, %v363
    %v365 = vrot.slane %v355, 1
    %v366 = vmul.f32 %v355, %v365
    %v367 = vadd.f32 %v344, %v366
    %v368 = vrot.slane %v355, 2
    %v369 = vmul.f32 %v355, %v368
    %v370 = vadd.f32 %v347, %v369
    %v371 = vrot.slane %v355, 3
    %v372 = vmul.f32 %v355, %v371
    %v373 = vadd.f32 %v350, %v372
    %v374 = vrot.slane %v355, 4
    %v375 = vmul.f32 %v355, %v374
    %v376 = vadd.f32 %v353, %v375
    %s377 = scalar_lea.vmem [#allocation3], 104
    %v378 = vld [vmem:[%s377] sm:$0xff]
    %v379 = vld [vmem:[%s1 + $0xd] sm:$0x1]
    %v380 = vlaneseq
    %v381 = vshrl.u32 %v380, 7
    %v382 = vsub.s32 0, %v381
    %v383 = vrot.slane %v379, %v382
    %v384 = vmul.f32 %v378, %v383
    %v385 = vadd.f32 %v362, %v384
    %v386 = vmul.f32 %v378, %v378
    %v387 = vadd.f32 %v364, %v386
    %v388 = vrot.slane %v378, 1
    %v389 = vmul.f32 %v378, %v388
    %v390 = vadd.f32 %v367, %v389
    %v391 = vrot.slane %v378, 2
    %v392 = vmul.f32 %v378, %v391
    %v393 = vadd.f32 %v370, %v392
    %v394 = vrot.slane %v378, 3
    %v395 = vmul.f32 %v378, %v394
    %v396 = vadd.f32 %v373, %v395
    %v397 = vrot.slane %v378, 4
    %v398 = vmul.f32 %v378, %v397
    %v399 = vadd.f32 %v376, %v398
    %s400 = scalar_lea.vmem [#allocation3], 112
    %v401 = vld [vmem:[%s400] sm:$0xff]
    %v402 = vld [vmem:[%s1 + $0xe] sm:$0x1]
    %v403 = vlaneseq
    %v404 = vshrl.u32 %v403, 7
    %v405 = vsub.s32 0, %v404
    %v406 = vrot.slane %v402, %v405
    %v407 = vmul.f32 %v401, %v406
    %v408 = vadd.f32 %v385, %v407
    %v409 = vmul.f32 %v401, %v401
    %v410 = vadd.f32 %v387, %v409
    %v411 = vrot.slane %v401, 1
    %v412 = vmul.f32 %v401, %v411
    %v413 = vadd.f32 %v390, %v412
    %v414 = vrot.slane %v401, 2
    %v415 = vmul.f32 %v401, %v414
    %v416 = vadd.f32 %v393, %v415
    %v417 = vrot.slane %v401, 3
    %v418 = vmul.f32 %v401, %v417
    %v419 = vadd.f32 %v396, %v418
    %v420 = vrot.slane %v401, 4
    %v421 = vmul.f32 %v401, %v420
    %v422 = vadd.f32 %v399, %v421
    %s423 = scalar_lea.vmem [#allocation3], 120
    %v424 = vld [vmem:[%s423] sm:$0xff]
    %v425 = vld [vmem:[%s1 + $0xf] sm:$0x1]
    %v426 = vlaneseq
    %v427 = vshrl.u32 %v426, 7
    %v428 = vsub.s32 0, %v427
    %v429 = vrot.slane %v425, %v428
    %v430 = vmul.f32 %v424, %v429
    %v431 = vadd.f32 %v408, %v430
    %v432 = vmul.f32 %v424, %v424
    %v433 = vadd.f32 %v410, %v432
    %v434 = vrot.slane %v424, 1
    %v435 = vmul.f32 %v424, %v434
    %v436 = vadd.f32 %v413, %v435
    %v437 = vrot.slane %v424, 2
    %v438 = vmul.f32 %v424, %v437
    %v439 = vadd.f32 %v416, %v438
    %v440 = vrot.slane %v424, 3
    %v441 = vmul.f32 %v424, %v440
    %v442 = vadd.f32 %v419, %v441
    %v443 = vrot.slane %v424, 4
    %v444 = vmul.f32 %v424, %v443
    %v445 = vadd.f32 %v422, %v444
    %v446 = vrot.slane %v442, 5
    %v447 = vrot.slane %v439, 6
    %v448 = vrot.slane %v436, 7
    %v449 = vstv %s67
    %v450 = vmul.f32 %v449, %v431
    %v451 = vmul.f32 %v449, %v433
    %v452 = vmul.f32 %v449, %v436
    %v453 = vmul.f32 %v449, %v439
    %v454 = vmul.f32 %v449, %v442
    %v455 = vmul.f32 %v449, %v445
    %v456 = vmul.f32 %v449, %v446
    %v457 = vmul.f32 %v449, %v447
    %v458 = vmul.f32 %v449, %v448
    %v459 = vmul.f32 %v451, %v68
    %v460 = vrot.slane %v68, 1
    %v461 = vmul.f32 %v452, %v460
    %v462 = vadd.f32 %v459, %v461
    %v463 = vrot.slane %v68, 2
    %v464 = vmul.f32 %v453, %v463
    %v465 = vadd.f32 %v462, %v464
    %v466 = vrot.slane %v68, 3
    %v467 = vmul.f32 %v454, %v466
    %v468 = vadd.f32 %v465, %v467
    %v469 = vrot.slane %v68, 4
    %v470 = vmul.f32 %v455, %v469
    %v471 = vadd.f32 %v468, %v470
    %v472 = vrot.slane %v68, 5
    %v473 = vmul.f32 %v456, %v472
    %v474 = vadd.f32 %v471, %v473
    %v475 = vrot.slane %v68, 6
    %v476 = vmul.f32 %v457, %v475
    %v477 = vadd.f32 %v474, %v476
    %v478 = vrot.slane %v68, 7
    %v479 = vmul.f32 %v458, %v478
    %v480 = vadd.f32 %v477, %v479
    %v481 = vadd.f32 %v68, %v450
    %v482 = vsub.f32 %v481, %v480
    %v483 = vmul.f32 %v451, %v482
    %v484 = vrot.slane %v482, 1
    %v485 = vmul.f32 %v452, %v484
    %v486 = vadd.f32 %v483, %v485
    %v487 = vrot.slane %v482, 2
    %v488 = vmul.f32 %v453, %v487
    %v489 = vadd.f32 %v486, %v488
    %v490 = vrot.slane %v482, 3
    %v491 = vmul.f32 %v454, %v490
    %v492 = vadd.f32 %v489, %v491
    %v493 = vrot.slane %v482, 4
    %v494 = vmul.f32 %v455, %v493
    %v495 = vadd.f32 %v492, %v494
    %v496 = vrot.slane %v482, 5
    %v497 = vmul.f32 %v456, %v496
    %v498 = vadd.f32 %v495, %v497
    %v499 = vrot.slane %v482, 6
    %v500 = vmul.f32 %v457, %v499
    %v501 = vadd.f32 %v498, %v500
    %v502 = vrot.slane %v482, 7
    %v503 = vmul.f32 %v458, %v502
    %v504 = vadd.f32 %v501, %v503
    %v505 = vadd.f32 %v482, %v450
    %v506 = vsub.f32 %v505, %v504
    %v507 = vmul.f32 %v451, %v506
    %v508 = vrot.slane %v506, 1
    %v509 = vmul.f32 %v452, %v508
    %v510 = vadd.f32 %v507, %v509
    %v511 = vrot.slane %v506, 2
    %v512 = vmul.f32 %v453, %v511
    %v513 = vadd.f32 %v510, %v512
    %v514 = vrot.slane %v506, 3
    %v515 = vmul.f32 %v454, %v514
    %v516 = vadd.f32 %v513, %v515
    %v517 = vrot.slane %v506, 4
    %v518 = vmul.f32 %v455, %v517
    %v519 = vadd.f32 %v516, %v518
    %v520 = vrot.slane %v506, 5
    %v521 = vmul.f32 %v456, %v520
    %v522 = vadd.f32 %v519, %v521
    %v523 = vrot.slane %v506, 6
    %v524 = vmul.f32 %v457, %v523
    %v525 = vadd.f32 %v522, %v524
    %v526 = vrot.slane %v506, 7
    %v527 = vmul.f32 %v458, %v526
    %v528 = vadd.f32 %v525, %v527
    %v529 = vadd.f32 %v506, %v450
    %v530 = vsub.f32 %v529, %v528
    %v531 = vld [vmem:[%s4] sm:$0xff]
    %v532 = vld [vmem:[%s4 + $0x8] sm:$0xff]
    %v533 = vld [vmem:[%s4 + $0x10] sm:$0xff]
    %v534 = vld [vmem:[%s4 + $0x18] sm:$0xff]
    %536 = vset.pattern.permute.xlu0 0
    %537 = vperm.xlu0 %536, %v73
    %v538 = vpop.permute.xlu0 %537
    %541 = vset.pattern.permute.xlu0 0
    %542 = vperm.xlu0 %541, %v74
    %v543 = vpop.permute.xlu0 %542
    %546 = vset.pattern.permute.xlu0 0
    %547 = vperm.xlu0 %546, %v75
    %v548 = vpop.permute.xlu0 %547
    %551 = vset.pattern.permute.xlu0 0
    %552 = vperm.xlu0 %551, %v76
    %v553 = vpop.permute.xlu0 %552
    %vm555 = vcmask 326656
    %v557 = vsel %vm555, %v69, 0
    %v560 = vsel %vm555, %v70, 0
    %v563 = vsel %vm555, %v71, 0
    %v566 = vsel %vm555, %v72, 0
    %568 = vmatprep.subr.mxu0 0.0
    %v569 = vand.u32 %v530, 4294901760
    %570 = vmatpush1.msra.mxu0 %v569
    %571 = vmatprep.subr.mxu0 0.0
    %v572 = vand.u32 %v531, 4294901760
    %573 = vmatpush1.msra.mxu0 %v572
    %574 = vmatprep.subr.mxu0 0.0
    %v575 = vand.u32 %v532, 4294901760
    %576 = vmatpush1.msra.mxu0 %v575
    %577 = vmatprep.subr.mxu0 0.0
    %v578 = vand.u32 %v533, 4294901760
    %579 = vmatpush1.msra.mxu0 %v578
    %580 = vmatprep.subr.mxu0 0.0
    %v581 = vand.u32 %v534, 4294901760
    %582 = vmatpush1.msra.mxu0 %v581
    %583 = vmatprep.subr.mxu0 0.0
    %584 = vmatpush1.msra.mxu0 0.0
    %585 = vmatprep.subr.mxu0 0.0
    %586 = vmatpush1.msra.mxu0 0.0
    %587 = vmatprep.subr.mxu0 0.0
    %588 = vmatpush1.msra.mxu0 0.0
    %589 = vmatprep.subr.mxu0 0.0
    %590 = vmatpush1.msra.mxu0 0.0
    %591 = vmatprep.subr.mxu0 0.0
    %592 = vmatpush1.msra.mxu0 0.0
    %593 = vmatprep.subr.mxu0 0.0
    %594 = vmatpush1.msra.mxu0 0.0
    %595 = vmatprep.subr.mxu0 0.0
    %596 = vmatpush1.msra.mxu0 0.0
    %597 = vmatprep.subr.mxu0 0.0
    %598 = vmatpush1.msra.mxu0 0.0
    %599 = vmatprep.subr.mxu0 0.0
    %600 = vmatpush1.msra.mxu0 0.0
    %601 = vmatprep.subr.mxu0 0.0
    %602 = vmatpush1.msra.mxu0 0.0
    %603 = vmatprep.subr.mxu0 0.0
    %604 = vmatpush1.msra.mxu0 0.0
    %605 = vmatprep.subr.mxu0 0.0
    %606 = vmatpush1.msra.mxu0 0.0
    %607 = vmatprep.subr.mxu0 0.0
    %608 = vmatpush1.msra.mxu0 0.0
    %609 = vmatprep.subr.mxu0 0.0
    %610 = vmatpush1.msra.mxu0 0.0
    %611 = vmatprep.subr.mxu0 0.0
    %612 = vmatpush1.msra.mxu0 0.0
    %613 = vmatprep.subr.mxu0 0.0
    %614 = vmatpush1.msra.mxu0 0.0
    %615 = vmatprep.subr.mxu0 0.0
    %616 = vmatpush1.msra.mxu0 0.0
    %617 = vmatprep.subr.mxu0 0.0
    %618 = vmatpush1.msra.mxu0 0.0
    %619 = vmatprep.subr.mxu0 0.0
    %620 = vmatpush1.msra.mxu0 0.0
    %621 = vmatprep.subr.mxu0 0.0
    %622 = vmatpush1.msra.mxu0 0.0
    %623 = vmatprep.subr.mxu0 0.0
    %624 = vmatpush1.msra.mxu0 0.0
    %625 = vmatprep.subr.mxu0 0.0
    %626 = vmatpush1.msra.mxu0 0.0
    %627 = vmatprep.subr.mxu0 0.0
    %628 = vmatpush1.msra.mxu0 0.0
    %629 = vmatprep.subr.mxu0 0.0
    %630 = vmatpush1.msra.mxu0 0.0
    %631 = vmatprep.subr.mxu0 0.0
    %632 = vmatpush1.msra.mxu0 0.0
    %633 = vmatprep.subr.mxu0 0.0
    %634 = vmatpush1.msra.mxu0 0.0
    %635 = vmatprep.subr.mxu0 0.0
    %636 = vmatpush1.msra.mxu0 0.0
    %637 = vmatprep.mubr.f32.mxu0 0.0
    %v638 = vand.u32 %v557, 4294901760
    %v639 = vsub.f32 %v557, %v638
    %v640 = vand.u32 %v639, 4294901760
    %v641 = vsub.f32 %v639, %v640
    %v642 = vand.u32 %v641, 4294901760
    %643 = vmatmul.mubr.f32.gmra.mrb[0].mxu0 %v642
    %v644 = vpop.f32.mrb[0].mxu0
    %v645 = vadd.f32 %v538, %v644
    %v646 = vpop.f32.mrb[0].mxu0
    %647 = vmatprep.mubr.f32.mxu0 0.0
    %v648 = vand.u32 %v560, 4294901760
    %v649 = vsub.f32 %v560, %v648
    %v650 = vand.u32 %v649, 4294901760
    %v651 = vsub.f32 %v649, %v650
    %v652 = vand.u32 %v651, 4294901760
    %653 = vmatmul.mubr.f32.gmra.mrb[0].mxu0 %v652
    %v654 = vpop.f32.mrb[0].mxu0
    %v655 = vadd.f32 %v543, %v654
    %v656 = vpop.f32.mrb[0].mxu0
    %657 = vmatprep.mubr.f32.mxu0 0.0
    %v658 = vand.u32 %v563, 4294901760
    %v659 = vsub.f32 %v563, %v658
    %v660 = vand.u32 %v659, 4294901760
    %v661 = vsub.f32 %v659, %v660
    %v662 = vand.u32 %v661, 4294901760
    %663 = vmatmul.mubr.f32.gmra.mrb[0].mxu0 %v662
    %v664 = vpop.f32.mrb[0].mxu0
    %v665 = vadd.f32 %v548, %v664
    %v666 = vpop.f32.mrb[0].mxu0
    %667 = vmatprep.mubr.f32.mxu0 0.0
    %v668 = vand.u32 %v566, 4294901760
    %v669 = vsub.f32 %v566, %v668
    %v670 = vand.u32 %v669, 4294901760
    %v671 = vsub.f32 %v669, %v670
    %v672 = vand.u32 %v671, 4294901760
    %673 = vmatmul.mubr.f32.gmra.mrb[0].mxu0 %v672
    %v674 = vpop.f32.mrb[0].mxu0
    %v675 = vadd.f32 %v553, %v674
    %v676 = vpop.f32.mrb[0].mxu0
    %677 = vdwg.mxu0
    %678 = vmatprep.subr.mxu0 0.0
    %v679 = vand.u32 %v530, 4294901760
    %v680 = vsub.f32 %v530, %v679
    %v681 = vand.u32 %v680, 4294901760
    %v682 = vsub.f32 %v680, %v681
    %v683 = vand.u32 %v682, 4294901760
    %684 = vmatpush1.msra.mxu0 %v683
    %685 = vmatprep.subr.mxu0 0.0
    %v686 = vand.u32 %v531, 4294901760
    %v687 = vsub.f32 %v531, %v686
    %v688 = vand.u32 %v687, 4294901760
    %v689 = vsub.f32 %v687, %v688
    %v690 = vand.u32 %v689, 4294901760
    %691 = vmatpush1.msra.mxu0 %v690
    %692 = vmatprep.subr.mxu0 0.0
    %v693 = vand.u32 %v532, 4294901760
    %v694 = vsub.f32 %v532, %v693
    %v695 = vand.u32 %v694, 4294901760
    %v696 = vsub.f32 %v694, %v695
    %v697 = vand.u32 %v696, 4294901760
    %698 = vmatpush1.msra.mxu0 %v697
    %699 = vmatprep.subr.mxu0 0.0
    %v700 = vand.u32 %v533, 4294901760
    %v701 = vsub.f32 %v533, %v700
    %v702 = vand.u32 %v701, 4294901760
    %v703 = vsub.f32 %v701, %v702
    %v704 = vand.u32 %v703, 4294901760
    %705 = vmatpush1.msra.mxu0 %v704
    %706 = vmatprep.subr.mxu0 0.0
    %v707 = vand.u32 %v534, 4294901760
    %v708 = vsub.f32 %v534, %v707
    %v709 = vand.u32 %v708, 4294901760
    %v710 = vsub.f32 %v708, %v709
    %v711 = vand.u32 %v710, 4294901760
    %712 = vmatpush1.msra.mxu0 %v711
    %713 = vmatprep.subr.mxu0 0.0
    %714 = vmatpush1.msra.mxu0 0.0
    %715 = vmatprep.subr.mxu0 0.0
    %716 = vmatpush1.msra.mxu0 0.0
    %717 = vmatprep.subr.mxu0 0.0
    %718 = vmatpush1.msra.mxu0 0.0
    %719 = vmatprep.subr.mxu0 0.0
    %720 = vmatpush1.msra.mxu0 0.0
    %721 = vmatprep.subr.mxu0 0.0
    %722 = vmatpush1.msra.mxu0 0.0
    %723 = vmatprep.subr.mxu0 0.0
    %724 = vmatpush1.msra.mxu0 0.0
    %725 = vmatprep.subr.mxu0 0.0
    %726 = vmatpush1.msra.mxu0 0.0
    %727 = vmatprep.subr.mxu0 0.0
    %728 = vmatpush1.msra.mxu0 0.0
    %729 = vmatprep.subr.mxu0 0.0
    %730 = vmatpush1.msra.mxu0 0.0
    %731 = vmatprep.subr.mxu0 0.0
    %732 = vmatpush1.msra.mxu0 0.0
    %733 = vmatprep.subr.mxu0 0.0
    %734 = vmatpush1.msra.mxu0 0.0
    %735 = vmatprep.subr.mxu0 0.0
    %736 = vmatpush1.msra.mxu0 0.0
    %737 = vmatprep.subr.mxu0 0.0
    %738 = vmatpush1.msra.mxu0 0.0
    %739 = vmatprep.subr.mxu0 0.0
    %740 = vmatpush1.msra.mxu0 0.0
    %741 = vmatprep.subr.mxu0 0.0
    %742 = vmatpush1.msra.mxu0 0.0
    %743 = vmatprep.subr.mxu0 0.0
    %744 = vmatpush1.msra.mxu0 0.0
    %745 = vmatprep.subr.mxu0 0.0
    %746 = vmatpush1.msra.mxu0 0.0
    %747 = vmatprep.subr.mxu0 0.0
    %748 = vmatpush1.msra.mxu0 0.0
    %749 = vmatprep.subr.mxu0 0.0
    %750 = vmatpush1.msra.mxu0 0.0
    %751 = vmatprep.subr.mxu0 0.0
    %752 = vmatpush1.msra.mxu0 0.0
    %753 = vmatprep.subr.mxu0 0.0
    %754 = vmatpush1.msra.mxu0 0.0
    %755 = vmatprep.subr.mxu0 0.0
    %756 = vmatpush1.msra.mxu0 0.0
    %757 = vmatprep.subr.mxu0 0.0
    %758 = vmatpush1.msra.mxu0 0.0
    %759 = vmatprep.subr.mxu0 0.0
    %760 = vmatpush1.msra.mxu0 0.0
    %761 = vmatprep.subr.mxu0 0.0
    %762 = vmatpush1.msra.mxu0 0.0
    %763 = vmatprep.subr.mxu0 0.0
    %764 = vmatpush1.msra.mxu0 0.0
    %765 = vmatprep.subr.mxu0 0.0
    %766 = vmatpush1.msra.mxu0 0.0
    %767 = vmatprep.mubr.f32.mxu0 0.0
    %v768 = vand.u32 %v557, 4294901760
    %769 = vmatmul.mubr.f32.gmra.mrb[0].mxu0 %v768
    %v770 = vpop.f32.mrb[0].mxu0
    %v771 = vadd.f32 %v645, %v770
    %v772 = vpop.f32.mrb[0].mxu0
    %773 = vmatprep.mubr.f32.mxu0 0.0
    %v774 = vand.u32 %v560, 4294901760
    %775 = vmatmul.mubr.f32.gmra.mrb[0].mxu0 %v774
    %v776 = vpop.f32.mrb[0].mxu0
    %v777 = vadd.f32 %v655, %v776
    %v778 = vpop.f32.mrb[0].mxu0
    %779 = vmatprep.mubr.f32.mxu0 0.0
    %v780 = vand.u32 %v563, 4294901760
    %781 = vmatmul.mubr.f32.gmra.mrb[0].mxu0 %v780
    %v782 = vpop.f32.mrb[0].mxu0
    %v783 = vadd.f32 %v665, %v782
    %v784 = vpop.f32.mrb[0].mxu0
    %785 = vmatprep.mubr.f32.mxu0 0.0
    %v786 = vand.u32 %v566, 4294901760
    %787 = vmatmul.mubr.f32.gmra.mrb[0].mxu0 %v786
    %v788 = vpop.f32.mrb[0].mxu0
    %v789 = vadd.f32 %v675, %v788
    %v790 = vpop.f32.mrb[0].mxu0
    %791 = vdwg.mxu0
    %792 = vmatprep.subr.mxu0 0.0
    %v793 = vand.u32 %v530, 4294901760
    %v794 = vsub.f32 %v530, %v793
    %795 = vmatpush1.msra.mxu0 %v794
    %796 = vmatprep.subr.mxu0 0.0
    %v797 = vand.u32 %v531, 4294901760
    %v798 = vsub.f32 %v531, %v797
    %799 = vmatpush1.msra.mxu0 %v798
    %800 = vmatprep.subr.mxu0 0.0
    %v801 = vand.u32 %v532, 4294901760
    %v802 = vsub.f32 %v532, %v801
    %803 = vmatpush1.msra.mxu0 %v802
    %804 = vmatprep.subr.mxu0 0.0
    %v805 = vand.u32 %v533, 4294901760
    %v806 = vsub.f32 %v533, %v805
    %807 = vmatpush1.msra.mxu0 %v806
    %808 = vmatprep.subr.mxu0 0.0
    %v809 = vand.u32 %v534, 4294901760
    %v810 = vsub.f32 %v534, %v809
    %811 = vmatpush1.msra.mxu0 %v810
    %812 = vmatprep.subr.mxu0 0.0
    %813 = vmatpush1.msra.mxu0 0.0
    %814 = vmatprep.subr.mxu0 0.0
    %815 = vmatpush1.msra.mxu0 0.0
    %816 = vmatprep.subr.mxu0 0.0
    %817 = vmatpush1.msra.mxu0 0.0
    %818 = vmatprep.subr.mxu0 0.0
    %819 = vmatpush1.msra.mxu0 0.0
    %820 = vmatprep.subr.mxu0 0.0
    %821 = vmatpush1.msra.mxu0 0.0
    %822 = vmatprep.subr.mxu0 0.0
    %823 = vmatpush1.msra.mxu0 0.0
    %824 = vmatprep.subr.mxu0 0.0
    %825 = vmatpush1.msra.mxu0 0.0
    %826 = vmatprep.subr.mxu0 0.0
    %827 = vmatpush1.msra.mxu0 0.0
    %828 = vmatprep.subr.mxu0 0.0
    %829 = vmatpush1.msra.mxu0 0.0
    %830 = vmatprep.subr.mxu0 0.0
    %831 = vmatpush1.msra.mxu0 0.0
    %832 = vmatprep.subr.mxu0 0.0
    %833 = vmatpush1.msra.mxu0 0.0
    %834 = vmatprep.subr.mxu0 0.0
    %835 = vmatpush1.msra.mxu0 0.0
    %836 = vmatprep.subr.mxu0 0.0
    %837 = vmatpush1.msra.mxu0 0.0
    %838 = vmatprep.subr.mxu0 0.0
    %839 = vmatpush1.msra.mxu0 0.0
    %840 = vmatprep.subr.mxu0 0.0
    %841 = vmatpush1.msra.mxu0 0.0
    %842 = vmatprep.subr.mxu0 0.0
    %843 = vmatpush1.msra.mxu0 0.0
    %844 = vmatprep.subr.mxu0 0.0
    %845 = vmatpush1.msra.mxu0 0.0
    %846 = vmatprep.subr.mxu0 0.0
    %847 = vmatpush1.msra.mxu0 0.0
    %848 = vmatprep.subr.mxu0 0.0
    %849 = vmatpush1.msra.mxu0 0.0
    %850 = vmatprep.subr.mxu0 0.0
    %851 = vmatpush1.msra.mxu0 0.0
    %852 = vmatprep.subr.mxu0 0.0
    %853 = vmatpush1.msra.mxu0 0.0
    %854 = vmatprep.subr.mxu0 0.0
    %855 = vmatpush1.msra.mxu0 0.0
    %856 = vmatprep.subr.mxu0 0.0
    %857 = vmatpush1.msra.mxu0 0.0
    %858 = vmatprep.subr.mxu0 0.0
    %859 = vmatpush1.msra.mxu0 0.0
    %860 = vmatprep.subr.mxu0 0.0
    %861 = vmatpush1.msra.mxu0 0.0
    %862 = vmatprep.subr.mxu0 0.0
    %863 = vmatpush1.msra.mxu0 0.0
    %864 = vmatprep.subr.mxu0 0.0
    %865 = vmatpush1.msra.mxu0 0.0
    %866 = vmatprep.mubr.f32.mxu0 0.0
    %v867 = vand.u32 %v557, 4294901760
    %v868 = vsub.f32 %v557, %v867
    %869 = vmatmul.mubr.f32.gmra.mrb[0].mxu0 %v868
    %v870 = vpop.f32.mrb[0].mxu0
    %v871 = vadd.f32 %v771, %v870
    %v872 = vpop.f32.mrb[0].mxu0
    %873 = vmatprep.mubr.f32.mxu0 0.0
    %v874 = vand.u32 %v560, 4294901760
    %v875 = vsub.f32 %v560, %v874
    %876 = vmatmul.mubr.f32.gmra.mrb[0].mxu0 %v875
    %v877 = vpop.f32.mrb[0].mxu0
    %v878 = vadd.f32 %v777, %v877
    %v879 = vpop.f32.mrb[0].mxu0
    %880 = vmatprep.mubr.f32.mxu0 0.0
    %v881 = vand.u32 %v563, 4294901760
    %v882 = vsub.f32 %v563, %v881
    %883 = vmatmul.mubr.f32.gmra.mrb[0].mxu0 %v882
    %v884 = vpop.f32.mrb[0].mxu0
    %v885 = vadd.f32 %v783, %v884
    %v886 = vpop.f32.mrb[0].mxu0
    %887 = vmatprep.mubr.f32.mxu0 0.0
    %v888 = vand.u32 %v566, 4294901760
    %v889 = vsub.f32 %v566, %v888
    %890 = vmatmul.mubr.f32.gmra.mrb[0].mxu0 %v889
    %v891 = vpop.f32.mrb[0].mxu0
    %v892 = vadd.f32 %v789, %v891
    %v893 = vpop.f32.mrb[0].mxu0
    %894 = vdwg.mxu0
    %895 = vmatprep.subr.mxu0 0.0
    %v896 = vand.u32 %v530, 4294901760
    %897 = vmatpush1.msra.mxu0 %v896
    %898 = vmatprep.subr.mxu0 0.0
    %v899 = vand.u32 %v531, 4294901760
    %900 = vmatpush1.msra.mxu0 %v899
    %901 = vmatprep.subr.mxu0 0.0
    %v902 = vand.u32 %v532, 4294901760
    %903 = vmatpush1.msra.mxu0 %v902
    %904 = vmatprep.subr.mxu0 0.0
    %v905 = vand.u32 %v533, 4294901760
    %906 = vmatpush1.msra.mxu0 %v905
    %907 = vmatprep.subr.mxu0 0.0
    %v908 = vand.u32 %v534, 4294901760
    %909 = vmatpush1.msra.mxu0 %v908
    %910 = vmatprep.subr.mxu0 0.0
    %911 = vmatpush1.msra.mxu0 0.0
    %912 = vmatprep.subr.mxu0 0.0
    %913 = vmatpush1.msra.mxu0 0.0
    %914 = vmatprep.subr.mxu0 0.0
    %915 = vmatpush1.msra.mxu0 0.0
    %916 = vmatprep.subr.mxu0 0.0
    %917 = vmatpush1.msra.mxu0 0.0
    %918 = vmatprep.subr.mxu0 0.0
    %919 = vmatpush1.msra.mxu0 0.0
    %920 = vmatprep.subr.mxu0 0.0
    %921 = vmatpush1.msra.mxu0 0.0
    %922 = vmatprep.subr.mxu0 0.0
    %923 = vmatpush1.msra.mxu0 0.0
    %924 = vmatprep.subr.mxu0 0.0
    %925 = vmatpush1.msra.mxu0 0.0
    %926 = vmatprep.subr.mxu0 0.0
    %927 = vmatpush1.msra.mxu0 0.0
    %928 = vmatprep.subr.mxu0 0.0
    %929 = vmatpush1.msra.mxu0 0.0
    %930 = vmatprep.subr.mxu0 0.0
    %931 = vmatpush1.msra.mxu0 0.0
    %932 = vmatprep.subr.mxu0 0.0
    %933 = vmatpush1.msra.mxu0 0.0
    %934 = vmatprep.subr.mxu0 0.0
    %935 = vmatpush1.msra.mxu0 0.0
    %936 = vmatprep.subr.mxu0 0.0
    %937 = vmatpush1.msra.mxu0 0.0
    %938 = vmatprep.subr.mxu0 0.0
    %939 = vmatpush1.msra.mxu0 0.0
    %940 = vmatprep.subr.mxu0 0.0
    %941 = vmatpush1.msra.mxu0 0.0
    %942 = vmatprep.subr.mxu0 0.0
    %943 = vmatpush1.msra.mxu0 0.0
    %944 = vmatprep.subr.mxu0 0.0
    %945 = vmatpush1.msra.mxu0 0.0
    %946 = vmatprep.subr.mxu0 0.0
    %947 = vmatpush1.msra.mxu0 0.0
    %948 = vmatprep.subr.mxu0 0.0
    %949 = vmatpush1.msra.mxu0 0.0
    %950 = vmatprep.subr.mxu0 0.0
    %951 = vmatpush1.msra.mxu0 0.0
    %952 = vmatprep.subr.mxu0 0.0
    %953 = vmatpush1.msra.mxu0 0.0
    %954 = vmatprep.subr.mxu0 0.0
    %955 = vmatpush1.msra.mxu0 0.0
    %956 = vmatprep.subr.mxu0 0.0
    %957 = vmatpush1.msra.mxu0 0.0
    %958 = vmatprep.subr.mxu0 0.0
    %959 = vmatpush1.msra.mxu0 0.0
    %960 = vmatprep.subr.mxu0 0.0
    %961 = vmatpush1.msra.mxu0 0.0
    %962 = vmatprep.subr.mxu0 0.0
    %963 = vmatpush1.msra.mxu0 0.0
    %964 = vmatprep.mubr.f32.mxu0 0.0
    %v965 = vand.u32 %v557, 4294901760
    %v966 = vsub.f32 %v557, %v965
    %v967 = vand.u32 %v966, 4294901760
    %968 = vmatmul.mubr.f32.gmra.mrb[0].mxu0 %v967
    %v969 = vpop.f32.mrb[0].mxu0
    %v970 = vadd.f32 %v871, %v969
    %v971 = vpop.f32.mrb[0].mxu0
    %972 = vmatprep.mubr.f32.mxu0 0.0
    %v973 = vand.u32 %v560, 4294901760
    %v974 = vsub.f32 %v560, %v973
    %v975 = vand.u32 %v974, 4294901760
    %976 = vmatmul.mubr.f32.gmra.mrb[0].mxu0 %v975
    %v977 = vpop.f32.mrb[0].mxu0
    %v978 = vadd.f32 %v878, %v977
    %v979 = vpop.f32.mrb[0].mxu0
    %980 = vmatprep.mubr.f32.mxu0 0.0
    %v981 = vand.u32 %v563, 4294901760
    %v982 = vsub.f32 %v563, %v981
    %v983 = vand.u32 %v982, 4294901760
    %984 = vmatmul.mubr.f32.gmra.mrb[0].mxu0 %v983
    %v985 = vpop.f32.mrb[0].mxu0
    %v986 = vadd.f32 %v885, %v985
    %v987 = vpop.f32.mrb[0].mxu0
    %988 = vmatprep.mubr.f32.mxu0 0.0
    %v989 = vand.u32 %v566, 4294901760
    %v990 = vsub.f32 %v566, %v989
    %v991 = vand.u32 %v990, 4294901760
    %992 = vmatmul.mubr.f32.gmra.mrb[0].mxu0 %v991
    %v993 = vpop.f32.mrb[0].mxu0
    %v994 = vadd.f32 %v892, %v993
    %v995 = vpop.f32.mrb[0].mxu0
    %996 = vdwg.mxu0
    %997 = vmatprep.subr.mxu0 0.0
    %v998 = vand.u32 %v530, 4294901760
    %v999 = vsub.f32 %v530, %v998
    %v1000 = vand.u32 %v999, 4294901760
    %1001 = vmatpush1.msra.mxu0 %v1000
    %1002 = vmatprep.subr.mxu0 0.0
    %v1003 = vand.u32 %v531, 4294901760
    %v1004 = vsub.f32 %v531, %v1003
    %v1005 = vand.u32 %v1004, 4294901760
    %1006 = vmatpush1.msra.mxu0 %v1005
    %1007 = vmatprep.subr.mxu0 0.0
    %v1008 = vand.u32 %v532, 4294901760
    %v1009 = vsub.f32 %v532, %v1008
    %v1010 = vand.u32 %v1009, 4294901760
    %1011 = vmatpush1.msra.mxu0 %v1010
    %1012 = vmatprep.subr.mxu0 0.0
    %v1013 = vand.u32 %v533, 4294901760
    %v1014 = vsub.f32 %v533, %v1013
    %v1015 = vand.u32 %v1014, 4294901760
    %1016 = vmatpush1.msra.mxu0 %v1015
    %1017 = vmatprep.subr.mxu0 0.0
    %v1018 = vand.u32 %v534, 4294901760
    %v1019 = vsub.f32 %v534, %v1018
    %v1020 = vand.u32 %v1019, 4294901760
    %1021 = vmatpush1.msra.mxu0 %v1020
    %1022 = vmatprep.subr.mxu0 0.0
    %1023 = vmatpush1.msra.mxu0 0.0
    %1024 = vmatprep.subr.mxu0 0.0
    %1025 = vmatpush1.msra.mxu0 0.0
    %1026 = vmatprep.subr.mxu0 0.0
    %1027 = vmatpush1.msra.mxu0 0.0
    %1028 = vmatprep.subr.mxu0 0.0
    %1029 = vmatpush1.msra.mxu0 0.0
    %1030 = vmatprep.subr.mxu0 0.0
    %1031 = vmatpush1.msra.mxu0 0.0
    %1032 = vmatprep.subr.mxu0 0.0
    %1033 = vmatpush1.msra.mxu0 0.0
    %1034 = vmatprep.subr.mxu0 0.0
    %1035 = vmatpush1.msra.mxu0 0.0
    %1036 = vmatprep.subr.mxu0 0.0
    %1037 = vmatpush1.msra.mxu0 0.0
    %1038 = vmatprep.subr.mxu0 0.0
    %1039 = vmatpush1.msra.mxu0 0.0
    %1040 = vmatprep.subr.mxu0 0.0
    %1041 = vmatpush1.msra.mxu0 0.0
    %1042 = vmatprep.subr.mxu0 0.0
    %1043 = vmatpush1.msra.mxu0 0.0
    %1044 = vmatprep.subr.mxu0 0.0
    %1045 = vmatpush1.msra.mxu0 0.0
    %1046 = vmatprep.subr.mxu0 0.0
    %1047 = vmatpush1.msra.mxu0 0.0
    %1048 = vmatprep.subr.mxu0 0.0
    %1049 = vmatpush1.msra.mxu0 0.0
    %1050 = vmatprep.subr.mxu0 0.0
    %1051 = vmatpush1.msra.mxu0 0.0
    %1052 = vmatprep.subr.mxu0 0.0
    %1053 = vmatpush1.msra.mxu0 0.0
    %1054 = vmatprep.subr.mxu0 0.0
    %1055 = vmatpush1.msra.mxu0 0.0
    %1056 = vmatprep.subr.mxu0 0.0
    %1057 = vmatpush1.msra.mxu0 0.0
    %1058 = vmatprep.subr.mxu0 0.0
    %1059 = vmatpush1.msra.mxu0 0.0
    %1060 = vmatprep.subr.mxu0 0.0
    %1061 = vmatpush1.msra.mxu0 0.0
    %1062 = vmatprep.subr.mxu0 0.0
    %1063 = vmatpush1.msra.mxu0 0.0
    %1064 = vmatprep.subr.mxu0 0.0
    %1065 = vmatpush1.msra.mxu0 0.0
    %1066 = vmatprep.subr.mxu0 0.0
    %1067 = vmatpush1.msra.mxu0 0.0
    %1068 = vmatprep.subr.mxu0 0.0
    %1069 = vmatpush1.msra.mxu0 0.0
    %1070 = vmatprep.subr.mxu0 0.0
    %1071 = vmatpush1.msra.mxu0 0.0
    %1072 = vmatprep.subr.mxu0 0.0
    %1073 = vmatpush1.msra.mxu0 0.0
    %1074 = vmatprep.subr.mxu0 0.0
    %1075 = vmatpush1.msra.mxu0 0.0
    %1076 = vmatprep.mubr.f32.mxu0 0.0
    %v1077 = vand.u32 %v557, 4294901760
    %1078 = vmatmul.mubr.f32.gmra.mrb[0].mxu0 %v1077
    %v1079 = vpop.f32.mrb[0].mxu0
    %v1080 = vadd.f32 %v970, %v1079
    %v1081 = vpop.f32.mrb[0].mxu0
    %1082 = vmatprep.mubr.f32.mxu0 0.0
    %v1083 = vand.u32 %v560, 4294901760
    %1084 = vmatmul.mubr.f32.gmra.mrb[0].mxu0 %v1083
    %v1085 = vpop.f32.mrb[0].mxu0
    %v1086 = vadd.f32 %v978, %v1085
    %v1087 = vpop.f32.mrb[0].mxu0
    %1088 = vmatprep.mubr.f32.mxu0 0.0
    %v1089 = vand.u32 %v563, 4294901760
    %1090 = vmatmul.mubr.f32.gmra.mrb[0].mxu0 %v1089
    %v1091 = vpop.f32.mrb[0].mxu0
    %v1092 = vadd.f32 %v986, %v1091
    %v1093 = vpop.f32.mrb[0].mxu0
    %1094 = vmatprep.mubr.f32.mxu0 0.0
    %v1095 = vand.u32 %v566, 4294901760
    %1096 = vmatmul.mubr.f32.gmra.mrb[0].mxu0 %v1095
    %v1097 = vpop.f32.mrb[0].mxu0
    %v1098 = vadd.f32 %v994, %v1097
    %v1099 = vpop.f32.mrb[0].mxu0
    %1100 = vdwg.mxu0
    %1101 = vmatprep.subr.mxu0 0.0
    %v1102 = vand.u32 %v530, 4294901760
    %1103 = vmatpush1.msra.mxu0 %v1102
    %1104 = vmatprep.subr.mxu0 0.0
    %v1105 = vand.u32 %v531, 4294901760
    %1106 = vmatpush1.msra.mxu0 %v1105
    %1107 = vmatprep.subr.mxu0 0.0
    %v1108 = vand.u32 %v532, 4294901760
    %1109 = vmatpush1.msra.mxu0 %v1108
    %1110 = vmatprep.subr.mxu0 0.0
    %v1111 = vand.u32 %v533, 4294901760
    %1112 = vmatpush1.msra.mxu0 %v1111
    %1113 = vmatprep.subr.mxu0 0.0
    %v1114 = vand.u32 %v534, 4294901760
    %1115 = vmatpush1.msra.mxu0 %v1114
    %1116 = vmatprep.subr.mxu0 0.0
    %1117 = vmatpush1.msra.mxu0 0.0
    %1118 = vmatprep.subr.mxu0 0.0
    %1119 = vmatpush1.msra.mxu0 0.0
    %1120 = vmatprep.subr.mxu0 0.0
    %1121 = vmatpush1.msra.mxu0 0.0
    %1122 = vmatprep.subr.mxu0 0.0
    %1123 = vmatpush1.msra.mxu0 0.0
    %1124 = vmatprep.subr.mxu0 0.0
    %1125 = vmatpush1.msra.mxu0 0.0
    %1126 = vmatprep.subr.mxu0 0.0
    %1127 = vmatpush1.msra.mxu0 0.0
    %1128 = vmatprep.subr.mxu0 0.0
    %1129 = vmatpush1.msra.mxu0 0.0
    %1130 = vmatprep.subr.mxu0 0.0
    %1131 = vmatpush1.msra.mxu0 0.0
    %1132 = vmatprep.subr.mxu0 0.0
    %1133 = vmatpush1.msra.mxu0 0.0
    %1134 = vmatprep.subr.mxu0 0.0
    %1135 = vmatpush1.msra.mxu0 0.0
    %1136 = vmatprep.subr.mxu0 0.0
    %1137 = vmatpush1.msra.mxu0 0.0
    %1138 = vmatprep.subr.mxu0 0.0
    %1139 = vmatpush1.msra.mxu0 0.0
    %1140 = vmatprep.subr.mxu0 0.0
    %1141 = vmatpush1.msra.mxu0 0.0
    %1142 = vmatprep.subr.mxu0 0.0
    %1143 = vmatpush1.msra.mxu0 0.0
    %1144 = vmatprep.subr.mxu0 0.0
    %1145 = vmatpush1.msra.mxu0 0.0
    %1146 = vmatprep.subr.mxu0 0.0
    %1147 = vmatpush1.msra.mxu0 0.0
    %1148 = vmatprep.subr.mxu0 0.0
    %1149 = vmatpush1.msra.mxu0 0.0
    %1150 = vmatprep.subr.mxu0 0.0
    %1151 = vmatpush1.msra.mxu0 0.0
    %1152 = vmatprep.subr.mxu0 0.0
    %1153 = vmatpush1.msra.mxu0 0.0
    %1154 = vmatprep.subr.mxu0 0.0
    %1155 = vmatpush1.msra.mxu0 0.0
    %1156 = vmatprep.subr.mxu0 0.0
    %1157 = vmatpush1.msra.mxu0 0.0
    %1158 = vmatprep.subr.mxu0 0.0
    %1159 = vmatpush1.msra.mxu0 0.0
    %1160 = vmatprep.subr.mxu0 0.0
    %1161 = vmatpush1.msra.mxu0 0.0
    %1162 = vmatprep.subr.mxu0 0.0
    %1163 = vmatpush1.msra.mxu0 0.0
    %1164 = vmatprep.subr.mxu0 0.0
    %1165 = vmatpush1.msra.mxu0 0.0
    %1166 = vmatprep.subr.mxu0 0.0
    %1167 = vmatpush1.msra.mxu0 0.0
    %1168 = vmatprep.subr.mxu0 0.0
    %1169 = vmatpush1.msra.mxu0 0.0
    %1170 = vmatprep.mubr.f32.mxu0 0.0
    %v1171 = vand.u32 %v557, 4294901760
    %1172 = vmatmul.mubr.f32.gmra.mrb[0].mxu0 %v1171
    %v1173 = vpop.f32.mrb[0].mxu0
    %v1174 = vadd.f32 %v1080, %v1173
    %v1175 = vpop.f32.mrb[0].mxu0
    %1176 = vmatprep.mubr.f32.mxu0 0.0
    %v1177 = vand.u32 %v560, 4294901760
    %1178 = vmatmul.mubr.f32.gmra.mrb[0].mxu0 %v1177
    %v1179 = vpop.f32.mrb[0].mxu0
    %v1180 = vadd.f32 %v1086, %v1179
    %v1181 = vpop.f32.mrb[0].mxu0
    %1182 = vmatprep.mubr.f32.mxu0 0.0
    %v1183 = vand.u32 %v563, 4294901760
    %1184 = vmatmul.mubr.f32.gmra.mrb[0].mxu0 %v1183
    %v1185 = vpop.f32.mrb[0].mxu0
    %v1186 = vadd.f32 %v1092, %v1185
    %v1187 = vpop.f32.mrb[0].mxu0
    %1188 = vmatprep.mubr.f32.mxu0 0.0
    %v1189 = vand.u32 %v566, 4294901760
    %1190 = vmatmul.mubr.f32.gmra.mrb[0].mxu0 %v1189
    %v1191 = vpop.f32.mrb[0].mxu0
    %v1192 = vadd.f32 %v1098, %v1191
    %v1193 = vpop.f32.mrb[0].mxu0
    %1194 = vdwg.mxu0
    %v1195 = vlaneseq
    %v1196 = vshrl.u32 %v1195, 7
    %v1197 = vsub.s32 0, %v1196
    %v1198 = vrot.slane %v1174, %v1197
    %vm1199 = vcmp.gt.f32.partialorder %v1198, %v1174
    %vm1200 = vcmp.gt.f32.partialorder %v1198, %v1180
    %vm1201 = vcmp.gt.f32.partialorder %v1198, %v1186
    %vm1202 = vcmp.gt.f32.partialorder %v1198, %v1192
    %v1203 = vsel %vm1199, 1, 0
    %v1204 = vsel %vm1200, 1, 0
    %v1205 = vsel %vm1201, 1, 0
    %v1206 = vsel %vm1202, 1, 0
    %v1207 = vcvt.s32.f32 %v1203
    %v1208 = vcvt.s32.f32 %v1204
    %v1209 = vcvt.s32.f32 %v1205
    %v1210 = vcvt.s32.f32 %v1206
    %v1211 = vadd.f32 %v1207, 0.0
    %v1212 = vadd.f32 %v1208, 0.0
    %v1213 = vadd.f32 %v1209, 0.0
    %v1214 = vadd.f32 %v1210, 0.0
    %v1215 = vlaneseq
    %v1216 = vshrl.u32 %v1215, 7
    %v1217 = vsub.s32 1, %v1216
    %v1218 = vrot.slane %v1174, %v1217
    %vm1219 = vcmp.gt.f32.partialorder %v1218, %v1174
    %vm1220 = vcmp.gt.f32.partialorder %v1218, %v1180
    %vm1221 = vcmp.gt.f32.partialorder %v1218, %v1186
    %vm1222 = vcmp.gt.f32.partialorder %v1218, %v1192
    %v1223 = vsel %vm1219, 1, 0
    %v1224 = vsel %vm1220, 1, 0
    %v1225 = vsel %vm1221, 1, 0
    %v1226 = vsel %vm1222, 1, 0
    %v1227 = vcvt.s32.f32 %v1223
    %v1228 = vcvt.s32.f32 %v1224
    %v1229 = vcvt.s32.f32 %v1225
    %v1230 = vcvt.s32.f32 %v1226
    %v1231 = vadd.f32 %v1211, %v1227
    %v1232 = vadd.f32 %v1212, %v1228
    %v1233 = vadd.f32 %v1213, %v1229
    %v1234 = vadd.f32 %v1214, %v1230
    %v1235 = vlaneseq
    %v1236 = vshrl.u32 %v1235, 7
    %v1237 = vsub.s32 2, %v1236
    %v1238 = vrot.slane %v1174, %v1237
    %vm1239 = vcmp.gt.f32.partialorder %v1238, %v1174
    %vm1240 = vcmp.gt.f32.partialorder %v1238, %v1180
    %vm1241 = vcmp.gt.f32.partialorder %v1238, %v1186
    %vm1242 = vcmp.gt.f32.partialorder %v1238, %v1192
    %v1243 = vsel %vm1239, 1, 0
    %v1244 = vsel %vm1240, 1, 0
    %v1245 = vsel %vm1241, 1, 0
    %v1246 = vsel %vm1242, 1, 0
    %v1247 = vcvt.s32.f32 %v1243
    %v1248 = vcvt.s32.f32 %v1244
    %v1249 = vcvt.s32.f32 %v1245
    %v1250 = vcvt.s32.f32 %v1246
    %v1251 = vadd.f32 %v1231, %v1247
    %v1252 = vadd.f32 %v1232, %v1248
    %v1253 = vadd.f32 %v1233, %v1249
    %v1254 = vadd.f32 %v1234, %v1250
    %v1255 = vlaneseq
    %v1256 = vshrl.u32 %v1255, 7
    %v1257 = vsub.s32 3, %v1256
    %v1258 = vrot.slane %v1174, %v1257
    %vm1259 = vcmp.gt.f32.partialorder %v1258, %v1174
    %vm1260 = vcmp.gt.f32.partialorder %v1258, %v1180
    %vm1261 = vcmp.gt.f32.partialorder %v1258, %v1186
    %vm1262 = vcmp.gt.f32.partialorder %v1258, %v1192
    %v1263 = vsel %vm1259, 1, 0
    %v1264 = vsel %vm1260, 1, 0
    %v1265 = vsel %vm1261, 1, 0
    %v1266 = vsel %vm1262, 1, 0
    %v1267 = vcvt.s32.f32 %v1263
    %v1268 = vcvt.s32.f32 %v1264
    %v1269 = vcvt.s32.f32 %v1265
    %v1270 = vcvt.s32.f32 %v1266
    %v1271 = vadd.f32 %v1251, %v1267
    %v1272 = vadd.f32 %v1252, %v1268
    %v1273 = vadd.f32 %v1253, %v1269
    %v1274 = vadd.f32 %v1254, %v1270
    %v1275 = vlaneseq
    %v1276 = vshrl.u32 %v1275, 7
    %v1277 = vsub.s32 4, %v1276
    %v1278 = vrot.slane %v1174, %v1277
    %vm1279 = vcmp.gt.f32.partialorder %v1278, %v1174
    %vm1280 = vcmp.gt.f32.partialorder %v1278, %v1180
    %vm1281 = vcmp.gt.f32.partialorder %v1278, %v1186
    %vm1282 = vcmp.gt.f32.partialorder %v1278, %v1192
    %v1283 = vsel %vm1279, 1, 0
    %v1284 = vsel %vm1280, 1, 0
    %v1285 = vsel %vm1281, 1, 0
    %v1286 = vsel %vm1282, 1, 0
    %v1287 = vcvt.s32.f32 %v1283
    %v1288 = vcvt.s32.f32 %v1284
    %v1289 = vcvt.s32.f32 %v1285
    %v1290 = vcvt.s32.f32 %v1286
    %v1291 = vadd.f32 %v1271, %v1287
    %v1292 = vadd.f32 %v1272, %v1288
    %v1293 = vadd.f32 %v1273, %v1289
    %v1294 = vadd.f32 %v1274, %v1290
    %v1295 = vlaneseq
    %v1296 = vshrl.u32 %v1295, 7
    %v1297 = vsub.s32 5, %v1296
    %v1298 = vrot.slane %v1174, %v1297
    %vm1299 = vcmp.gt.f32.partialorder %v1298, %v1174
    %vm1300 = vcmp.gt.f32.partialorder %v1298, %v1180
    %vm1301 = vcmp.gt.f32.partialorder %v1298, %v1186
    %vm1302 = vcmp.gt.f32.partialorder %v1298, %v1192
    %v1303 = vsel %vm1299, 1, 0
    %v1304 = vsel %vm1300, 1, 0
    %v1305 = vsel %vm1301, 1, 0
    %v1306 = vsel %vm1302, 1, 0
    %v1307 = vcvt.s32.f32 %v1303
    %v1308 = vcvt.s32.f32 %v1304
    %v1309 = vcvt.s32.f32 %v1305
    %v1310 = vcvt.s32.f32 %v1306
    %v1311 = vadd.f32 %v1291, %v1307
    %v1312 = vadd.f32 %v1292, %v1308
    %v1313 = vadd.f32 %v1293, %v1309
    %v1314 = vadd.f32 %v1294, %v1310
    %v1315 = vlaneseq
    %v1316 = vshrl.u32 %v1315, 7
    %v1317 = vsub.s32 6, %v1316
    %v1318 = vrot.slane %v1174, %v1317
    %vm1319 = vcmp.gt.f32.partialorder %v1318, %v1174
    %vm1320 = vcmp.gt.f32.partialorder %v1318, %v1180
    %vm1321 = vcmp.gt.f32.partialorder %v1318, %v1186
    %vm1322 = vcmp.gt.f32.partialorder %v1318, %v1192
    %v1323 = vsel %vm1319, 1, 0
    %v1324 = vsel %vm1320, 1, 0
    %v1325 = vsel %vm1321, 1, 0
    %v1326 = vsel %vm1322, 1, 0
    %v1327 = vcvt.s32.f32 %v1323
    %v1328 = vcvt.s32.f32 %v1324
    %v1329 = vcvt.s32.f32 %v1325
    %v1330 = vcvt.s32.f32 %v1326
    %v1331 = vadd.f32 %v1311, %v1327
    %v1332 = vadd.f32 %v1312, %v1328
    %v1333 = vadd.f32 %v1313, %v1329
    %v1334 = vadd.f32 %v1314, %v1330
    %v1335 = vlaneseq
    %v1336 = vshrl.u32 %v1335, 7
    %v1337 = vsub.s32 7, %v1336
    %v1338 = vrot.slane %v1174, %v1337
    %vm1339 = vcmp.gt.f32.partialorder %v1338, %v1174
    %vm1340 = vcmp.gt.f32.partialorder %v1338, %v1180
    %vm1341 = vcmp.gt.f32.partialorder %v1338, %v1186
    %vm1342 = vcmp.gt.f32.partialorder %v1338, %v1192
    %v1343 = vsel %vm1339, 1, 0
    %v1344 = vsel %vm1340, 1, 0
    %v1345 = vsel %vm1341, 1, 0
    %v1346 = vsel %vm1342, 1, 0
    %v1347 = vcvt.s32.f32 %v1343
    %v1348 = vcvt.s32.f32 %v1344
    %v1349 = vcvt.s32.f32 %v1345
    %v1350 = vcvt.s32.f32 %v1346
    %v1351 = vadd.f32 %v1331, %v1347
    %v1352 = vadd.f32 %v1332, %v1348
    %v1353 = vadd.f32 %v1333, %v1349
    %v1354 = vadd.f32 %v1334, %v1350
    %v1355 = vlaneseq
    %v1356 = vshrl.u32 %v1355, 7
    %v1357 = vsub.s32 0, %v1356
    %v1358 = vrot.slane %v1180, %v1357
    %vm1359 = vcmp.gt.f32.partialorder %v1358, %v1174
    %vm1360 = vcmp.gt.f32.partialorder %v1358, %v1180
    %vm1361 = vcmp.gt.f32.partialorder %v1358, %v1186
    %vm1362 = vcmp.gt.f32.partialorder %v1358, %v1192
    %v1363 = vsel %vm1359, 1, 0
    %v1364 = vsel %vm1360, 1, 0
    %v1365 = vsel %vm1361, 1, 0
    %v1366 = vsel %vm1362, 1, 0
    %v1367 = vcvt.s32.f32 %v1363
    %v1368 = vcvt.s32.f32 %v1364
    %v1369 = vcvt.s32.f32 %v1365
    %v1370 = vcvt.s32.f32 %v1366
    %v1371 = vadd.f32 %v1351, %v1367
    %v1372 = vadd.f32 %v1352, %v1368
    %v1373 = vadd.f32 %v1353, %v1369
    %v1374 = vadd.f32 %v1354, %v1370
    %v1375 = vlaneseq
    %v1376 = vshrl.u32 %v1375, 7
    %v1377 = vsub.s32 1, %v1376
    %v1378 = vrot.slane %v1180, %v1377
    %vm1379 = vcmp.gt.f32.partialorder %v1378, %v1174
    %vm1380 = vcmp.gt.f32.partialorder %v1378, %v1180
    %vm1381 = vcmp.gt.f32.partialorder %v1378, %v1186
    %vm1382 = vcmp.gt.f32.partialorder %v1378, %v1192
    %v1383 = vsel %vm1379, 1, 0
    %v1384 = vsel %vm1380, 1, 0
    %v1385 = vsel %vm1381, 1, 0
    %v1386 = vsel %vm1382, 1, 0
    %v1387 = vcvt.s32.f32 %v1383
    %v1388 = vcvt.s32.f32 %v1384
    %v1389 = vcvt.s32.f32 %v1385
    %v1390 = vcvt.s32.f32 %v1386
    %v1391 = vadd.f32 %v1371, %v1387
    %v1392 = vadd.f32 %v1372, %v1388
    %v1393 = vadd.f32 %v1373, %v1389
    %v1394 = vadd.f32 %v1374, %v1390
    %v1395 = vlaneseq
    %v1396 = vshrl.u32 %v1395, 7
    %v1397 = vsub.s32 2, %v1396
    %v1398 = vrot.slane %v1180, %v1397
    %vm1399 = vcmp.gt.f32.partialorder %v1398, %v1174
    %vm1400 = vcmp.gt.f32.partialorder %v1398, %v1180
    %vm1401 = vcmp.gt.f32.partialorder %v1398, %v1186
    %vm1402 = vcmp.gt.f32.partialorder %v1398, %v1192
    %v1403 = vsel %vm1399, 1, 0
    %v1404 = vsel %vm1400, 1, 0
    %v1405 = vsel %vm1401, 1, 0
    %v1406 = vsel %vm1402, 1, 0
    %v1407 = vcvt.s32.f32 %v1403
    %v1408 = vcvt.s32.f32 %v1404
    %v1409 = vcvt.s32.f32 %v1405
    %v1410 = vcvt.s32.f32 %v1406
    %v1411 = vadd.f32 %v1391, %v1407
    %v1412 = vadd.f32 %v1392, %v1408
    %v1413 = vadd.f32 %v1393, %v1409
    %v1414 = vadd.f32 %v1394, %v1410
    %v1415 = vlaneseq
    %v1416 = vshrl.u32 %v1415, 7
    %v1417 = vsub.s32 3, %v1416
    %v1418 = vrot.slane %v1180, %v1417
    %vm1419 = vcmp.gt.f32.partialorder %v1418, %v1174
    %vm1420 = vcmp.gt.f32.partialorder %v1418, %v1180
    %vm1421 = vcmp.gt.f32.partialorder %v1418, %v1186
    %vm1422 = vcmp.gt.f32.partialorder %v1418, %v1192
    %v1423 = vsel %vm1419, 1, 0
    %v1424 = vsel %vm1420, 1, 0
    %v1425 = vsel %vm1421, 1, 0
    %v1426 = vsel %vm1422, 1, 0
    %v1427 = vcvt.s32.f32 %v1423
    %v1428 = vcvt.s32.f32 %v1424
    %v1429 = vcvt.s32.f32 %v1425
    %v1430 = vcvt.s32.f32 %v1426
    %v1431 = vadd.f32 %v1411, %v1427
    %v1432 = vadd.f32 %v1412, %v1428
    %v1433 = vadd.f32 %v1413, %v1429
    %v1434 = vadd.f32 %v1414, %v1430
    %v1435 = vlaneseq
    %v1436 = vshrl.u32 %v1435, 7
    %v1437 = vsub.s32 4, %v1436
    %v1438 = vrot.slane %v1180, %v1437
    %vm1439 = vcmp.gt.f32.partialorder %v1438, %v1174
    %vm1440 = vcmp.gt.f32.partialorder %v1438, %v1180
    %vm1441 = vcmp.gt.f32.partialorder %v1438, %v1186
    %vm1442 = vcmp.gt.f32.partialorder %v1438, %v1192
    %v1443 = vsel %vm1439, 1, 0
    %v1444 = vsel %vm1440, 1, 0
    %v1445 = vsel %vm1441, 1, 0
    %v1446 = vsel %vm1442, 1, 0
    %v1447 = vcvt.s32.f32 %v1443
    %v1448 = vcvt.s32.f32 %v1444
    %v1449 = vcvt.s32.f32 %v1445
    %v1450 = vcvt.s32.f32 %v1446
    %v1451 = vadd.f32 %v1431, %v1447
    %v1452 = vadd.f32 %v1432, %v1448
    %v1453 = vadd.f32 %v1433, %v1449
    %v1454 = vadd.f32 %v1434, %v1450
    %v1455 = vlaneseq
    %v1456 = vshrl.u32 %v1455, 7
    %v1457 = vsub.s32 5, %v1456
    %v1458 = vrot.slane %v1180, %v1457
    %vm1459 = vcmp.gt.f32.partialorder %v1458, %v1174
    %vm1460 = vcmp.gt.f32.partialorder %v1458, %v1180
    %vm1461 = vcmp.gt.f32.partialorder %v1458, %v1186
    %vm1462 = vcmp.gt.f32.partialorder %v1458, %v1192
    %v1463 = vsel %vm1459, 1, 0
    %v1464 = vsel %vm1460, 1, 0
    %v1465 = vsel %vm1461, 1, 0
    %v1466 = vsel %vm1462, 1, 0
    %v1467 = vcvt.s32.f32 %v1463
    %v1468 = vcvt.s32.f32 %v1464
    %v1469 = vcvt.s32.f32 %v1465
    %v1470 = vcvt.s32.f32 %v1466
    %v1471 = vadd.f32 %v1451, %v1467
    %v1472 = vadd.f32 %v1452, %v1468
    %v1473 = vadd.f32 %v1453, %v1469
    %v1474 = vadd.f32 %v1454, %v1470
    %v1475 = vlaneseq
    %v1476 = vshrl.u32 %v1475, 7
    %v1477 = vsub.s32 6, %v1476
    %v1478 = vrot.slane %v1180, %v1477
    %vm1479 = vcmp.gt.f32.partialorder %v1478, %v1174
    %vm1480 = vcmp.gt.f32.partialorder %v1478, %v1180
    %vm1481 = vcmp.gt.f32.partialorder %v1478, %v1186
    %vm1482 = vcmp.gt.f32.partialorder %v1478, %v1192
    %v1483 = vsel %vm1479, 1, 0
    %v1484 = vsel %vm1480, 1, 0
    %v1485 = vsel %vm1481, 1, 0
    %v1486 = vsel %vm1482, 1, 0
    %v1487 = vcvt.s32.f32 %v1483
    %v1488 = vcvt.s32.f32 %v1484
    %v1489 = vcvt.s32.f32 %v1485
    %v1490 = vcvt.s32.f32 %v1486
    %v1491 = vadd.f32 %v1471, %v1487
    %v1492 = vadd.f32 %v1472, %v1488
    %v1493 = vadd.f32 %v1473, %v1489
    %v1494 = vadd.f32 %v1474, %v1490
    %v1495 = vlaneseq
    %v1496 = vshrl.u32 %v1495, 7
    %v1497 = vsub.s32 7, %v1496
    %v1498 = vrot.slane %v1180, %v1497
    %vm1499 = vcmp.gt.f32.partialorder %v1498, %v1174
    %vm1500 = vcmp.gt.f32.partialorder %v1498, %v1180
    %vm1501 = vcmp.gt.f32.partialorder %v1498, %v1186
    %vm1502 = vcmp.gt.f32.partialorder %v1498, %v1192
    %v1503 = vsel %vm1499, 1, 0
    %v1504 = vsel %vm1500, 1, 0
    %v1505 = vsel %vm1501, 1, 0
    %v1506 = vsel %vm1502, 1, 0
    %v1507 = vcvt.s32.f32 %v1503
    %v1508 = vcvt.s32.f32 %v1504
    %v1509 = vcvt.s32.f32 %v1505
    %v1510 = vcvt.s32.f32 %v1506
    %v1511 = vadd.f32 %v1491, %v1507
    %v1512 = vadd.f32 %v1492, %v1508
    %v1513 = vadd.f32 %v1493, %v1509
    %v1514 = vadd.f32 %v1494, %v1510
    %v1515 = vlaneseq
    %v1516 = vshrl.u32 %v1515, 7
    %v1517 = vsub.s32 0, %v1516
    %v1518 = vrot.slane %v1186, %v1517
    %vm1519 = vcmp.gt.f32.partialorder %v1518, %v1174
    %vm1520 = vcmp.gt.f32.partialorder %v1518, %v1180
    %vm1521 = vcmp.gt.f32.partialorder %v1518, %v1186
    %vm1522 = vcmp.gt.f32.partialorder %v1518, %v1192
    %v1523 = vsel %vm1519, 1, 0
    %v1524 = vsel %vm1520, 1, 0
    %v1525 = vsel %vm1521, 1, 0
    %v1526 = vsel %vm1522, 1, 0
    %v1527 = vcvt.s32.f32 %v1523
    %v1528 = vcvt.s32.f32 %v1524
    %v1529 = vcvt.s32.f32 %v1525
    %v1530 = vcvt.s32.f32 %v1526
    %v1531 = vadd.f32 %v1511, %v1527
    %v1532 = vadd.f32 %v1512, %v1528
    %v1533 = vadd.f32 %v1513, %v1529
    %v1534 = vadd.f32 %v1514, %v1530
    %v1535 = vlaneseq
    %v1536 = vshrl.u32 %v1535, 7
    %v1537 = vsub.s32 1, %v1536
    %v1538 = vrot.slane %v1186, %v1537
    %vm1539 = vcmp.gt.f32.partialorder %v1538, %v1174
    %vm1540 = vcmp.gt.f32.partialorder %v1538, %v1180
    %vm1541 = vcmp.gt.f32.partialorder %v1538, %v1186
    %vm1542 = vcmp.gt.f32.partialorder %v1538, %v1192
    %v1543 = vsel %vm1539, 1, 0
    %v1544 = vsel %vm1540, 1, 0
    %v1545 = vsel %vm1541, 1, 0
    %v1546 = vsel %vm1542, 1, 0
    %v1547 = vcvt.s32.f32 %v1543
    %v1548 = vcvt.s32.f32 %v1544
    %v1549 = vcvt.s32.f32 %v1545
    %v1550 = vcvt.s32.f32 %v1546
    %v1551 = vadd.f32 %v1531, %v1547
    %v1552 = vadd.f32 %v1532, %v1548
    %v1553 = vadd.f32 %v1533, %v1549
    %v1554 = vadd.f32 %v1534, %v1550
    %v1555 = vlaneseq
    %v1556 = vshrl.u32 %v1555, 7
    %v1557 = vsub.s32 2, %v1556
    %v1558 = vrot.slane %v1186, %v1557
    %vm1559 = vcmp.gt.f32.partialorder %v1558, %v1174
    %vm1560 = vcmp.gt.f32.partialorder %v1558, %v1180
    %vm1561 = vcmp.gt.f32.partialorder %v1558, %v1186
    %vm1562 = vcmp.gt.f32.partialorder %v1558, %v1192
    %v1563 = vsel %vm1559, 1, 0
    %v1564 = vsel %vm1560, 1, 0
    %v1565 = vsel %vm1561, 1, 0
    %v1566 = vsel %vm1562, 1, 0
    %v1567 = vcvt.s32.f32 %v1563
    %v1568 = vcvt.s32.f32 %v1564
    %v1569 = vcvt.s32.f32 %v1565
    %v1570 = vcvt.s32.f32 %v1566
    %v1571 = vadd.f32 %v1551, %v1567
    %v1572 = vadd.f32 %v1552, %v1568
    %v1573 = vadd.f32 %v1553, %v1569
    %v1574 = vadd.f32 %v1554, %v1570
    %v1575 = vlaneseq
    %v1576 = vshrl.u32 %v1575, 7
    %v1577 = vsub.s32 3, %v1576
    %v1578 = vrot.slane %v1186, %v1577
    %vm1579 = vcmp.gt.f32.partialorder %v1578, %v1174
    %vm1580 = vcmp.gt.f32.partialorder %v1578, %v1180
    %vm1581 = vcmp.gt.f32.partialorder %v1578, %v1186
    %vm1582 = vcmp.gt.f32.partialorder %v1578, %v1192
    %v1583 = vsel %vm1579, 1, 0
    %v1584 = vsel %vm1580, 1, 0
    %v1585 = vsel %vm1581, 1, 0
    %v1586 = vsel %vm1582, 1, 0
    %v1587 = vcvt.s32.f32 %v1583
    %v1588 = vcvt.s32.f32 %v1584
    %v1589 = vcvt.s32.f32 %v1585
    %v1590 = vcvt.s32.f32 %v1586
    %v1591 = vadd.f32 %v1571, %v1587
    %v1592 = vadd.f32 %v1572, %v1588
    %v1593 = vadd.f32 %v1573, %v1589
    %v1594 = vadd.f32 %v1574, %v1590
    %v1595 = vlaneseq
    %v1596 = vshrl.u32 %v1595, 7
    %v1597 = vsub.s32 4, %v1596
    %v1598 = vrot.slane %v1186, %v1597
    %vm1599 = vcmp.gt.f32.partialorder %v1598, %v1174
    %vm1600 = vcmp.gt.f32.partialorder %v1598, %v1180
    %vm1601 = vcmp.gt.f32.partialorder %v1598, %v1186
    %vm1602 = vcmp.gt.f32.partialorder %v1598, %v1192
    %v1603 = vsel %vm1599, 1, 0
    %v1604 = vsel %vm1600, 1, 0
    %v1605 = vsel %vm1601, 1, 0
    %v1606 = vsel %vm1602, 1, 0
    %v1607 = vcvt.s32.f32 %v1603
    %v1608 = vcvt.s32.f32 %v1604
    %v1609 = vcvt.s32.f32 %v1605
    %v1610 = vcvt.s32.f32 %v1606
    %v1611 = vadd.f32 %v1591, %v1607
    %v1612 = vadd.f32 %v1592, %v1608
    %v1613 = vadd.f32 %v1593, %v1609
    %v1614 = vadd.f32 %v1594, %v1610
    %v1615 = vlaneseq
    %v1616 = vshrl.u32 %v1615, 7
    %v1617 = vsub.s32 5, %v1616
    %v1618 = vrot.slane %v1186, %v1617
    %vm1619 = vcmp.gt.f32.partialorder %v1618, %v1174
    %vm1620 = vcmp.gt.f32.partialorder %v1618, %v1180
    %vm1621 = vcmp.gt.f32.partialorder %v1618, %v1186
    %vm1622 = vcmp.gt.f32.partialorder %v1618, %v1192
    %v1623 = vsel %vm1619, 1, 0
    %v1624 = vsel %vm1620, 1, 0
    %v1625 = vsel %vm1621, 1, 0
    %v1626 = vsel %vm1622, 1, 0
    %v1627 = vcvt.s32.f32 %v1623
    %v1628 = vcvt.s32.f32 %v1624
    %v1629 = vcvt.s32.f32 %v1625
    %v1630 = vcvt.s32.f32 %v1626
    %v1631 = vadd.f32 %v1611, %v1627
    %v1632 = vadd.f32 %v1612, %v1628
    %v1633 = vadd.f32 %v1613, %v1629
    %v1634 = vadd.f32 %v1614, %v1630
    %v1635 = vlaneseq
    %v1636 = vshrl.u32 %v1635, 7
    %v1637 = vsub.s32 6, %v1636
    %v1638 = vrot.slane %v1186, %v1637
    %vm1639 = vcmp.gt.f32.partialorder %v1638, %v1174
    %vm1640 = vcmp.gt.f32.partialorder %v1638, %v1180
    %vm1641 = vcmp.gt.f32.partialorder %v1638, %v1186
    %vm1642 = vcmp.gt.f32.partialorder %v1638, %v1192
    %v1643 = vsel %vm1639, 1, 0
    %v1644 = vsel %vm1640, 1, 0
    %v1645 = vsel %vm1641, 1, 0
    %v1646 = vsel %vm1642, 1, 0
    %v1647 = vcvt.s32.f32 %v1643
    %v1648 = vcvt.s32.f32 %v1644
    %v1649 = vcvt.s32.f32 %v1645
    %v1650 = vcvt.s32.f32 %v1646
    %v1651 = vadd.f32 %v1631, %v1647
    %v1652 = vadd.f32 %v1632, %v1648
    %v1653 = vadd.f32 %v1633, %v1649
    %v1654 = vadd.f32 %v1634, %v1650
    %v1655 = vlaneseq
    %v1656 = vshrl.u32 %v1655, 7
    %v1657 = vsub.s32 7, %v1656
    %v1658 = vrot.slane %v1186, %v1657
    %vm1659 = vcmp.gt.f32.partialorder %v1658, %v1174
    %vm1660 = vcmp.gt.f32.partialorder %v1658, %v1180
    %vm1661 = vcmp.gt.f32.partialorder %v1658, %v1186
    %vm1662 = vcmp.gt.f32.partialorder %v1658, %v1192
    %v1663 = vsel %vm1659, 1, 0
    %v1664 = vsel %vm1660, 1, 0
    %v1665 = vsel %vm1661, 1, 0
    %v1666 = vsel %vm1662, 1, 0
    %v1667 = vcvt.s32.f32 %v1663
    %v1668 = vcvt.s32.f32 %v1664
    %v1669 = vcvt.s32.f32 %v1665
    %v1670 = vcvt.s32.f32 %v1666
    %v1671 = vadd.f32 %v1651, %v1667
    %v1672 = vadd.f32 %v1652, %v1668
    %v1673 = vadd.f32 %v1653, %v1669
    %v1674 = vadd.f32 %v1654, %v1670
    %v1675 = vlaneseq
    %v1676 = vshrl.u32 %v1675, 7
    %v1677 = vsub.s32 0, %v1676
    %v1678 = vrot.slane %v1192, %v1677
    %vm1679 = vcmp.gt.f32.partialorder %v1678, %v1174
    %vm1680 = vcmp.gt.f32.partialorder %v1678, %v1180
    %vm1681 = vcmp.gt.f32.partialorder %v1678, %v1186
    %vm1682 = vcmp.gt.f32.partialorder %v1678, %v1192
    %v1683 = vsel %vm1679, 1, 0
    %v1684 = vsel %vm1680, 1, 0
    %v1685 = vsel %vm1681, 1, 0
    %v1686 = vsel %vm1682, 1, 0
    %v1687 = vcvt.s32.f32 %v1683
    %v1688 = vcvt.s32.f32 %v1684
    %v1689 = vcvt.s32.f32 %v1685
    %v1690 = vcvt.s32.f32 %v1686
    %v1691 = vadd.f32 %v1671, %v1687
    %v1692 = vadd.f32 %v1672, %v1688
    %v1693 = vadd.f32 %v1673, %v1689
    %v1694 = vadd.f32 %v1674, %v1690
    %v1695 = vlaneseq
    %v1696 = vshrl.u32 %v1695, 7
    %v1697 = vsub.s32 1, %v1696
    %v1698 = vrot.slane %v1192, %v1697
    %vm1699 = vcmp.gt.f32.partialorder %v1698, %v1174
    %vm1700 = vcmp.gt.f32.partialorder %v1698, %v1180
    %vm1701 = vcmp.gt.f32.partialorder %v1698, %v1186
    %vm1702 = vcmp.gt.f32.partialorder %v1698, %v1192
    %v1703 = vsel %vm1699, 1, 0
    %v1704 = vsel %vm1700, 1, 0
    %v1705 = vsel %vm1701, 1, 0
    %v1706 = vsel %vm1702, 1, 0
    %v1707 = vcvt.s32.f32 %v1703
    %v1708 = vcvt.s32.f32 %v1704
    %v1709 = vcvt.s32.f32 %v1705
    %v1710 = vcvt.s32.f32 %v1706
    %v1711 = vadd.f32 %v1691, %v1707
    %v1712 = vadd.f32 %v1692, %v1708
    %v1713 = vadd.f32 %v1693, %v1709
    %v1714 = vadd.f32 %v1694, %v1710
    %v1715 = vlaneseq
    %v1716 = vshrl.u32 %v1715, 7
    %v1717 = vsub.s32 2, %v1716
    %v1718 = vrot.slane %v1192, %v1717
    %vm1719 = vcmp.gt.f32.partialorder %v1718, %v1174
    %vm1720 = vcmp.gt.f32.partialorder %v1718, %v1180
    %vm1721 = vcmp.gt.f32.partialorder %v1718, %v1186
    %vm1722 = vcmp.gt.f32.partialorder %v1718, %v1192
    %v1723 = vsel %vm1719, 1, 0
    %v1724 = vsel %vm1720, 1, 0
    %v1725 = vsel %vm1721, 1, 0
    %v1726 = vsel %vm1722, 1, 0
    %v1727 = vcvt.s32.f32 %v1723
    %v1728 = vcvt.s32.f32 %v1724
    %v1729 = vcvt.s32.f32 %v1725
    %v1730 = vcvt.s32.f32 %v1726
    %v1731 = vadd.f32 %v1711, %v1727
    %v1732 = vadd.f32 %v1712, %v1728
    %v1733 = vadd.f32 %v1713, %v1729
    %v1734 = vadd.f32 %v1714, %v1730
    %v1735 = vlaneseq
    %v1736 = vshrl.u32 %v1735, 7
    %v1737 = vsub.s32 3, %v1736
    %v1738 = vrot.slane %v1192, %v1737
    %vm1739 = vcmp.gt.f32.partialorder %v1738, %v1174
    %vm1740 = vcmp.gt.f32.partialorder %v1738, %v1180
    %vm1741 = vcmp.gt.f32.partialorder %v1738, %v1186
    %vm1742 = vcmp.gt.f32.partialorder %v1738, %v1192
    %v1743 = vsel %vm1739, 1, 0
    %v1744 = vsel %vm1740, 1, 0
    %v1745 = vsel %vm1741, 1, 0
    %v1746 = vsel %vm1742, 1, 0
    %v1747 = vcvt.s32.f32 %v1743
    %v1748 = vcvt.s32.f32 %v1744
    %v1749 = vcvt.s32.f32 %v1745
    %v1750 = vcvt.s32.f32 %v1746
    %v1751 = vadd.f32 %v1731, %v1747
    %v1752 = vadd.f32 %v1732, %v1748
    %v1753 = vadd.f32 %v1733, %v1749
    %v1754 = vadd.f32 %v1734, %v1750
    %v1755 = vlaneseq
    %v1756 = vshrl.u32 %v1755, 7
    %v1757 = vsub.s32 4, %v1756
    %v1758 = vrot.slane %v1192, %v1757
    %vm1759 = vcmp.gt.f32.partialorder %v1758, %v1174
    %vm1760 = vcmp.gt.f32.partialorder %v1758, %v1180
    %vm1761 = vcmp.gt.f32.partialorder %v1758, %v1186
    %vm1762 = vcmp.gt.f32.partialorder %v1758, %v1192
    %v1763 = vsel %vm1759, 1, 0
    %v1764 = vsel %vm1760, 1, 0
    %v1765 = vsel %vm1761, 1, 0
    %v1766 = vsel %vm1762, 1, 0
    %v1767 = vcvt.s32.f32 %v1763
    %v1768 = vcvt.s32.f32 %v1764
    %v1769 = vcvt.s32.f32 %v1765
    %v1770 = vcvt.s32.f32 %v1766
    %v1771 = vadd.f32 %v1751, %v1767
    %v1772 = vadd.f32 %v1752, %v1768
    %v1773 = vadd.f32 %v1753, %v1769
    %v1774 = vadd.f32 %v1754, %v1770
    %v1775 = vlaneseq
    %v1776 = vshrl.u32 %v1775, 7
    %v1777 = vsub.s32 5, %v1776
    %v1778 = vrot.slane %v1192, %v1777
    %vm1779 = vcmp.gt.f32.partialorder %v1778, %v1174
    %vm1780 = vcmp.gt.f32.partialorder %v1778, %v1180
    %vm1781 = vcmp.gt.f32.partialorder %v1778, %v1186
    %vm1782 = vcmp.gt.f32.partialorder %v1778, %v1192
    %v1783 = vsel %vm1779, 1, 0
    %v1784 = vsel %vm1780, 1, 0
    %v1785 = vsel %vm1781, 1, 0
    %v1786 = vsel %vm1782, 1, 0
    %v1787 = vcvt.s32.f32 %v1783
    %v1788 = vcvt.s32.f32 %v1784
    %v1789 = vcvt.s32.f32 %v1785
    %v1790 = vcvt.s32.f32 %v1786
    %v1791 = vadd.f32 %v1771, %v1787
    %v1792 = vadd.f32 %v1772, %v1788
    %v1793 = vadd.f32 %v1773, %v1789
    %v1794 = vadd.f32 %v1774, %v1790
    %v1795 = vlaneseq
    %v1796 = vshrl.u32 %v1795, 7
    %v1797 = vsub.s32 6, %v1796
    %v1798 = vrot.slane %v1192, %v1797
    %vm1799 = vcmp.gt.f32.partialorder %v1798, %v1174
    %vm1800 = vcmp.gt.f32.partialorder %v1798, %v1180
    %vm1801 = vcmp.gt.f32.partialorder %v1798, %v1186
    %vm1802 = vcmp.gt.f32.partialorder %v1798, %v1192
    %v1803 = vsel %vm1799, 1, 0
    %v1804 = vsel %vm1800, 1, 0
    %v1805 = vsel %vm1801, 1, 0
    %v1806 = vsel %vm1802, 1, 0
    %v1807 = vcvt.s32.f32 %v1803
    %v1808 = vcvt.s32.f32 %v1804
    %v1809 = vcvt.s32.f32 %v1805
    %v1810 = vcvt.s32.f32 %v1806
    %v1811 = vadd.f32 %v1791, %v1807
    %v1812 = vadd.f32 %v1792, %v1808
    %v1813 = vadd.f32 %v1793, %v1809
    %v1814 = vadd.f32 %v1794, %v1810
    %v1815 = vlaneseq
    %v1816 = vshrl.u32 %v1815, 7
    %v1817 = vsub.s32 7, %v1816
    %v1818 = vrot.slane %v1192, %v1817
    %vm1819 = vcmp.gt.f32.partialorder %v1818, %v1174
    %vm1820 = vcmp.gt.f32.partialorder %v1818, %v1180
    %vm1821 = vcmp.gt.f32.partialorder %v1818, %v1186
    %vm1822 = vcmp.gt.f32.partialorder %v1818, %v1192
    %v1823 = vsel %vm1819, 1, 0
    %v1824 = vsel %vm1820, 1, 0
    %v1825 = vsel %vm1821, 1, 0
    %v1826 = vsel %vm1822, 1, 0
    %v1827 = vcvt.s32.f32 %v1823
    %v1828 = vcvt.s32.f32 %v1824
    %v1829 = vcvt.s32.f32 %v1825
    %v1830 = vcvt.s32.f32 %v1826
    %v1831 = vadd.f32 %v1811, %v1827
    %v1832 = vadd.f32 %v1812, %v1828
    %v1833 = vadd.f32 %v1813, %v1829
    %v1834 = vadd.f32 %v1814, %v1830
    %vm1835 = vcmp.lt.f32.partialorder %v1831, 19.0
    %vm1836 = vcmp.lt.f32.partialorder %v1832, 19.0
    %vm1837 = vcmp.lt.f32.partialorder %v1833, 19.0
    %vm1838 = vcmp.lt.f32.partialorder %v1834, 19.0
    %v1839 = vsel %vm1835, %v1174, 0.0
    %v1840 = vsel %vm1836, %v1180, 0.0
    %v1841 = vsel %vm1837, %v1186, 0.0
    %v1842 = vsel %vm1838, %v1192, 0.0
    %1843 = vst [vmem:[#allocation9] sm:$0xff] %v1839
    %1844 = vst [vmem:[#allocation9 + $0x8] sm:$0xff] %v1840
    %1845 = vst [vmem:[#allocation9 + $0x10] sm:$0xff] %v1841
    %1846 = vst [vmem:[#allocation9 + $0x18] sm:$0xff] %v1842
    %1848 = vset.pattern.permute.xlu0 0
    %1849 = vperm.xlu0 %1848, %v78
    %v1850 = vpop.permute.xlu0 %1849
    %vm1852 = vcmask 261120
    %v1854 = vsel %vm1852, %v77, 0
    %1856 = vmatprep.subr.mxu0 0.0
    %v1857 = vand.u32 %v1839, 4294901760
    %1858 = vmatpush1.msra.mxu0 %v1857
    %1859 = vmatprep.subr.mxu0 0.0
    %v1860 = vand.u32 %v1840, 4294901760
    %1861 = vmatpush1.msra.mxu0 %v1860
    %1862 = vmatprep.subr.mxu0 0.0
    %v1863 = vand.u32 %v1841, 4294901760
    %1864 = vmatpush1.msra.mxu0 %v1863
    %1865 = vmatprep.subr.mxu0 0.0
    %v1866 = vand.u32 %v1842, 4294901760
    %1867 = vmatpush1.msra.mxu0 %v1866
    %1868 = vmatprep.subr.mxu0 0.0
    %1869 = vmatpush1.msra.mxu0 0.0
    %1870 = vmatprep.subr.mxu0 0.0
    %1871 = vmatpush1.msra.mxu0 0.0
    %1872 = vmatprep.subr.mxu0 0.0
    %1873 = vmatpush1.msra.mxu0 0.0
    %1874 = vmatprep.subr.mxu0 0.0
    %1875 = vmatpush1.msra.mxu0 0.0
    %1876 = vmatprep.subr.mxu0 0.0
    %1877 = vmatpush1.msra.mxu0 0.0
    %1878 = vmatprep.subr.mxu0 0.0
    %1879 = vmatpush1.msra.mxu0 0.0
    %1880 = vmatprep.subr.mxu0 0.0
    %1881 = vmatpush1.msra.mxu0 0.0
    %1882 = vmatprep.subr.mxu0 0.0
    %1883 = vmatpush1.msra.mxu0 0.0
    %1884 = vmatprep.subr.mxu0 0.0
    %1885 = vmatpush1.msra.mxu0 0.0
    %1886 = vmatprep.subr.mxu0 0.0
    %1887 = vmatpush1.msra.mxu0 0.0
    %1888 = vmatprep.subr.mxu0 0.0
    %1889 = vmatpush1.msra.mxu0 0.0
    %1890 = vmatprep.subr.mxu0 0.0
    %1891 = vmatpush1.msra.mxu0 0.0
    %1892 = vmatprep.subr.mxu0 0.0
    %1893 = vmatpush1.msra.mxu0 0.0
    %1894 = vmatprep.subr.mxu0 0.0
    %1895 = vmatpush1.msra.mxu0 0.0
    %1896 = vmatprep.subr.mxu0 0.0
    %1897 = vmatpush1.msra.mxu0 0.0
    %1898 = vmatprep.subr.mxu0 0.0
    %1899 = vmatpush1.msra.mxu0 0.0
    %1900 = vmatprep.subr.mxu0 0.0
    %1901 = vmatpush1.msra.mxu0 0.0
    %1902 = vmatprep.subr.mxu0 0.0
    %1903 = vmatpush1.msra.mxu0 0.0
    %1904 = vmatprep.subr.mxu0 0.0
    %1905 = vmatpush1.msra.mxu0 0.0
    %1906 = vmatprep.subr.mxu0 0.0
    %1907 = vmatpush1.msra.mxu0 0.0
    %1908 = vmatprep.subr.mxu0 0.0
    %1909 = vmatpush1.msra.mxu0 0.0
    %1910 = vmatprep.subr.mxu0 0.0
    %1911 = vmatpush1.msra.mxu0 0.0
    %1912 = vmatprep.subr.mxu0 0.0
    %1913 = vmatpush1.msra.mxu0 0.0
    %1914 = vmatprep.subr.mxu0 0.0
    %1915 = vmatpush1.msra.mxu0 0.0
    %1916 = vmatprep.subr.mxu0 0.0
    %1917 = vmatpush1.msra.mxu0 0.0
    %1918 = vmatprep.subr.mxu0 0.0
    %1919 = vmatpush1.msra.mxu0 0.0
    %1920 = vmatprep.subr.mxu0 0.0
    %1921 = vmatpush1.msra.mxu0 0.0
    %1922 = vmatprep.subr.mxu0 0.0
    %1923 = vmatpush1.msra.mxu0 0.0
    %1924 = vmatprep.mubr.f32.mxu0 0.0
    %v1925 = vand.u32 %v1854, 4294901760
    %v1926 = vsub.f32 %v1854, %v1925
    %v1927 = vand.u32 %v1926, 4294901760
    %v1928 = vsub.f32 %v1926, %v1927
    %v1929 = vand.u32 %v1928, 4294901760
    %1930 = vmatmul.mubr.f32.gmra.mrb[0].mxu0 %v1929
    %v1931 = vpop.f32.mrb[0].mxu0
    %v1932 = vadd.f32 %v1850, %v1931
    %v1933 = vpop.f32.mrb[0].mxu0
    %1934 = vdwg.mxu0
    %1935 = vmatprep.subr.mxu0 0.0
    %v1936 = vand.u32 %v1839, 4294901760
    %v1937 = vsub.f32 %v1839, %v1936
    %v1938 = vand.u32 %v1937, 4294901760
    %v1939 = vsub.f32 %v1937, %v1938
    %v1940 = vand.u32 %v1939, 4294901760
    %1941 = vmatpush1.msra.mxu0 %v1940
    %1942 = vmatprep.subr.mxu0 0.0
    %v1943 = vand.u32 %v1840, 4294901760
    %v1944 = vsub.f32 %v1840, %v1943
    %v1945 = vand.u32 %v1944, 4294901760
    %v1946 = vsub.f32 %v1944, %v1945
    %v1947 = vand.u32 %v1946, 4294901760
    %1948 = vmatpush1.msra.mxu0 %v1947
    %1949 = vmatprep.subr.mxu0 0.0
    %v1950 = vand.u32 %v1841, 4294901760
    %v1951 = vsub.f32 %v1841, %v1950
    %v1952 = vand.u32 %v1951, 4294901760
    %v1953 = vsub.f32 %v1951, %v1952
    %v1954 = vand.u32 %v1953, 4294901760
    %1955 = vmatpush1.msra.mxu0 %v1954
    %1956 = vmatprep.subr.mxu0 0.0
    %v1957 = vand.u32 %v1842, 4294901760
    %v1958 = vsub.f32 %v1842, %v1957
    %v1959 = vand.u32 %v1958, 4294901760
    %v1960 = vsub.f32 %v1958, %v1959
    %v1961 = vand.u32 %v1960, 4294901760
    %1962 = vmatpush1.msra.mxu0 %v1961
    %1963 = vmatprep.subr.mxu0 0.0
    %1964 = vmatpush1.msra.mxu0 0.0
    %1965 = vmatprep.subr.mxu0 0.0
    %1966 = vmatpush1.msra.mxu0 0.0
    %1967 = vmatprep.subr.mxu0 0.0
    %1968 = vmatpush1.msra.mxu0 0.0
    %1969 = vmatprep.subr.mxu0 0.0
    %1970 = vmatpush1.msra.mxu0 0.0
    %1971 = vmatprep.subr.mxu0 0.0
    %1972 = vmatpush1.msra.mxu0 0.0
    %1973 = vmatprep.subr.mxu0 0.0
    %1974 = vmatpush1.msra.mxu0 0.0
    %1975 = vmatprep.subr.mxu0 0.0
    %1976 = vmatpush1.msra.mxu0 0.0
    %1977 = vmatprep.subr.mxu0 0.0
    %1978 = vmatpush1.msra.mxu0 0.0
    %1979 = vmatprep.subr.mxu0 0.0
    %1980 = vmatpush1.msra.mxu0 0.0
    %1981 = vmatprep.subr.mxu0 0.0
    %1982 = vmatpush1.msra.mxu0 0.0
    %1983 = vmatprep.subr.mxu0 0.0
    %1984 = vmatpush1.msra.mxu0 0.0
    %1985 = vmatprep.subr.mxu0 0.0
    %1986 = vmatpush1.msra.mxu0 0.0
    %1987 = vmatprep.subr.mxu0 0.0
    %1988 = vmatpush1.msra.mxu0 0.0
    %1989 = vmatprep.subr.mxu0 0.0
    %1990 = vmatpush1.msra.mxu0 0.0
    %1991 = vmatprep.subr.mxu0 0.0
    %1992 = vmatpush1.msra.mxu0 0.0
    %1993 = vmatprep.subr.mxu0 0.0
    %1994 = vmatpush1.msra.mxu0 0.0
    %1995 = vmatprep.subr.mxu0 0.0
    %1996 = vmatpush1.msra.mxu0 0.0
    %1997 = vmatprep.subr.mxu0 0.0
    %1998 = vmatpush1.msra.mxu0 0.0
    %1999 = vmatprep.subr.mxu0 0.0
    %2000 = vmatpush1.msra.mxu0 0.0
    %2001 = vmatprep.subr.mxu0 0.0
    %2002 = vmatpush1.msra.mxu0 0.0
    %2003 = vmatprep.subr.mxu0 0.0
    %2004 = vmatpush1.msra.mxu0 0.0
    %2005 = vmatprep.subr.mxu0 0.0
    %2006 = vmatpush1.msra.mxu0 0.0
    %2007 = vmatprep.subr.mxu0 0.0
    %2008 = vmatpush1.msra.mxu0 0.0
    %2009 = vmatprep.subr.mxu0 0.0
    %2010 = vmatpush1.msra.mxu0 0.0
    %2011 = vmatprep.subr.mxu0 0.0
    %2012 = vmatpush1.msra.mxu0 0.0
    %2013 = vmatprep.subr.mxu0 0.0
    %2014 = vmatpush1.msra.mxu0 0.0
    %2015 = vmatprep.subr.mxu0 0.0
    %2016 = vmatpush1.msra.mxu0 0.0
    %2017 = vmatprep.subr.mxu0 0.0
    %2018 = vmatpush1.msra.mxu0 0.0
    %2019 = vmatprep.mubr.f32.mxu0 0.0
    %v2020 = vand.u32 %v1854, 4294901760
    %2021 = vmatmul.mubr.f32.gmra.mrb[0].mxu0 %v2020
    %v2022 = vpop.f32.mrb[0].mxu0
    %v2023 = vadd.f32 %v1932, %v2022
    %v2024 = vpop.f32.mrb[0].mxu0
    %2025 = vdwg.mxu0
    %2026 = vmatprep.subr.mxu0 0.0
    %v2027 = vand.u32 %v1839, 4294901760
    %v2028 = vsub.f32 %v1839, %v2027
    %2029 = vmatpush1.msra.mxu0 %v2028
    %2030 = vmatprep.subr.mxu0 0.0
    %v2031 = vand.u32 %v1840, 4294901760
    %v2032 = vsub.f32 %v1840, %v2031
    %2033 = vmatpush1.msra.mxu0 %v2032
    %2034 = vmatprep.subr.mxu0 0.0
    %v2035 = vand.u32 %v1841, 4294901760
    %v2036 = vsub.f32 %v1841, %v2035
    %2037 = vmatpush1.msra.mxu0 %v2036
    %2038 = vmatprep.subr.mxu0 0.0
    %v2039 = vand.u32 %v1842, 4294901760
    %v2040 = vsub.f32 %v1842, %v2039
    %2041 = vmatpush1.msra.mxu0 %v2040
    %2042 = vmatprep.subr.mxu0 0.0
    %2043 = vmatpush1.msra.mxu0 0.0
    %2044 = vmatprep.subr.mxu0 0.0
    %2045 = vmatpush1.msra.mxu0 0.0
    %2046 = vmatprep.subr.mxu0 0.0
    %2047 = vmatpush1.msra.mxu0 0.0
    %2048 = vmatprep.subr.mxu0 0.0
    %2049 = vmatpush1.msra.mxu0 0.0
    %2050 = vmatprep.subr.mxu0 0.0
    %2051 = vmatpush1.msra.mxu0 0.0
    %2052 = vmatprep.subr.mxu0 0.0
    %2053 = vmatpush1.msra.mxu0 0.0
    %2054 = vmatprep.subr.mxu0 0.0
    %2055 = vmatpush1.msra.mxu0 0.0
    %2056 = vmatprep.subr.mxu0 0.0
    %2057 = vmatpush1.msra.mxu0 0.0
    %2058 = vmatprep.subr.mxu0 0.0
    %2059 = vmatpush1.msra.mxu0 0.0
    %2060 = vmatprep.subr.mxu0 0.0
    %2061 = vmatpush1.msra.mxu0 0.0
    %2062 = vmatprep.subr.mxu0 0.0
    %2063 = vmatpush1.msra.mxu0 0.0
    %2064 = vmatprep.subr.mxu0 0.0
    %2065 = vmatpush1.msra.mxu0 0.0
    %2066 = vmatprep.subr.mxu0 0.0
    %2067 = vmatpush1.msra.mxu0 0.0
    %2068 = vmatprep.subr.mxu0 0.0
    %2069 = vmatpush1.msra.mxu0 0.0
    %2070 = vmatprep.subr.mxu0 0.0
    %2071 = vmatpush1.msra.mxu0 0.0
    %2072 = vmatprep.subr.mxu0 0.0
    %2073 = vmatpush1.msra.mxu0 0.0
    %2074 = vmatprep.subr.mxu0 0.0
    %2075 = vmatpush1.msra.mxu0 0.0
    %2076 = vmatprep.subr.mxu0 0.0
    %2077 = vmatpush1.msra.mxu0 0.0
    %2078 = vmatprep.subr.mxu0 0.0
    %2079 = vmatpush1.msra.mxu0 0.0
    %2080 = vmatprep.subr.mxu0 0.0
    %2081 = vmatpush1.msra.mxu0 0.0
    %2082 = vmatprep.subr.mxu0 0.0
    %2083 = vmatpush1.msra.mxu0 0.0
    %2084 = vmatprep.subr.mxu0 0.0
    %2085 = vmatpush1.msra.mxu0 0.0
    %2086 = vmatprep.subr.mxu0 0.0
    %2087 = vmatpush1.msra.mxu0 0.0
    %2088 = vmatprep.subr.mxu0 0.0
    %2089 = vmatpush1.msra.mxu0 0.0
    %2090 = vmatprep.subr.mxu0 0.0
    %2091 = vmatpush1.msra.mxu0 0.0
    %2092 = vmatprep.subr.mxu0 0.0
    %2093 = vmatpush1.msra.mxu0 0.0
    %2094 = vmatprep.subr.mxu0 0.0
    %2095 = vmatpush1.msra.mxu0 0.0
    %2096 = vmatprep.subr.mxu0 0.0
    %2097 = vmatpush1.msra.mxu0 0.0
    %2098 = vmatprep.mubr.f32.mxu0 0.0
    %v2099 = vand.u32 %v1854, 4294901760
    %v2100 = vsub.f32 %v1854, %v2099
    %2101 = vmatmul.mubr.f32.gmra.mrb[0].mxu0 %v2100
    %v2102 = vpop.f32.mrb[0].mxu0
    %v2103 = vadd.f32 %v2023, %v2102
    %v2104 = vpop.f32.mrb[0].mxu0
    %2105 = vdwg.mxu0
    %2106 = vmatprep.subr.mxu0 0.0
    %v2107 = vand.u32 %v1839, 4294901760
    %2108 = vmatpush1.msra.mxu0 %v2107
    %2109 = vmatprep.subr.mxu0 0.0
    %v2110 = vand.u32 %v1840, 4294901760
    %2111 = vmatpush1.msra.mxu0 %v2110
    %2112 = vmatprep.subr.mxu0 0.0
    %v2113 = vand.u32 %v1841, 4294901760
    %2114 = vmatpush1.msra.mxu0 %v2113
    %2115 = vmatprep.subr.mxu0 0.0
    %v2116 = vand.u32 %v1842, 4294901760
    %2117 = vmatpush1.msra.mxu0 %v2116
    %2118 = vmatprep.subr.mxu0 0.0
    %2119 = vmatpush1.msra.mxu0 0.0
    %2120 = vmatprep.subr.mxu0 0.0
    %2121 = vmatpush1.msra.mxu0 0.0
    %2122 = vmatprep.subr.mxu0 0.0
    %2123 = vmatpush1.msra.mxu0 0.0
    %2124 = vmatprep.subr.mxu0 0.0
    %2125 = vmatpush1.msra.mxu0 0.0
    %2126 = vmatprep.subr.mxu0 0.0
    %2127 = vmatpush1.msra.mxu0 0.0
    %2128 = vmatprep.subr.mxu0 0.0
    %2129 = vmatpush1.msra.mxu0 0.0
    %2130 = vmatprep.subr.mxu0 0.0
    %2131 = vmatpush1.msra.mxu0 0.0
    %2132 = vmatprep.subr.mxu0 0.0
    %2133 = vmatpush1.msra.mxu0 0.0
    %2134 = vmatprep.subr.mxu0 0.0
    %2135 = vmatpush1.msra.mxu0 0.0
    %2136 = vmatprep.subr.mxu0 0.0
    %2137 = vmatpush1.msra.mxu0 0.0
    %2138 = vmatprep.subr.mxu0 0.0
    %2139 = vmatpush1.msra.mxu0 0.0
    %2140 = vmatprep.subr.mxu0 0.0
    %2141 = vmatpush1.msra.mxu0 0.0
    %2142 = vmatprep.subr.mxu0 0.0
    %2143 = vmatpush1.msra.mxu0 0.0
    %2144 = vmatprep.subr.mxu0 0.0
    %2145 = vmatpush1.msra.mxu0 0.0
    %2146 = vmatprep.subr.mxu0 0.0
    %2147 = vmatpush1.msra.mxu0 0.0
    %2148 = vmatprep.subr.mxu0 0.0
    %2149 = vmatpush1.msra.mxu0 0.0
    %2150 = vmatprep.subr.mxu0 0.0
    %2151 = vmatpush1.msra.mxu0 0.0
    %2152 = vmatprep.subr.mxu0 0.0
    %2153 = vmatpush1.msra.mxu0 0.0
    %2154 = vmatprep.subr.mxu0 0.0
    %2155 = vmatpush1.msra.mxu0 0.0
    %2156 = vmatprep.subr.mxu0 0.0
    %2157 = vmatpush1.msra.mxu0 0.0
    %2158 = vmatprep.subr.mxu0 0.0
    %2159 = vmatpush1.msra.mxu0 0.0
    %2160 = vmatprep.subr.mxu0 0.0
    %2161 = vmatpush1.msra.mxu0 0.0
    %2162 = vmatprep.subr.mxu0 0.0
    %2163 = vmatpush1.msra.mxu0 0.0
    %2164 = vmatprep.subr.mxu0 0.0
    %2165 = vmatpush1.msra.mxu0 0.0
    %2166 = vmatprep.subr.mxu0 0.0
    %2167 = vmatpush1.msra.mxu0 0.0
    %2168 = vmatprep.subr.mxu0 0.0
    %2169 = vmatpush1.msra.mxu0 0.0
    %2170 = vmatprep.subr.mxu0 0.0
    %2171 = vmatpush1.msra.mxu0 0.0
    %2172 = vmatprep.subr.mxu0 0.0
    %2173 = vmatpush1.msra.mxu0 0.0
    %2174 = vmatprep.mubr.f32.mxu0 0.0
    %v2175 = vand.u32 %v1854, 4294901760
    %v2176 = vsub.f32 %v1854, %v2175
    %v2177 = vand.u32 %v2176, 4294901760
    %2178 = vmatmul.mubr.f32.gmra.mrb[0].mxu0 %v2177
    %v2179 = vpop.f32.mrb[0].mxu0
    %v2180 = vadd.f32 %v2103, %v2179
    %v2181 = vpop.f32.mrb[0].mxu0
    %2182 = vdwg.mxu0
    %2183 = vmatprep.subr.mxu0 0.0
    %v2184 = vand.u32 %v1839, 4294901760
    %v2185 = vsub.f32 %v1839, %v2184
    %v2186 = vand.u32 %v2185, 4294901760
    %2187 = vmatpush1.msra.mxu0 %v2186
    %2188 = vmatprep.subr.mxu0 0.0
    %v2189 = vand.u32 %v1840, 4294901760
    %v2190 = vsub.f32 %v1840, %v2189
    %v2191 = vand.u32 %v2190, 4294901760
    %2192 = vmatpush1.msra.mxu0 %v2191
    %2193 = vmatprep.subr.mxu0 0.0
    %v2194 = vand.u32 %v1841, 4294901760
    %v2195 = vsub.f32 %v1841, %v2194
    %v2196 = vand.u32 %v2195, 4294901760
    %2197 = vmatpush1.msra.mxu0 %v2196
    %2198 = vmatprep.subr.mxu0 0.0
    %v2199 = vand.u32 %v1842, 4294901760
    %v2200 = vsub.f32 %v1842, %v2199
    %v2201 = vand.u32 %v2200, 4294901760
    %2202 = vmatpush1.msra.mxu0 %v2201
    %2203 = vmatprep.subr.mxu0 0.0
    %2204 = vmatpush1.msra.mxu0 0.0
    %2205 = vmatprep.subr.mxu0 0.0
    %2206 = vmatpush1.msra.mxu0 0.0
    %2207 = vmatprep.subr.mxu0 0.0
    %2208 = vmatpush1.msra.mxu0 0.0
    %2209 = vmatprep.subr.mxu0 0.0
    %2210 = vmatpush1.msra.mxu0 0.0
    %2211 = vmatprep.subr.mxu0 0.0
    %2212 = vmatpush1.msra.mxu0 0.0
    %2213 = vmatprep.subr.mxu0 0.0
    %2214 = vmatpush1.msra.mxu0 0.0
    %2215 = vmatprep.subr.mxu0 0.0
    %2216 = vmatpush1.msra.mxu0 0.0
    %2217 = vmatprep.subr.mxu0 0.0
    %2218 = vmatpush1.msra.mxu0 0.0
    %2219 = vmatprep.subr.mxu0 0.0
    %2220 = vmatpush1.msra.mxu0 0.0
    %2221 = vmatprep.subr.mxu0 0.0
    %2222 = vmatpush1.msra.mxu0 0.0
    %2223 = vmatprep.subr.mxu0 0.0
    %2224 = vmatpush1.msra.mxu0 0.0
    %2225 = vmatprep.subr.mxu0 0.0
    %2226 = vmatpush1.msra.mxu0 0.0
    %2227 = vmatprep.subr.mxu0 0.0
    %2228 = vmatpush1.msra.mxu0 0.0
    %2229 = vmatprep.subr.mxu0 0.0
    %2230 = vmatpush1.msra.mxu0 0.0
    %2231 = vmatprep.subr.mxu0 0.0
    %2232 = vmatpush1.msra.mxu0 0.0
    %2233 = vmatprep.subr.mxu0 0.0
    %2234 = vmatpush1.msra.mxu0 0.0
    %2235 = vmatprep.subr.mxu0 0.0
    %2236 = vmatpush1.msra.mxu0 0.0
    %2237 = vmatprep.subr.mxu0 0.0
    %2238 = vmatpush1.msra.mxu0 0.0
    %2239 = vmatprep.subr.mxu0 0.0
    %2240 = vmatpush1.msra.mxu0 0.0
    %2241 = vmatprep.subr.mxu0 0.0
    %2242 = vmatpush1.msra.mxu0 0.0
    %2243 = vmatprep.subr.mxu0 0.0
    %2244 = vmatpush1.msra.mxu0 0.0
    %2245 = vmatprep.subr.mxu0 0.0
    %2246 = vmatpush1.msra.mxu0 0.0
    %2247 = vmatprep.subr.mxu0 0.0
    %2248 = vmatpush1.msra.mxu0 0.0
    %2249 = vmatprep.subr.mxu0 0.0
    %2250 = vmatpush1.msra.mxu0 0.0
    %2251 = vmatprep.subr.mxu0 0.0
    %2252 = vmatpush1.msra.mxu0 0.0
    %2253 = vmatprep.subr.mxu0 0.0
    %2254 = vmatpush1.msra.mxu0 0.0
    %2255 = vmatprep.subr.mxu0 0.0
    %2256 = vmatpush1.msra.mxu0 0.0
    %2257 = vmatprep.subr.mxu0 0.0
    %2258 = vmatpush1.msra.mxu0 0.0
    %2259 = vmatprep.mubr.f32.mxu0 0.0
    %v2260 = vand.u32 %v1854, 4294901760
    %2261 = vmatmul.mubr.f32.gmra.mrb[0].mxu0 %v2260
    %v2262 = vpop.f32.mrb[0].mxu0
    %v2263 = vadd.f32 %v2180, %v2262
    %v2264 = vpop.f32.mrb[0].mxu0
    %2265 = vdwg.mxu0
    %2266 = vmatprep.subr.mxu0 0.0
    %v2267 = vand.u32 %v1839, 4294901760
    %2268 = vmatpush1.msra.mxu0 %v2267
    %2269 = vmatprep.subr.mxu0 0.0
    %v2270 = vand.u32 %v1840, 4294901760
    %2271 = vmatpush1.msra.mxu0 %v2270
    %2272 = vmatprep.subr.mxu0 0.0
    %v2273 = vand.u32 %v1841, 4294901760
    %2274 = vmatpush1.msra.mxu0 %v2273
    %2275 = vmatprep.subr.mxu0 0.0
    %v2276 = vand.u32 %v1842, 4294901760
    %2277 = vmatpush1.msra.mxu0 %v2276
    %2278 = vmatprep.subr.mxu0 0.0
    %2279 = vmatpush1.msra.mxu0 0.0
    %2280 = vmatprep.subr.mxu0 0.0
    %2281 = vmatpush1.msra.mxu0 0.0
    %2282 = vmatprep.subr.mxu0 0.0
    %2283 = vmatpush1.msra.mxu0 0.0
    %2284 = vmatprep.subr.mxu0 0.0
    %2285 = vmatpush1.msra.mxu0 0.0
    %2286 = vmatprep.subr.mxu0 0.0
    %2287 = vmatpush1.msra.mxu0 0.0
    %2288 = vmatprep.subr.mxu0 0.0
    %2289 = vmatpush1.msra.mxu0 0.0
    %2290 = vmatprep.subr.mxu0 0.0
    %2291 = vmatpush1.msra.mxu0 0.0
    %2292 = vmatprep.subr.mxu0 0.0
    %2293 = vmatpush1.msra.mxu0 0.0
    %2294 = vmatprep.subr.mxu0 0.0
    %2295 = vmatpush1.msra.mxu0 0.0
    %2296 = vmatprep.subr.mxu0 0.0
    %2297 = vmatpush1.msra.mxu0 0.0
    %2298 = vmatprep.subr.mxu0 0.0
    %2299 = vmatpush1.msra.mxu0 0.0
    %2300 = vmatprep.subr.mxu0 0.0
    %2301 = vmatpush1.msra.mxu0 0.0
    %2302 = vmatprep.subr.mxu0 0.0
    %2303 = vmatpush1.msra.mxu0 0.0
    %2304 = vmatprep.subr.mxu0 0.0
    %2305 = vmatpush1.msra.mxu0 0.0
    %2306 = vmatprep.subr.mxu0 0.0
    %2307 = vmatpush1.msra.mxu0 0.0
    %2308 = vmatprep.subr.mxu0 0.0
    %2309 = vmatpush1.msra.mxu0 0.0
    %2310 = vmatprep.subr.mxu0 0.0
    %2311 = vmatpush1.msra.mxu0 0.0
    %2312 = vmatprep.subr.mxu0 0.0
    %2313 = vmatpush1.msra.mxu0 0.0
    %2314 = vmatprep.subr.mxu0 0.0
    %2315 = vmatpush1.msra.mxu0 0.0
    %2316 = vmatprep.subr.mxu0 0.0
    %2317 = vmatpush1.msra.mxu0 0.0
    %2318 = vmatprep.subr.mxu0 0.0
    %2319 = vmatpush1.msra.mxu0 0.0
    %2320 = vmatprep.subr.mxu0 0.0
    %2321 = vmatpush1.msra.mxu0 0.0
    %2322 = vmatprep.subr.mxu0 0.0
    %2323 = vmatpush1.msra.mxu0 0.0
    %2324 = vmatprep.subr.mxu0 0.0
    %2325 = vmatpush1.msra.mxu0 0.0
    %2326 = vmatprep.subr.mxu0 0.0
    %2327 = vmatpush1.msra.mxu0 0.0
    %2328 = vmatprep.subr.mxu0 0.0
    %2329 = vmatpush1.msra.mxu0 0.0
    %2330 = vmatprep.subr.mxu0 0.0
    %2331 = vmatpush1.msra.mxu0 0.0
    %2332 = vmatprep.subr.mxu0 0.0
    %2333 = vmatpush1.msra.mxu0 0.0
    %2334 = vmatprep.mubr.f32.mxu0 0.0
    %v2335 = vand.u32 %v1854, 4294901760
    %2336 = vmatmul.mubr.f32.gmra.mrb[0].mxu0 %v2335
    %v2337 = vpop.f32.mrb[0].mxu0
    %v2338 = vadd.f32 %v2263, %v2337
    %v2339 = vpop.f32.mrb[0].mxu0
    %2340 = vdwg.mxu0
    %2341 = vst [vmem:[#allocation11] sm:$0xff] %v2338
    %v2342 = vmul.f32 %v451, %v2338
    %v2343 = vrot.slane %v2338, 1
    %v2344 = vmul.f32 %v452, %v2343
    %v2345 = vadd.f32 %v2342, %v2344
    %v2346 = vrot.slane %v2338, 2
    %v2347 = vmul.f32 %v453, %v2346
    %v2348 = vadd.f32 %v2345, %v2347
    %v2349 = vrot.slane %v2338, 3
    %v2350 = vmul.f32 %v454, %v2349
    %v2351 = vadd.f32 %v2348, %v2350
    %v2352 = vrot.slane %v2338, 4
    %v2353 = vmul.f32 %v455, %v2352
    %v2354 = vadd.f32 %v2351, %v2353
    %v2355 = vrot.slane %v2338, 5
    %v2356 = vmul.f32 %v456, %v2355
    %v2357 = vadd.f32 %v2354, %v2356
    %v2358 = vrot.slane %v2338, 6
    %v2359 = vmul.f32 %v457, %v2358
    %v2360 = vadd.f32 %v2357, %v2359
    %v2361 = vrot.slane %v2338, 7
    %v2362 = vmul.f32 %v458, %v2361
    %v2363 = vadd.f32 %v2360, %v2362
    %v2364 = vadd.f32 %v2338, %v450
    %v2365 = vsub.f32 %v2364, %v2363
    %v2366 = vmul.f32 %v451, %v2365
    %v2367 = vrot.slane %v2365, 1
    %v2368 = vmul.f32 %v452, %v2367
    %v2369 = vadd.f32 %v2366, %v2368
    %v2370 = vrot.slane %v2365, 2
    %v2371 = vmul.f32 %v453, %v2370
    %v2372 = vadd.f32 %v2369, %v2371
    %v2373 = vrot.slane %v2365, 3
    %v2374 = vmul.f32 %v454, %v2373
    %v2375 = vadd.f32 %v2372, %v2374
    %v2376 = vrot.slane %v2365, 4
    %v2377 = vmul.f32 %v455, %v2376
    %v2378 = vadd.f32 %v2375, %v2377
    %v2379 = vrot.slane %v2365, 5
    %v2380 = vmul.f32 %v456, %v2379
    %v2381 = vadd.f32 %v2378, %v2380
    %v2382 = vrot.slane %v2365, 6
    %v2383 = vmul.f32 %v457, %v2382
    %v2384 = vadd.f32 %v2381, %v2383
    %v2385 = vrot.slane %v2365, 7
    %v2386 = vmul.f32 %v458, %v2385
    %v2387 = vadd.f32 %v2384, %v2386
    %v2388 = vadd.f32 %v2365, %v450
    %v2389 = vsub.f32 %v2388, %v2387
    %v2390 = vmul.f32 %v451, %v2389
    %v2391 = vrot.slane %v2389, 1
    %v2392 = vmul.f32 %v452, %v2391
    %v2393 = vadd.f32 %v2390, %v2392
    %v2394 = vrot.slane %v2389, 2
    %v2395 = vmul.f32 %v453, %v2394
    %v2396 = vadd.f32 %v2393, %v2395
    %v2397 = vrot.slane %v2389, 3
    %v2398 = vmul.f32 %v454, %v2397
    %v2399 = vadd.f32 %v2396, %v2398
    %v2400 = vrot.slane %v2389, 4
    %v2401 = vmul.f32 %v455, %v2400
    %v2402 = vadd.f32 %v2399, %v2401
    %v2403 = vrot.slane %v2389, 5
    %v2404 = vmul.f32 %v456, %v2403
    %v2405 = vadd.f32 %v2402, %v2404
    %v2406 = vrot.slane %v2389, 6
    %v2407 = vmul.f32 %v457, %v2406
    %v2408 = vadd.f32 %v2405, %v2407
    %v2409 = vrot.slane %v2389, 7
    %v2410 = vmul.f32 %v458, %v2409
    %v2411 = vadd.f32 %v2408, %v2410
    %v2412 = vadd.f32 %v2389, %v450
    %v2413 = vsub.f32 %v2412, %v2411
    %v2414 = vld [vmem:[#allocation9] sm:$0xff]
    %v2415 = vld [vmem:[#allocation9 + $0x8] sm:$0xff]
    %v2416 = vld [vmem:[#allocation9 + $0x10] sm:$0xff]
    %v2417 = vld [vmem:[#allocation9 + $0x18] sm:$0xff]
    %2418 = vmatprep.subr.mxu0 0.0
    %v2419 = vand.u32 %v2413, 4294901760
    %2420 = vmatpush1.msra.mxu0 %v2419
    %2421 = vmatprep.subr.mxu0 0.0
    %v2422 = vand.u32 %v2414, 4294901760
    %2423 = vmatpush1.msra.mxu0 %v2422
    %2424 = vmatprep.subr.mxu0 0.0
    %v2425 = vand.u32 %v2415, 4294901760
    %2426 = vmatpush1.msra.mxu0 %v2425
    %2427 = vmatprep.subr.mxu0 0.0
    %v2428 = vand.u32 %v2416, 4294901760
    %2429 = vmatpush1.msra.mxu0 %v2428
    %2430 = vmatprep.subr.mxu0 0.0
    %v2431 = vand.u32 %v2417, 4294901760
    %2432 = vmatpush1.msra.mxu0 %v2431
    %2433 = vmatprep.subr.mxu0 0.0
    %2434 = vmatpush1.msra.mxu0 0.0
    %2435 = vmatprep.subr.mxu0 0.0
    %2436 = vmatpush1.msra.mxu0 0.0
    %2437 = vmatprep.subr.mxu0 0.0
    %2438 = vmatpush1.msra.mxu0 0.0
    %2439 = vmatprep.subr.mxu0 0.0
    %2440 = vmatpush1.msra.mxu0 0.0
    %2441 = vmatprep.subr.mxu0 0.0
    %2442 = vmatpush1.msra.mxu0 0.0
    %2443 = vmatprep.subr.mxu0 0.0
    %2444 = vmatpush1.msra.mxu0 0.0
    %2445 = vmatprep.subr.mxu0 0.0
    %2446 = vmatpush1.msra.mxu0 0.0
    %2447 = vmatprep.subr.mxu0 0.0
    %2448 = vmatpush1.msra.mxu0 0.0
    %2449 = vmatprep.subr.mxu0 0.0
    %2450 = vmatpush1.msra.mxu0 0.0
    %2451 = vmatprep.subr.mxu0 0.0
    %2452 = vmatpush1.msra.mxu0 0.0
    %2453 = vmatprep.subr.mxu0 0.0
    %2454 = vmatpush1.msra.mxu0 0.0
    %2455 = vmatprep.subr.mxu0 0.0
    %2456 = vmatpush1.msra.mxu0 0.0
    %2457 = vmatprep.subr.mxu0 0.0
    %2458 = vmatpush1.msra.mxu0 0.0
    %2459 = vmatprep.subr.mxu0 0.0
    %2460 = vmatpush1.msra.mxu0 0.0
    %2461 = vmatprep.subr.mxu0 0.0
    %2462 = vmatpush1.msra.mxu0 0.0
    %2463 = vmatprep.subr.mxu0 0.0
    %2464 = vmatpush1.msra.mxu0 0.0
    %2465 = vmatprep.subr.mxu0 0.0
    %2466 = vmatpush1.msra.mxu0 0.0
    %2467 = vmatprep.subr.mxu0 0.0
    %2468 = vmatpush1.msra.mxu0 0.0
    %2469 = vmatprep.subr.mxu0 0.0
    %2470 = vmatpush1.msra.mxu0 0.0
    %2471 = vmatprep.subr.mxu0 0.0
    %2472 = vmatpush1.msra.mxu0 0.0
    %2473 = vmatprep.subr.mxu0 0.0
    %2474 = vmatpush1.msra.mxu0 0.0
    %2475 = vmatprep.subr.mxu0 0.0
    %2476 = vmatpush1.msra.mxu0 0.0
    %2477 = vmatprep.subr.mxu0 0.0
    %2478 = vmatpush1.msra.mxu0 0.0
    %2479 = vmatprep.subr.mxu0 0.0
    %2480 = vmatpush1.msra.mxu0 0.0
    %2481 = vmatprep.subr.mxu0 0.0
    %2482 = vmatpush1.msra.mxu0 0.0
    %2483 = vmatprep.subr.mxu0 0.0
    %2484 = vmatpush1.msra.mxu0 0.0
    %2485 = vmatprep.subr.mxu0 0.0
    %2486 = vmatpush1.msra.mxu0 0.0
    %2487 = vmatprep.mubr.f32.mxu0 0.0
    %v2488 = vand.u32 %v557, 4294901760
    %v2489 = vsub.f32 %v557, %v2488
    %v2490 = vand.u32 %v2489, 4294901760
    %v2491 = vsub.f32 %v2489, %v2490
    %v2492 = vand.u32 %v2491, 4294901760
    %2493 = vmatmul.mubr.f32.gmra.mrb[0].mxu0 %v2492
    %v2494 = vpop.f32.mrb[0].mxu0
    %v2495 = vadd.f32 %v538, %v2494
    %v2496 = vpop.f32.mrb[0].mxu0
    %2497 = vmatprep.mubr.f32.mxu0 0.0
    %v2498 = vand.u32 %v560, 4294901760
    %v2499 = vsub.f32 %v560, %v2498
    %v2500 = vand.u32 %v2499, 4294901760
    %v2501 = vsub.f32 %v2499, %v2500
    %v2502 = vand.u32 %v2501, 4294901760
    %2503 = vmatmul.mubr.f32.gmra.mrb[0].mxu0 %v2502
    %v2504 = vpop.f32.mrb[0].mxu0
    %v2505 = vadd.f32 %v543, %v2504
    %v2506 = vpop.f32.mrb[0].mxu0
    %2507 = vmatprep.mubr.f32.mxu0 0.0
    %v2508 = vand.u32 %v563, 4294901760
    %v2509 = vsub.f32 %v563, %v2508
    %v2510 = vand.u32 %v2509, 4294901760
    %v2511 = vsub.f32 %v2509, %v2510
    %v2512 = vand.u32 %v2511, 4294901760
    %2513 = vmatmul.mubr.f32.gmra.mrb[0].mxu0 %v2512
    %v2514 = vpop.f32.mrb[0].mxu0
    %v2515 = vadd.f32 %v548, %v2514
    %v2516 = vpop.f32.mrb[0].mxu0
    %2517 = vmatprep.mubr.f32.mxu0 0.0
    %v2518 = vand.u32 %v566, 4294901760
    %v2519 = vsub.f32 %v566, %v2518
    %v2520 = vand.u32 %v2519, 4294901760
    %v2521 = vsub.f32 %v2519, %v2520
    %v2522 = vand.u32 %v2521, 4294901760
    %2523 = vmatmul.mubr.f32.gmra.mrb[0].mxu0 %v2522
    %v2524 = vpop.f32.mrb[0].mxu0
    %v2525 = vadd.f32 %v553, %v2524
    %v2526 = vpop.f32.mrb[0].mxu0
    %2527 = vdwg.mxu0
    %2528 = vmatprep.subr.mxu0 0.0
    %v2529 = vand.u32 %v2413, 4294901760
    %v2530 = vsub.f32 %v2413, %v2529
    %v2531 = vand.u32 %v2530, 4294901760
    %v2532 = vsub.f32 %v2530, %v2531
    %v2533 = vand.u32 %v2532, 4294901760
    %2534 = vmatpush1.msra.mxu0 %v2533
    %2535 = vmatprep.subr.mxu0 0.0
    %v2536 = vand.u32 %v2414, 4294901760
    %v2537 = vsub.f32 %v2414, %v2536
    %v2538 = vand.u32 %v2537, 4294901760
    %v2539 = vsub.f32 %v2537, %v2538
    %v2540 = vand.u32 %v2539, 4294901760
    %2541 = vmatpush1.msra.mxu0 %v2540
    %2542 = vmatprep.subr.mxu0 0.0
    %v2543 = vand.u32 %v2415, 4294901760
    %v2544 = vsub.f32 %v2415, %v2543
    %v2545 = vand.u32 %v2544, 4294901760
    %v2546 = vsub.f32 %v2544, %v2545
    %v2547 = vand.u32 %v2546, 4294901760
    %2548 = vmatpush1.msra.mxu0 %v2547
    %2549 = vmatprep.subr.mxu0 0.0
    %v2550 = vand.u32 %v2416, 4294901760
    %v2551 = vsub.f32 %v2416, %v2550
    %v2552 = vand.u32 %v2551, 4294901760
    %v2553 = vsub.f32 %v2551, %v2552
    %v2554 = vand.u32 %v2553, 4294901760
    %2555 = vmatpush1.msra.mxu0 %v2554
    %2556 = vmatprep.subr.mxu0 0.0
    %v2557 = vand.u32 %v2417, 4294901760
    %v2558 = vsub.f32 %v2417, %v2557
    %v2559 = vand.u32 %v2558, 4294901760
    %v2560 = vsub.f32 %v2558, %v2559
    %v2561 = vand.u32 %v2560, 4294901760
    %2562 = vmatpush1.msra.mxu0 %v2561
    %2563 = vmatprep.subr.mxu0 0.0
    %2564 = vmatpush1.msra.mxu0 0.0
    %2565 = vmatprep.subr.mxu0 0.0
    %2566 = vmatpush1.msra.mxu0 0.0
    %2567 = vmatprep.subr.mxu0 0.0
    %2568 = vmatpush1.msra.mxu0 0.0
    %2569 = vmatprep.subr.mxu0 0.0
    %2570 = vmatpush1.msra.mxu0 0.0
    %2571 = vmatprep.subr.mxu0 0.0
    %2572 = vmatpush1.msra.mxu0 0.0
    %2573 = vmatprep.subr.mxu0 0.0
    %2574 = vmatpush1.msra.mxu0 0.0
    %2575 = vmatprep.subr.mxu0 0.0
    %2576 = vmatpush1.msra.mxu0 0.0
    %2577 = vmatprep.subr.mxu0 0.0
    %2578 = vmatpush1.msra.mxu0 0.0
    %2579 = vmatprep.subr.mxu0 0.0
    %2580 = vmatpush1.msra.mxu0 0.0
    %2581 = vmatprep.subr.mxu0 0.0
    %2582 = vmatpush1.msra.mxu0 0.0
    %2583 = vmatprep.subr.mxu0 0.0
    %2584 = vmatpush1.msra.mxu0 0.0
    %2585 = vmatprep.subr.mxu0 0.0
    %2586 = vmatpush1.msra.mxu0 0.0
    %2587 = vmatprep.subr.mxu0 0.0
    %2588 = vmatpush1.msra.mxu0 0.0
    %2589 = vmatprep.subr.mxu0 0.0
    %2590 = vmatpush1.msra.mxu0 0.0
    %2591 = vmatprep.subr.mxu0 0.0
    %2592 = vmatpush1.msra.mxu0 0.0
    %2593 = vmatprep.subr.mxu0 0.0
    %2594 = vmatpush1.msra.mxu0 0.0
    %2595 = vmatprep.subr.mxu0 0.0
    %2596 = vmatpush1.msra.mxu0 0.0
    %2597 = vmatprep.subr.mxu0 0.0
    %2598 = vmatpush1.msra.mxu0 0.0
    %2599 = vmatprep.subr.mxu0 0.0
    %2600 = vmatpush1.msra.mxu0 0.0
    %2601 = vmatprep.subr.mxu0 0.0
    %2602 = vmatpush1.msra.mxu0 0.0
    %2603 = vmatprep.subr.mxu0 0.0
    %2604 = vmatpush1.msra.mxu0 0.0
    %2605 = vmatprep.subr.mxu0 0.0
    %2606 = vmatpush1.msra.mxu0 0.0
    %2607 = vmatprep.subr.mxu0 0.0
    %2608 = vmatpush1.msra.mxu0 0.0
    %2609 = vmatprep.subr.mxu0 0.0
    %2610 = vmatpush1.msra.mxu0 0.0
    %2611 = vmatprep.subr.mxu0 0.0
    %2612 = vmatpush1.msra.mxu0 0.0
    %2613 = vmatprep.subr.mxu0 0.0
    %2614 = vmatpush1.msra.mxu0 0.0
    %2615 = vmatprep.subr.mxu0 0.0
    %2616 = vmatpush1.msra.mxu0 0.0
    %2617 = vmatprep.mubr.f32.mxu0 0.0
    %v2618 = vand.u32 %v557, 4294901760
    %2619 = vmatmul.mubr.f32.gmra.mrb[0].mxu0 %v2618
    %v2620 = vpop.f32.mrb[0].mxu0
    %v2621 = vadd.f32 %v2495, %v2620
    %v2622 = vpop.f32.mrb[0].mxu0
    %2623 = vmatprep.mubr.f32.mxu0 0.0
    %v2624 = vand.u32 %v560, 4294901760
    %2625 = vmatmul.mubr.f32.gmra.mrb[0].mxu0 %v2624
    %v2626 = vpop.f32.mrb[0].mxu0
    %v2627 = vadd.f32 %v2505, %v2626
    %v2628 = vpop.f32.mrb[0].mxu0
    %2629 = vmatprep.mubr.f32.mxu0 0.0
    %v2630 = vand.u32 %v563, 4294901760
    %2631 = vmatmul.mubr.f32.gmra.mrb[0].mxu0 %v2630
    %v2632 = vpop.f32.mrb[0].mxu0
    %v2633 = vadd.f32 %v2515, %v2632
    %v2634 = vpop.f32.mrb[0].mxu0
    %2635 = vmatprep.mubr.f32.mxu0 0.0
    %v2636 = vand.u32 %v566, 4294901760
    %2637 = vmatmul.mubr.f32.gmra.mrb[0].mxu0 %v2636
    %v2638 = vpop.f32.mrb[0].mxu0
    %v2639 = vadd.f32 %v2525, %v2638
    %v2640 = vpop.f32.mrb[0].mxu0
    %2641 = vdwg.mxu0
    %2642 = vmatprep.subr.mxu0 0.0
    %v2643 = vand.u32 %v2413, 4294901760
    %v2644 = vsub.f32 %v2413, %v2643
    %2645 = vmatpush1.msra.mxu0 %v2644
    %2646 = vmatprep.subr.mxu0 0.0
    %v2647 = vand.u32 %v2414, 4294901760
    %v2648 = vsub.f32 %v2414, %v2647
    %2649 = vmatpush1.msra.mxu0 %v2648
    %2650 = vmatprep.subr.mxu0 0.0
    %v2651 = vand.u32 %v2415, 4294901760
    %v2652 = vsub.f32 %v2415, %v2651
    %2653 = vmatpush1.msra.mxu0 %v2652
    %2654 = vmatprep.subr.mxu0 0.0
    %v2655 = vand.u32 %v2416, 4294901760
    %v2656 = vsub.f32 %v2416, %v2655
    %2657 = vmatpush1.msra.mxu0 %v2656
    %2658 = vmatprep.subr.mxu0 0.0
    %v2659 = vand.u32 %v2417, 4294901760
    %v2660 = vsub.f32 %v2417, %v2659
    %2661 = vmatpush1.msra.mxu0 %v2660
    %2662 = vmatprep.subr.mxu0 0.0
    %2663 = vmatpush1.msra.mxu0 0.0
    %2664 = vmatprep.subr.mxu0 0.0
    %2665 = vmatpush1.msra.mxu0 0.0
    %2666 = vmatprep.subr.mxu0 0.0
    %2667 = vmatpush1.msra.mxu0 0.0
    %2668 = vmatprep.subr.mxu0 0.0
    %2669 = vmatpush1.msra.mxu0 0.0
    %2670 = vmatprep.subr.mxu0 0.0
    %2671 = vmatpush1.msra.mxu0 0.0
    %2672 = vmatprep.subr.mxu0 0.0
    %2673 = vmatpush1.msra.mxu0 0.0
    %2674 = vmatprep.subr.mxu0 0.0
    %2675 = vmatpush1.msra.mxu0 0.0
    %2676 = vmatprep.subr.mxu0 0.0
    %2677 = vmatpush1.msra.mxu0 0.0
    %2678 = vmatprep.subr.mxu0 0.0
    %2679 = vmatpush1.msra.mxu0 0.0
    %2680 = vmatprep.subr.mxu0 0.0
    %2681 = vmatpush1.msra.mxu0 0.0
    %2682 = vmatprep.subr.mxu0 0.0
    %2683 = vmatpush1.msra.mxu0 0.0
    %2684 = vmatprep.subr.mxu0 0.0
    %2685 = vmatpush1.msra.mxu0 0.0
    %2686 = vmatprep.subr.mxu0 0.0
    %2687 = vmatpush1.msra.mxu0 0.0
    %2688 = vmatprep.subr.mxu0 0.0
    %2689 = vmatpush1.msra.mxu0 0.0
    %2690 = vmatprep.subr.mxu0 0.0
    %2691 = vmatpush1.msra.mxu0 0.0
    %2692 = vmatprep.subr.mxu0 0.0
    %2693 = vmatpush1.msra.mxu0 0.0
    %2694 = vmatprep.subr.mxu0 0.0
    %2695 = vmatpush1.msra.mxu0 0.0
    %2696 = vmatprep.subr.mxu0 0.0
    %2697 = vmatpush1.msra.mxu0 0.0
    %2698 = vmatprep.subr.mxu0 0.0
    %2699 = vmatpush1.msra.mxu0 0.0
    %2700 = vmatprep.subr.mxu0 0.0
    %2701 = vmatpush1.msra.mxu0 0.0
    %2702 = vmatprep.subr.mxu0 0.0
    %2703 = vmatpush1.msra.mxu0 0.0
    %2704 = vmatprep.subr.mxu0 0.0
    %2705 = vmatpush1.msra.mxu0 0.0
    %2706 = vmatprep.subr.mxu0 0.0
    %2707 = vmatpush1.msra.mxu0 0.0
    %2708 = vmatprep.subr.mxu0 0.0
    %2709 = vmatpush1.msra.mxu0 0.0
    %2710 = vmatprep.subr.mxu0 0.0
    %2711 = vmatpush1.msra.mxu0 0.0
    %2712 = vmatprep.subr.mxu0 0.0
    %2713 = vmatpush1.msra.mxu0 0.0
    %2714 = vmatprep.subr.mxu0 0.0
    %2715 = vmatpush1.msra.mxu0 0.0
    %2716 = vmatprep.mubr.f32.mxu0 0.0
    %v2717 = vand.u32 %v557, 4294901760
    %v2718 = vsub.f32 %v557, %v2717
    %2719 = vmatmul.mubr.f32.gmra.mrb[0].mxu0 %v2718
    %v2720 = vpop.f32.mrb[0].mxu0
    %v2721 = vadd.f32 %v2621, %v2720
    %v2722 = vpop.f32.mrb[0].mxu0
    %2723 = vmatprep.mubr.f32.mxu0 0.0
    %v2724 = vand.u32 %v560, 4294901760
    %v2725 = vsub.f32 %v560, %v2724
    %2726 = vmatmul.mubr.f32.gmra.mrb[0].mxu0 %v2725
    %v2727 = vpop.f32.mrb[0].mxu0
    %v2728 = vadd.f32 %v2627, %v2727
    %v2729 = vpop.f32.mrb[0].mxu0
    %2730 = vmatprep.mubr.f32.mxu0 0.0
    %v2731 = vand.u32 %v563, 4294901760
    %v2732 = vsub.f32 %v563, %v2731
    %2733 = vmatmul.mubr.f32.gmra.mrb[0].mxu0 %v2732
    %v2734 = vpop.f32.mrb[0].mxu0
    %v2735 = vadd.f32 %v2633, %v2734
    %v2736 = vpop.f32.mrb[0].mxu0
    %2737 = vmatprep.mubr.f32.mxu0 0.0
    %v2738 = vand.u32 %v566, 4294901760
    %v2739 = vsub.f32 %v566, %v2738
    %2740 = vmatmul.mubr.f32.gmra.mrb[0].mxu0 %v2739
    %v2741 = vpop.f32.mrb[0].mxu0
    %v2742 = vadd.f32 %v2639, %v2741
    %v2743 = vpop.f32.mrb[0].mxu0
    %2744 = vdwg.mxu0
    %2745 = vmatprep.subr.mxu0 0.0
    %v2746 = vand.u32 %v2413, 4294901760
    %2747 = vmatpush1.msra.mxu0 %v2746
    %2748 = vmatprep.subr.mxu0 0.0
    %v2749 = vand.u32 %v2414, 4294901760
    %2750 = vmatpush1.msra.mxu0 %v2749
    %2751 = vmatprep.subr.mxu0 0.0
    %v2752 = vand.u32 %v2415, 4294901760
    %2753 = vmatpush1.msra.mxu0 %v2752
    %2754 = vmatprep.subr.mxu0 0.0
    %v2755 = vand.u32 %v2416, 4294901760
    %2756 = vmatpush1.msra.mxu0 %v2755
    %2757 = vmatprep.subr.mxu0 0.0
    %v2758 = vand.u32 %v2417, 4294901760
    %2759 = vmatpush1.msra.mxu0 %v2758
    %2760 = vmatprep.subr.mxu0 0.0
    %2761 = vmatpush1.msra.mxu0 0.0
    %2762 = vmatprep.subr.mxu0 0.0
    %2763 = vmatpush1.msra.mxu0 0.0
    %2764 = vmatprep.subr.mxu0 0.0
    %2765 = vmatpush1.msra.mxu0 0.0
    %2766 = vmatprep.subr.mxu0 0.0
    %2767 = vmatpush1.msra.mxu0 0.0
    %2768 = vmatprep.subr.mxu0 0.0
    %2769 = vmatpush1.msra.mxu0 0.0
    %2770 = vmatprep.subr.mxu0 0.0
    %2771 = vmatpush1.msra.mxu0 0.0
    %2772 = vmatprep.subr.mxu0 0.0
    %2773 = vmatpush1.msra.mxu0 0.0
    %2774 = vmatprep.subr.mxu0 0.0
    %2775 = vmatpush1.msra.mxu0 0.0
    %2776 = vmatprep.subr.mxu0 0.0
    %2777 = vmatpush1.msra.mxu0 0.0
    %2778 = vmatprep.subr.mxu0 0.0
    %2779 = vmatpush1.msra.mxu0 0.0
    %2780 = vmatprep.subr.mxu0 0.0
    %2781 = vmatpush1.msra.mxu0 0.0
    %2782 = vmatprep.subr.mxu0 0.0
    %2783 = vmatpush1.msra.mxu0 0.0
    %2784 = vmatprep.subr.mxu0 0.0
    %2785 = vmatpush1.msra.mxu0 0.0
    %2786 = vmatprep.subr.mxu0 0.0
    %2787 = vmatpush1.msra.mxu0 0.0
    %2788 = vmatprep.subr.mxu0 0.0
    %2789 = vmatpush1.msra.mxu0 0.0
    %2790 = vmatprep.subr.mxu0 0.0
    %2791 = vmatpush1.msra.mxu0 0.0
    %2792 = vmatprep.subr.mxu0 0.0
    %2793 = vmatpush1.msra.mxu0 0.0
    %2794 = vmatprep.subr.mxu0 0.0
    %2795 = vmatpush1.msra.mxu0 0.0
    %2796 = vmatprep.subr.mxu0 0.0
    %2797 = vmatpush1.msra.mxu0 0.0
    %2798 = vmatprep.subr.mxu0 0.0
    %2799 = vmatpush1.msra.mxu0 0.0
    %2800 = vmatprep.subr.mxu0 0.0
    %2801 = vmatpush1.msra.mxu0 0.0
    %2802 = vmatprep.subr.mxu0 0.0
    %2803 = vmatpush1.msra.mxu0 0.0
    %2804 = vmatprep.subr.mxu0 0.0
    %2805 = vmatpush1.msra.mxu0 0.0
    %2806 = vmatprep.subr.mxu0 0.0
    %2807 = vmatpush1.msra.mxu0 0.0
    %2808 = vmatprep.subr.mxu0 0.0
    %2809 = vmatpush1.msra.mxu0 0.0
    %2810 = vmatprep.subr.mxu0 0.0
    %2811 = vmatpush1.msra.mxu0 0.0
    %2812 = vmatprep.subr.mxu0 0.0
    %2813 = vmatpush1.msra.mxu0 0.0
    %2814 = vmatprep.mubr.f32.mxu0 0.0
    %v2815 = vand.u32 %v557, 4294901760
    %v2816 = vsub.f32 %v557, %v2815
    %v2817 = vand.u32 %v2816, 4294901760
    %2818 = vmatmul.mubr.f32.gmra.mrb[0].mxu0 %v2817
    %v2819 = vpop.f32.mrb[0].mxu0
    %v2820 = vadd.f32 %v2721, %v2819
    %v2821 = vpop.f32.mrb[0].mxu0
    %2822 = vmatprep.mubr.f32.mxu0 0.0
    %v2823 = vand.u32 %v560, 4294901760
    %v2824 = vsub.f32 %v560, %v2823
    %v2825 = vand.u32 %v2824, 4294901760
    %2826 = vmatmul.mubr.f32.gmra.mrb[0].mxu0 %v2825
    %v2827 = vpop.f32.mrb[0].mxu0
    %v2828 = vadd.f32 %v2728, %v2827
    %v2829 = vpop.f32.mrb[0].mxu0
    %2830 = vmatprep.mubr.f32.mxu0 0.0
    %v2831 = vand.u32 %v563, 4294901760
    %v2832 = vsub.f32 %v563, %v2831
    %v2833 = vand.u32 %v2832, 4294901760
    %2834 = vmatmul.mubr.f32.gmra.mrb[0].mxu0 %v2833
    %v2835 = vpop.f32.mrb[0].mxu0
    %v2836 = vadd.f32 %v2735, %v2835
    %v2837 = vpop.f32.mrb[0].mxu0
    %2838 = vmatprep.mubr.f32.mxu0 0.0
    %v2839 = vand.u32 %v566, 4294901760
    %v2840 = vsub.f32 %v566, %v2839
    %v2841 = vand.u32 %v2840, 4294901760
    %2842 = vmatmul.mubr.f32.gmra.mrb[0].mxu0 %v2841
    %v2843 = vpop.f32.mrb[0].mxu0
    %v2844 = vadd.f32 %v2742, %v2843
    %v2845 = vpop.f32.mrb[0].mxu0
    %2846 = vdwg.mxu0
    %2847 = vmatprep.subr.mxu0 0.0
    %v2848 = vand.u32 %v2413, 4294901760
    %v2849 = vsub.f32 %v2413, %v2848
    %v2850 = vand.u32 %v2849, 4294901760
    %2851 = vmatpush1.msra.mxu0 %v2850
    %2852 = vmatprep.subr.mxu0 0.0
    %v2853 = vand.u32 %v2414, 4294901760
    %v2854 = vsub.f32 %v2414, %v2853
    %v2855 = vand.u32 %v2854, 4294901760
    %2856 = vmatpush1.msra.mxu0 %v2855
    %2857 = vmatprep.subr.mxu0 0.0
    %v2858 = vand.u32 %v2415, 4294901760
    %v2859 = vsub.f32 %v2415, %v2858
    %v2860 = vand.u32 %v2859, 4294901760
    %2861 = vmatpush1.msra.mxu0 %v2860
    %2862 = vmatprep.subr.mxu0 0.0
    %v2863 = vand.u32 %v2416, 4294901760
    %v2864 = vsub.f32 %v2416, %v2863
    %v2865 = vand.u32 %v2864, 4294901760
    %2866 = vmatpush1.msra.mxu0 %v2865
    %2867 = vmatprep.subr.mxu0 0.0
    %v2868 = vand.u32 %v2417, 4294901760
    %v2869 = vsub.f32 %v2417, %v2868
    %v2870 = vand.u32 %v2869, 4294901760
    %2871 = vmatpush1.msra.mxu0 %v2870
    %2872 = vmatprep.subr.mxu0 0.0
    %2873 = vmatpush1.msra.mxu0 0.0
    %2874 = vmatprep.subr.mxu0 0.0
    %2875 = vmatpush1.msra.mxu0 0.0
    %2876 = vmatprep.subr.mxu0 0.0
    %2877 = vmatpush1.msra.mxu0 0.0
    %2878 = vmatprep.subr.mxu0 0.0
    %2879 = vmatpush1.msra.mxu0 0.0
    %2880 = vmatprep.subr.mxu0 0.0
    %2881 = vmatpush1.msra.mxu0 0.0
    %2882 = vmatprep.subr.mxu0 0.0
    %2883 = vmatpush1.msra.mxu0 0.0
    %2884 = vmatprep.subr.mxu0 0.0
    %2885 = vmatpush1.msra.mxu0 0.0
    %2886 = vmatprep.subr.mxu0 0.0
    %2887 = vmatpush1.msra.mxu0 0.0
    %2888 = vmatprep.subr.mxu0 0.0
    %2889 = vmatpush1.msra.mxu0 0.0
    %2890 = vmatprep.subr.mxu0 0.0
    %2891 = vmatpush1.msra.mxu0 0.0
    %2892 = vmatprep.subr.mxu0 0.0
    %2893 = vmatpush1.msra.mxu0 0.0
    %2894 = vmatprep.subr.mxu0 0.0
    %2895 = vmatpush1.msra.mxu0 0.0
    %2896 = vmatprep.subr.mxu0 0.0
    %2897 = vmatpush1.msra.mxu0 0.0
    %2898 = vmatprep.subr.mxu0 0.0
    %2899 = vmatpush1.msra.mxu0 0.0
    %2900 = vmatprep.subr.mxu0 0.0
    %2901 = vmatpush1.msra.mxu0 0.0
    %2902 = vmatprep.subr.mxu0 0.0
    %2903 = vmatpush1.msra.mxu0 0.0
    %2904 = vmatprep.subr.mxu0 0.0
    %2905 = vmatpush1.msra.mxu0 0.0
    %2906 = vmatprep.subr.mxu0 0.0
    %2907 = vmatpush1.msra.mxu0 0.0
    %2908 = vmatprep.subr.mxu0 0.0
    %2909 = vmatpush1.msra.mxu0 0.0
    %2910 = vmatprep.subr.mxu0 0.0
    %2911 = vmatpush1.msra.mxu0 0.0
    %2912 = vmatprep.subr.mxu0 0.0
    %2913 = vmatpush1.msra.mxu0 0.0
    %2914 = vmatprep.subr.mxu0 0.0
    %2915 = vmatpush1.msra.mxu0 0.0
    %2916 = vmatprep.subr.mxu0 0.0
    %2917 = vmatpush1.msra.mxu0 0.0
    %2918 = vmatprep.subr.mxu0 0.0
    %2919 = vmatpush1.msra.mxu0 0.0
    %2920 = vmatprep.subr.mxu0 0.0
    %2921 = vmatpush1.msra.mxu0 0.0
    %2922 = vmatprep.subr.mxu0 0.0
    %2923 = vmatpush1.msra.mxu0 0.0
    %2924 = vmatprep.subr.mxu0 0.0
    %2925 = vmatpush1.msra.mxu0 0.0
    %2926 = vmatprep.mubr.f32.mxu0 0.0
    %v2927 = vand.u32 %v557, 4294901760
    %2928 = vmatmul.mubr.f32.gmra.mrb[0].mxu0 %v2927
    %v2929 = vpop.f32.mrb[0].mxu0
    %v2930 = vadd.f32 %v2820, %v2929
    %v2931 = vpop.f32.mrb[0].mxu0
    %2932 = vmatprep.mubr.f32.mxu0 0.0
    %v2933 = vand.u32 %v560, 4294901760
    %2934 = vmatmul.mubr.f32.gmra.mrb[0].mxu0 %v2933
    %v2935 = vpop.f32.mrb[0].mxu0
    %v2936 = vadd.f32 %v2828, %v2935
    %v2937 = vpop.f32.mrb[0].mxu0
    %2938 = vmatprep.mubr.f32.mxu0 0.0
    %v2939 = vand.u32 %v563, 4294901760
    %2940 = vmatmul.mubr.f32.gmra.mrb[0].mxu0 %v2939
    %v2941 = vpop.f32.mrb[0].mxu0
    %v2942 = vadd.f32 %v2836, %v2941
    %v2943 = vpop.f32.mrb[0].mxu0
    %2944 = vmatprep.mubr.f32.mxu0 0.0
    %v2945 = vand.u32 %v566, 4294901760
    %2946 = vmatmul.mubr.f32.gmra.mrb[0].mxu0 %v2945
    %v2947 = vpop.f32.mrb[0].mxu0
    %v2948 = vadd.f32 %v2844, %v2947
    %v2949 = vpop.f32.mrb[0].mxu0
    %2950 = vdwg.mxu0
    %2951 = vmatprep.subr.mxu0 0.0
    %v2952 = vand.u32 %v2413, 4294901760
    %2953 = vmatpush1.msra.mxu0 %v2952
    %2954 = vmatprep.subr.mxu0 0.0
    %v2955 = vand.u32 %v2414, 4294901760
    %2956 = vmatpush1.msra.mxu0 %v2955
    %2957 = vmatprep.subr.mxu0 0.0
    %v2958 = vand.u32 %v2415, 4294901760
    %2959 = vmatpush1.msra.mxu0 %v2958
    %2960 = vmatprep.subr.mxu0 0.0
    %v2961 = vand.u32 %v2416, 4294901760
    %2962 = vmatpush1.msra.mxu0 %v2961
    %2963 = vmatprep.subr.mxu0 0.0
    %v2964 = vand.u32 %v2417, 4294901760
    %2965 = vmatpush1.msra.mxu0 %v2964
    %2966 = vmatprep.subr.mxu0 0.0
    %2967 = vmatpush1.msra.mxu0 0.0
    %2968 = vmatprep.subr.mxu0 0.0
    %2969 = vmatpush1.msra.mxu0 0.0
    %2970 = vmatprep.subr.mxu0 0.0
    %2971 = vmatpush1.msra.mxu0 0.0
    %2972 = vmatprep.subr.mxu0 0.0
    %2973 = vmatpush1.msra.mxu0 0.0
    %2974 = vmatprep.subr.mxu0 0.0
    %2975 = vmatpush1.msra.mxu0 0.0
    %2976 = vmatprep.subr.mxu0 0.0
    %2977 = vmatpush1.msra.mxu0 0.0
    %2978 = vmatprep.subr.mxu0 0.0
    %2979 = vmatpush1.msra.mxu0 0.0
    %2980 = vmatprep.subr.mxu0 0.0
    %2981 = vmatpush1.msra.mxu0 0.0
    %2982 = vmatprep.subr.mxu0 0.0
    %2983 = vmatpush1.msra.mxu0 0.0
    %2984 = vmatprep.subr.mxu0 0.0
    %2985 = vmatpush1.msra.mxu0 0.0
    %2986 = vmatprep.subr.mxu0 0.0
    %2987 = vmatpush1.msra.mxu0 0.0
    %2988 = vmatprep.subr.mxu0 0.0
    %2989 = vmatpush1.msra.mxu0 0.0
    %2990 = vmatprep.subr.mxu0 0.0
    %2991 = vmatpush1.msra.mxu0 0.0
    %2992 = vmatprep.subr.mxu0 0.0
    %2993 = vmatpush1.msra.mxu0 0.0
    %2994 = vmatprep.subr.mxu0 0.0
    %2995 = vmatpush1.msra.mxu0 0.0
    %2996 = vmatprep.subr.mxu0 0.0
    %2997 = vmatpush1.msra.mxu0 0.0
    %2998 = vmatprep.subr.mxu0 0.0
    %2999 = vmatpush1.msra.mxu0 0.0
    %3000 = vmatprep.subr.mxu0 0.0
    %3001 = vmatpush1.msra.mxu0 0.0
    %3002 = vmatprep.subr.mxu0 0.0
    %3003 = vmatpush1.msra.mxu0 0.0
    %3004 = vmatprep.subr.mxu0 0.0
    %3005 = vmatpush1.msra.mxu0 0.0
    %3006 = vmatprep.subr.mxu0 0.0
    %3007 = vmatpush1.msra.mxu0 0.0
    %3008 = vmatprep.subr.mxu0 0.0
    %3009 = vmatpush1.msra.mxu0 0.0
    %3010 = vmatprep.subr.mxu0 0.0
    %3011 = vmatpush1.msra.mxu0 0.0
    %3012 = vmatprep.subr.mxu0 0.0
    %3013 = vmatpush1.msra.mxu0 0.0
    %3014 = vmatprep.subr.mxu0 0.0
    %3015 = vmatpush1.msra.mxu0 0.0
    %3016 = vmatprep.subr.mxu0 0.0
    %3017 = vmatpush1.msra.mxu0 0.0
    %3018 = vmatprep.subr.mxu0 0.0
    %3019 = vmatpush1.msra.mxu0 0.0
    %3020 = vmatprep.mubr.f32.mxu0 0.0
    %v3021 = vand.u32 %v557, 4294901760
    %3022 = vmatmul.mubr.f32.gmra.mrb[0].mxu0 %v3021
    %v3023 = vpop.f32.mrb[0].mxu0
    %v3024 = vadd.f32 %v2930, %v3023
    %v3025 = vpop.f32.mrb[0].mxu0
    %3026 = vmatprep.mubr.f32.mxu0 0.0
    %v3027 = vand.u32 %v560, 4294901760
    %3028 = vmatmul.mubr.f32.gmra.mrb[0].mxu0 %v3027
    %v3029 = vpop.f32.mrb[0].mxu0
    %v3030 = vadd.f32 %v2936, %v3029
    %v3031 = vpop.f32.mrb[0].mxu0
    %3032 = vmatprep.mubr.f32.mxu0 0.0
    %v3033 = vand.u32 %v563, 4294901760
    %3034 = vmatmul.mubr.f32.gmra.mrb[0].mxu0 %v3033
    %v3035 = vpop.f32.mrb[0].mxu0
    %v3036 = vadd.f32 %v2942, %v3035
    %v3037 = vpop.f32.mrb[0].mxu0
    %3038 = vmatprep.mubr.f32.mxu0 0.0
    %v3039 = vand.u32 %v566, 4294901760
    %3040 = vmatmul.mubr.f32.gmra.mrb[0].mxu0 %v3039
    %v3041 = vpop.f32.mrb[0].mxu0
    %v3042 = vadd.f32 %v2948, %v3041
    %v3043 = vpop.f32.mrb[0].mxu0
    %3044 = vdwg.mxu0
    %v3045 = vlaneseq
    %v3046 = vshrl.u32 %v3045, 7
    %v3047 = vsub.s32 0, %v3046
    %v3048 = vrot.slane %v3024, %v3047
    %vm3049 = vcmp.gt.f32.partialorder %v3048, %v3024
    %vm3050 = vcmp.gt.f32.partialorder %v3048, %v3030
    %vm3051 = vcmp.gt.f32.partialorder %v3048, %v3036
    %vm3052 = vcmp.gt.f32.partialorder %v3048, %v3042
    %v3053 = vsel %vm3049, 1, 0
    %v3054 = vsel %vm3050, 1, 0
    %v3055 = vsel %vm3051, 1, 0
    %v3056 = vsel %vm3052, 1, 0
    %v3057 = vcvt.s32.f32 %v3053
    %v3058 = vcvt.s32.f32 %v3054
    %v3059 = vcvt.s32.f32 %v3055
    %v3060 = vcvt.s32.f32 %v3056
    %v3061 = vadd.f32 %v3057, 0.0
    %v3062 = vadd.f32 %v3058, 0.0
    %v3063 = vadd.f32 %v3059, 0.0
    %v3064 = vadd.f32 %v3060, 0.0
    %v3065 = vlaneseq
    %v3066 = vshrl.u32 %v3065, 7
    %v3067 = vsub.s32 1, %v3066
    %v3068 = vrot.slane %v3024, %v3067
    %vm3069 = vcmp.gt.f32.partialorder %v3068, %v3024
    %vm3070 = vcmp.gt.f32.partialorder %v3068, %v3030
    %vm3071 = vcmp.gt.f32.partialorder %v3068, %v3036
    %vm3072 = vcmp.gt.f32.partialorder %v3068, %v3042
    %v3073 = vsel %vm3069, 1, 0
    %v3074 = vsel %vm3070, 1, 0
    %v3075 = vsel %vm3071, 1, 0
    %v3076 = vsel %vm3072, 1, 0
    %v3077 = vcvt.s32.f32 %v3073
    %v3078 = vcvt.s32.f32 %v3074
    %v3079 = vcvt.s32.f32 %v3075
    %v3080 = vcvt.s32.f32 %v3076
    %v3081 = vadd.f32 %v3061, %v3077
    %v3082 = vadd.f32 %v3062, %v3078
    %v3083 = vadd.f32 %v3063, %v3079
    %v3084 = vadd.f32 %v3064, %v3080
    %v3085 = vlaneseq
    %v3086 = vshrl.u32 %v3085, 7
    %v3087 = vsub.s32 2, %v3086
    %v3088 = vrot.slane %v3024, %v3087
    %vm3089 = vcmp.gt.f32.partialorder %v3088, %v3024
    %vm3090 = vcmp.gt.f32.partialorder %v3088, %v3030
    %vm3091 = vcmp.gt.f32.partialorder %v3088, %v3036
    %vm3092 = vcmp.gt.f32.partialorder %v3088, %v3042
    %v3093 = vsel %vm3089, 1, 0
    %v3094 = vsel %vm3090, 1, 0
    %v3095 = vsel %vm3091, 1, 0
    %v3096 = vsel %vm3092, 1, 0
    %v3097 = vcvt.s32.f32 %v3093
    %v3098 = vcvt.s32.f32 %v3094
    %v3099 = vcvt.s32.f32 %v3095
    %v3100 = vcvt.s32.f32 %v3096
    %v3101 = vadd.f32 %v3081, %v3097
    %v3102 = vadd.f32 %v3082, %v3098
    %v3103 = vadd.f32 %v3083, %v3099
    %v3104 = vadd.f32 %v3084, %v3100
    %v3105 = vlaneseq
    %v3106 = vshrl.u32 %v3105, 7
    %v3107 = vsub.s32 3, %v3106
    %v3108 = vrot.slane %v3024, %v3107
    %vm3109 = vcmp.gt.f32.partialorder %v3108, %v3024
    %vm3110 = vcmp.gt.f32.partialorder %v3108, %v3030
    %vm3111 = vcmp.gt.f32.partialorder %v3108, %v3036
    %vm3112 = vcmp.gt.f32.partialorder %v3108, %v3042
    %v3113 = vsel %vm3109, 1, 0
    %v3114 = vsel %vm3110, 1, 0
    %v3115 = vsel %vm3111, 1, 0
    %v3116 = vsel %vm3112, 1, 0
    %v3117 = vcvt.s32.f32 %v3113
    %v3118 = vcvt.s32.f32 %v3114
    %v3119 = vcvt.s32.f32 %v3115
    %v3120 = vcvt.s32.f32 %v3116
    %v3121 = vadd.f32 %v3101, %v3117
    %v3122 = vadd.f32 %v3102, %v3118
    %v3123 = vadd.f32 %v3103, %v3119
    %v3124 = vadd.f32 %v3104, %v3120
    %v3125 = vlaneseq
    %v3126 = vshrl.u32 %v3125, 7
    %v3127 = vsub.s32 4, %v3126
    %v3128 = vrot.slane %v3024, %v3127
    %vm3129 = vcmp.gt.f32.partialorder %v3128, %v3024
    %vm3130 = vcmp.gt.f32.partialorder %v3128, %v3030
    %vm3131 = vcmp.gt.f32.partialorder %v3128, %v3036
    %vm3132 = vcmp.gt.f32.partialorder %v3128, %v3042
    %v3133 = vsel %vm3129, 1, 0
    %v3134 = vsel %vm3130, 1, 0
    %v3135 = vsel %vm3131, 1, 0
    %v3136 = vsel %vm3132, 1, 0
    %v3137 = vcvt.s32.f32 %v3133
    %v3138 = vcvt.s32.f32 %v3134
    %v3139 = vcvt.s32.f32 %v3135
    %v3140 = vcvt.s32.f32 %v3136
    %v3141 = vadd.f32 %v3121, %v3137
    %v3142 = vadd.f32 %v3122, %v3138
    %v3143 = vadd.f32 %v3123, %v3139
    %v3144 = vadd.f32 %v3124, %v3140
    %v3145 = vlaneseq
    %v3146 = vshrl.u32 %v3145, 7
    %v3147 = vsub.s32 5, %v3146
    %v3148 = vrot.slane %v3024, %v3147
    %vm3149 = vcmp.gt.f32.partialorder %v3148, %v3024
    %vm3150 = vcmp.gt.f32.partialorder %v3148, %v3030
    %vm3151 = vcmp.gt.f32.partialorder %v3148, %v3036
    %vm3152 = vcmp.gt.f32.partialorder %v3148, %v3042
    %v3153 = vsel %vm3149, 1, 0
    %v3154 = vsel %vm3150, 1, 0
    %v3155 = vsel %vm3151, 1, 0
    %v3156 = vsel %vm3152, 1, 0
    %v3157 = vcvt.s32.f32 %v3153
    %v3158 = vcvt.s32.f32 %v3154
    %v3159 = vcvt.s32.f32 %v3155
    %v3160 = vcvt.s32.f32 %v3156
    %v3161 = vadd.f32 %v3141, %v3157
    %v3162 = vadd.f32 %v3142, %v3158
    %v3163 = vadd.f32 %v3143, %v3159
    %v3164 = vadd.f32 %v3144, %v3160
    %v3165 = vlaneseq
    %v3166 = vshrl.u32 %v3165, 7
    %v3167 = vsub.s32 6, %v3166
    %v3168 = vrot.slane %v3024, %v3167
    %vm3169 = vcmp.gt.f32.partialorder %v3168, %v3024
    %vm3170 = vcmp.gt.f32.partialorder %v3168, %v3030
    %vm3171 = vcmp.gt.f32.partialorder %v3168, %v3036
    %vm3172 = vcmp.gt.f32.partialorder %v3168, %v3042
    %v3173 = vsel %vm3169, 1, 0
    %v3174 = vsel %vm3170, 1, 0
    %v3175 = vsel %vm3171, 1, 0
    %v3176 = vsel %vm3172, 1, 0
    %v3177 = vcvt.s32.f32 %v3173
    %v3178 = vcvt.s32.f32 %v3174
    %v3179 = vcvt.s32.f32 %v3175
    %v3180 = vcvt.s32.f32 %v3176
    %v3181 = vadd.f32 %v3161, %v3177
    %v3182 = vadd.f32 %v3162, %v3178
    %v3183 = vadd.f32 %v3163, %v3179
    %v3184 = vadd.f32 %v3164, %v3180
    %v3185 = vlaneseq
    %v3186 = vshrl.u32 %v3185, 7
    %v3187 = vsub.s32 7, %v3186
    %v3188 = vrot.slane %v3024, %v3187
    %vm3189 = vcmp.gt.f32.partialorder %v3188, %v3024
    %vm3190 = vcmp.gt.f32.partialorder %v3188, %v3030
    %vm3191 = vcmp.gt.f32.partialorder %v3188, %v3036
    %vm3192 = vcmp.gt.f32.partialorder %v3188, %v3042
    %v3193 = vsel %vm3189, 1, 0
    %v3194 = vsel %vm3190, 1, 0
    %v3195 = vsel %vm3191, 1, 0
    %v3196 = vsel %vm3192, 1, 0
    %v3197 = vcvt.s32.f32 %v3193
    %v3198 = vcvt.s32.f32 %v3194
    %v3199 = vcvt.s32.f32 %v3195
    %v3200 = vcvt.s32.f32 %v3196
    %v3201 = vadd.f32 %v3181, %v3197
    %v3202 = vadd.f32 %v3182, %v3198
    %v3203 = vadd.f32 %v3183, %v3199
    %v3204 = vadd.f32 %v3184, %v3200
    %v3205 = vlaneseq
    %v3206 = vshrl.u32 %v3205, 7
    %v3207 = vsub.s32 0, %v3206
    %v3208 = vrot.slane %v3030, %v3207
    %vm3209 = vcmp.gt.f32.partialorder %v3208, %v3024
    %vm3210 = vcmp.gt.f32.partialorder %v3208, %v3030
    %vm3211 = vcmp.gt.f32.partialorder %v3208, %v3036
    %vm3212 = vcmp.gt.f32.partialorder %v3208, %v3042
    %v3213 = vsel %vm3209, 1, 0
    %v3214 = vsel %vm3210, 1, 0
    %v3215 = vsel %vm3211, 1, 0
    %v3216 = vsel %vm3212, 1, 0
    %v3217 = vcvt.s32.f32 %v3213
    %v3218 = vcvt.s32.f32 %v3214
    %v3219 = vcvt.s32.f32 %v3215
    %v3220 = vcvt.s32.f32 %v3216
    %v3221 = vadd.f32 %v3201, %v3217
    %v3222 = vadd.f32 %v3202, %v3218
    %v3223 = vadd.f32 %v3203, %v3219
    %v3224 = vadd.f32 %v3204, %v3220
    %v3225 = vlaneseq
    %v3226 = vshrl.u32 %v3225, 7
    %v3227 = vsub.s32 1, %v3226
    %v3228 = vrot.slane %v3030, %v3227
    %vm3229 = vcmp.gt.f32.partialorder %v3228, %v3024
    %vm3230 = vcmp.gt.f32.partialorder %v3228, %v3030
    %vm3231 = vcmp.gt.f32.partialorder %v3228, %v3036
    %vm3232 = vcmp.gt.f32.partialorder %v3228, %v3042
    %v3233 = vsel %vm3229, 1, 0
    %v3234 = vsel %vm3230, 1, 0
    %v3235 = vsel %vm3231, 1, 0
    %v3236 = vsel %vm3232, 1, 0
    %v3237 = vcvt.s32.f32 %v3233
    %v3238 = vcvt.s32.f32 %v3234
    %v3239 = vcvt.s32.f32 %v3235
    %v3240 = vcvt.s32.f32 %v3236
    %v3241 = vadd.f32 %v3221, %v3237
    %v3242 = vadd.f32 %v3222, %v3238
    %v3243 = vadd.f32 %v3223, %v3239
    %v3244 = vadd.f32 %v3224, %v3240
    %v3245 = vlaneseq
    %v3246 = vshrl.u32 %v3245, 7
    %v3247 = vsub.s32 2, %v3246
    %v3248 = vrot.slane %v3030, %v3247
    %vm3249 = vcmp.gt.f32.partialorder %v3248, %v3024
    %vm3250 = vcmp.gt.f32.partialorder %v3248, %v3030
    %vm3251 = vcmp.gt.f32.partialorder %v3248, %v3036
    %vm3252 = vcmp.gt.f32.partialorder %v3248, %v3042
    %v3253 = vsel %vm3249, 1, 0
    %v3254 = vsel %vm3250, 1, 0
    %v3255 = vsel %vm3251, 1, 0
    %v3256 = vsel %vm3252, 1, 0
    %v3257 = vcvt.s32.f32 %v3253
    %v3258 = vcvt.s32.f32 %v3254
    %v3259 = vcvt.s32.f32 %v3255
    %v3260 = vcvt.s32.f32 %v3256
    %v3261 = vadd.f32 %v3241, %v3257
    %v3262 = vadd.f32 %v3242, %v3258
    %v3263 = vadd.f32 %v3243, %v3259
    %v3264 = vadd.f32 %v3244, %v3260
    %v3265 = vlaneseq
    %v3266 = vshrl.u32 %v3265, 7
    %v3267 = vsub.s32 3, %v3266
    %v3268 = vrot.slane %v3030, %v3267
    %vm3269 = vcmp.gt.f32.partialorder %v3268, %v3024
    %vm3270 = vcmp.gt.f32.partialorder %v3268, %v3030
    %vm3271 = vcmp.gt.f32.partialorder %v3268, %v3036
    %vm3272 = vcmp.gt.f32.partialorder %v3268, %v3042
    %v3273 = vsel %vm3269, 1, 0
    %v3274 = vsel %vm3270, 1, 0
    %v3275 = vsel %vm3271, 1, 0
    %v3276 = vsel %vm3272, 1, 0
    %v3277 = vcvt.s32.f32 %v3273
    %v3278 = vcvt.s32.f32 %v3274
    %v3279 = vcvt.s32.f32 %v3275
    %v3280 = vcvt.s32.f32 %v3276
    %v3281 = vadd.f32 %v3261, %v3277
    %v3282 = vadd.f32 %v3262, %v3278
    %v3283 = vadd.f32 %v3263, %v3279
    %v3284 = vadd.f32 %v3264, %v3280
    %v3285 = vlaneseq
    %v3286 = vshrl.u32 %v3285, 7
    %v3287 = vsub.s32 4, %v3286
    %v3288 = vrot.slane %v3030, %v3287
    %vm3289 = vcmp.gt.f32.partialorder %v3288, %v3024
    %vm3290 = vcmp.gt.f32.partialorder %v3288, %v3030
    %vm3291 = vcmp.gt.f32.partialorder %v3288, %v3036
    %vm3292 = vcmp.gt.f32.partialorder %v3288, %v3042
    %v3293 = vsel %vm3289, 1, 0
    %v3294 = vsel %vm3290, 1, 0
    %v3295 = vsel %vm3291, 1, 0
    %v3296 = vsel %vm3292, 1, 0
    %v3297 = vcvt.s32.f32 %v3293
    %v3298 = vcvt.s32.f32 %v3294
    %v3299 = vcvt.s32.f32 %v3295
    %v3300 = vcvt.s32.f32 %v3296
    %v3301 = vadd.f32 %v3281, %v3297
    %v3302 = vadd.f32 %v3282, %v3298
    %v3303 = vadd.f32 %v3283, %v3299
    %v3304 = vadd.f32 %v3284, %v3300
    %v3305 = vlaneseq
    %v3306 = vshrl.u32 %v3305, 7
    %v3307 = vsub.s32 5, %v3306
    %v3308 = vrot.slane %v3030, %v3307
    %vm3309 = vcmp.gt.f32.partialorder %v3308, %v3024
    %vm3310 = vcmp.gt.f32.partialorder %v3308, %v3030
    %vm3311 = vcmp.gt.f32.partialorder %v3308, %v3036
    %vm3312 = vcmp.gt.f32.partialorder %v3308, %v3042
    %v3313 = vsel %vm3309, 1, 0
    %v3314 = vsel %vm3310, 1, 0
    %v3315 = vsel %vm3311, 1, 0
    %v3316 = vsel %vm3312, 1, 0
    %v3317 = vcvt.s32.f32 %v3313
    %v3318 = vcvt.s32.f32 %v3314
    %v3319 = vcvt.s32.f32 %v3315
    %v3320 = vcvt.s32.f32 %v3316
    %v3321 = vadd.f32 %v3301, %v3317
    %v3322 = vadd.f32 %v3302, %v3318
    %v3323 = vadd.f32 %v3303, %v3319
    %v3324 = vadd.f32 %v3304, %v3320
    %v3325 = vlaneseq
    %v3326 = vshrl.u32 %v3325, 7
    %v3327 = vsub.s32 6, %v3326
    %v3328 = vrot.slane %v3030, %v3327
    %vm3329 = vcmp.gt.f32.partialorder %v3328, %v3024
    %vm3330 = vcmp.gt.f32.partialorder %v3328, %v3030
    %vm3331 = vcmp.gt.f32.partialorder %v3328, %v3036
    %vm3332 = vcmp.gt.f32.partialorder %v3328, %v3042
    %v3333 = vsel %vm3329, 1, 0
    %v3334 = vsel %vm3330, 1, 0
    %v3335 = vsel %vm3331, 1, 0
    %v3336 = vsel %vm3332, 1, 0
    %v3337 = vcvt.s32.f32 %v3333
    %v3338 = vcvt.s32.f32 %v3334
    %v3339 = vcvt.s32.f32 %v3335
    %v3340 = vcvt.s32.f32 %v3336
    %v3341 = vadd.f32 %v3321, %v3337
    %v3342 = vadd.f32 %v3322, %v3338
    %v3343 = vadd.f32 %v3323, %v3339
    %v3344 = vadd.f32 %v3324, %v3340
    %v3345 = vlaneseq
    %v3346 = vshrl.u32 %v3345, 7
    %v3347 = vsub.s32 7, %v3346
    %v3348 = vrot.slane %v3030, %v3347
    %vm3349 = vcmp.gt.f32.partialorder %v3348, %v3024
    %vm3350 = vcmp.gt.f32.partialorder %v3348, %v3030
    %vm3351 = vcmp.gt.f32.partialorder %v3348, %v3036
    %vm3352 = vcmp.gt.f32.partialorder %v3348, %v3042
    %v3353 = vsel %vm3349, 1, 0
    %v3354 = vsel %vm3350, 1, 0
    %v3355 = vsel %vm3351, 1, 0
    %v3356 = vsel %vm3352, 1, 0
    %v3357 = vcvt.s32.f32 %v3353
    %v3358 = vcvt.s32.f32 %v3354
    %v3359 = vcvt.s32.f32 %v3355
    %v3360 = vcvt.s32.f32 %v3356
    %v3361 = vadd.f32 %v3341, %v3357
    %v3362 = vadd.f32 %v3342, %v3358
    %v3363 = vadd.f32 %v3343, %v3359
    %v3364 = vadd.f32 %v3344, %v3360
    %v3365 = vlaneseq
    %v3366 = vshrl.u32 %v3365, 7
    %v3367 = vsub.s32 0, %v3366
    %v3368 = vrot.slane %v3036, %v3367
    %vm3369 = vcmp.gt.f32.partialorder %v3368, %v3024
    %vm3370 = vcmp.gt.f32.partialorder %v3368, %v3030
    %vm3371 = vcmp.gt.f32.partialorder %v3368, %v3036
    %vm3372 = vcmp.gt.f32.partialorder %v3368, %v3042
    %v3373 = vsel %vm3369, 1, 0
    %v3374 = vsel %vm3370, 1, 0
    %v3375 = vsel %vm3371, 1, 0
    %v3376 = vsel %vm3372, 1, 0
    %v3377 = vcvt.s32.f32 %v3373
    %v3378 = vcvt.s32.f32 %v3374
    %v3379 = vcvt.s32.f32 %v3375
    %v3380 = vcvt.s32.f32 %v3376
    %v3381 = vadd.f32 %v3361, %v3377
    %v3382 = vadd.f32 %v3362, %v3378
    %v3383 = vadd.f32 %v3363, %v3379
    %v3384 = vadd.f32 %v3364, %v3380
    %v3385 = vlaneseq
    %v3386 = vshrl.u32 %v3385, 7
    %v3387 = vsub.s32 1, %v3386
    %v3388 = vrot.slane %v3036, %v3387
    %vm3389 = vcmp.gt.f32.partialorder %v3388, %v3024
    %vm3390 = vcmp.gt.f32.partialorder %v3388, %v3030
    %vm3391 = vcmp.gt.f32.partialorder %v3388, %v3036
    %vm3392 = vcmp.gt.f32.partialorder %v3388, %v3042
    %v3393 = vsel %vm3389, 1, 0
    %v3394 = vsel %vm3390, 1, 0
    %v3395 = vsel %vm3391, 1, 0
    %v3396 = vsel %vm3392, 1, 0
    %v3397 = vcvt.s32.f32 %v3393
    %v3398 = vcvt.s32.f32 %v3394
    %v3399 = vcvt.s32.f32 %v3395
    %v3400 = vcvt.s32.f32 %v3396
    %v3401 = vadd.f32 %v3381, %v3397
    %v3402 = vadd.f32 %v3382, %v3398
    %v3403 = vadd.f32 %v3383, %v3399
    %v3404 = vadd.f32 %v3384, %v3400
    %v3405 = vlaneseq
    %v3406 = vshrl.u32 %v3405, 7
    %v3407 = vsub.s32 2, %v3406
    %v3408 = vrot.slane %v3036, %v3407
    %vm3409 = vcmp.gt.f32.partialorder %v3408, %v3024
    %vm3410 = vcmp.gt.f32.partialorder %v3408, %v3030
    %vm3411 = vcmp.gt.f32.partialorder %v3408, %v3036
    %vm3412 = vcmp.gt.f32.partialorder %v3408, %v3042
    %v3413 = vsel %vm3409, 1, 0
    %v3414 = vsel %vm3410, 1, 0
    %v3415 = vsel %vm3411, 1, 0
    %v3416 = vsel %vm3412, 1, 0
    %v3417 = vcvt.s32.f32 %v3413
    %v3418 = vcvt.s32.f32 %v3414
    %v3419 = vcvt.s32.f32 %v3415
    %v3420 = vcvt.s32.f32 %v3416
    %v3421 = vadd.f32 %v3401, %v3417
    %v3422 = vadd.f32 %v3402, %v3418
    %v3423 = vadd.f32 %v3403, %v3419
    %v3424 = vadd.f32 %v3404, %v3420
    %v3425 = vlaneseq
    %v3426 = vshrl.u32 %v3425, 7
    %v3427 = vsub.s32 3, %v3426
    %v3428 = vrot.slane %v3036, %v3427
    %vm3429 = vcmp.gt.f32.partialorder %v3428, %v3024
    %vm3430 = vcmp.gt.f32.partialorder %v3428, %v3030
    %vm3431 = vcmp.gt.f32.partialorder %v3428, %v3036
    %vm3432 = vcmp.gt.f32.partialorder %v3428, %v3042
    %v3433 = vsel %vm3429, 1, 0
    %v3434 = vsel %vm3430, 1, 0
    %v3435 = vsel %vm3431, 1, 0
    %v3436 = vsel %vm3432, 1, 0
    %v3437 = vcvt.s32.f32 %v3433
    %v3438 = vcvt.s32.f32 %v3434
    %v3439 = vcvt.s32.f32 %v3435
    %v3440 = vcvt.s32.f32 %v3436
    %v3441 = vadd.f32 %v3421, %v3437
    %v3442 = vadd.f32 %v3422, %v3438
    %v3443 = vadd.f32 %v3423, %v3439
    %v3444 = vadd.f32 %v3424, %v3440
    %v3445 = vlaneseq
    %v3446 = vshrl.u32 %v3445, 7
    %v3447 = vsub.s32 4, %v3446
    %v3448 = vrot.slane %v3036, %v3447
    %vm3449 = vcmp.gt.f32.partialorder %v3448, %v3024
    %vm3450 = vcmp.gt.f32.partialorder %v3448, %v3030
    %vm3451 = vcmp.gt.f32.partialorder %v3448, %v3036
    %vm3452 = vcmp.gt.f32.partialorder %v3448, %v3042
    %v3453 = vsel %vm3449, 1, 0
    %v3454 = vsel %vm3450, 1, 0
    %v3455 = vsel %vm3451, 1, 0
    %v3456 = vsel %vm3452, 1, 0
    %v3457 = vcvt.s32.f32 %v3453
    %v3458 = vcvt.s32.f32 %v3454
    %v3459 = vcvt.s32.f32 %v3455
    %v3460 = vcvt.s32.f32 %v3456
    %v3461 = vadd.f32 %v3441, %v3457
    %v3462 = vadd.f32 %v3442, %v3458
    %v3463 = vadd.f32 %v3443, %v3459
    %v3464 = vadd.f32 %v3444, %v3460
    %v3465 = vlaneseq
    %v3466 = vshrl.u32 %v3465, 7
    %v3467 = vsub.s32 5, %v3466
    %v3468 = vrot.slane %v3036, %v3467
    %vm3469 = vcmp.gt.f32.partialorder %v3468, %v3024
    %vm3470 = vcmp.gt.f32.partialorder %v3468, %v3030
    %vm3471 = vcmp.gt.f32.partialorder %v3468, %v3036
    %vm3472 = vcmp.gt.f32.partialorder %v3468, %v3042
    %v3473 = vsel %vm3469, 1, 0
    %v3474 = vsel %vm3470, 1, 0
    %v3475 = vsel %vm3471, 1, 0
    %v3476 = vsel %vm3472, 1, 0
    %v3477 = vcvt.s32.f32 %v3473
    %v3478 = vcvt.s32.f32 %v3474
    %v3479 = vcvt.s32.f32 %v3475
    %v3480 = vcvt.s32.f32 %v3476
    %v3481 = vadd.f32 %v3461, %v3477
    %v3482 = vadd.f32 %v3462, %v3478
    %v3483 = vadd.f32 %v3463, %v3479
    %v3484 = vadd.f32 %v3464, %v3480
    %v3485 = vlaneseq
    %v3486 = vshrl.u32 %v3485, 7
    %v3487 = vsub.s32 6, %v3486
    %v3488 = vrot.slane %v3036, %v3487
    %vm3489 = vcmp.gt.f32.partialorder %v3488, %v3024
    %vm3490 = vcmp.gt.f32.partialorder %v3488, %v3030
    %vm3491 = vcmp.gt.f32.partialorder %v3488, %v3036
    %vm3492 = vcmp.gt.f32.partialorder %v3488, %v3042
    %v3493 = vsel %vm3489, 1, 0
    %v3494 = vsel %vm3490, 1, 0
    %v3495 = vsel %vm3491, 1, 0
    %v3496 = vsel %vm3492, 1, 0
    %v3497 = vcvt.s32.f32 %v3493
    %v3498 = vcvt.s32.f32 %v3494
    %v3499 = vcvt.s32.f32 %v3495
    %v3500 = vcvt.s32.f32 %v3496
    %v3501 = vadd.f32 %v3481, %v3497
    %v3502 = vadd.f32 %v3482, %v3498
    %v3503 = vadd.f32 %v3483, %v3499
    %v3504 = vadd.f32 %v3484, %v3500
    %v3505 = vlaneseq
    %v3506 = vshrl.u32 %v3505, 7
    %v3507 = vsub.s32 7, %v3506
    %v3508 = vrot.slane %v3036, %v3507
    %vm3509 = vcmp.gt.f32.partialorder %v3508, %v3024
    %vm3510 = vcmp.gt.f32.partialorder %v3508, %v3030
    %vm3511 = vcmp.gt.f32.partialorder %v3508, %v3036
    %vm3512 = vcmp.gt.f32.partialorder %v3508, %v3042
    %v3513 = vsel %vm3509, 1, 0
    %v3514 = vsel %vm3510, 1, 0
    %v3515 = vsel %vm3511, 1, 0
    %v3516 = vsel %vm3512, 1, 0
    %v3517 = vcvt.s32.f32 %v3513
    %v3518 = vcvt.s32.f32 %v3514
    %v3519 = vcvt.s32.f32 %v3515
    %v3520 = vcvt.s32.f32 %v3516
    %v3521 = vadd.f32 %v3501, %v3517
    %v3522 = vadd.f32 %v3502, %v3518
    %v3523 = vadd.f32 %v3503, %v3519
    %v3524 = vadd.f32 %v3504, %v3520
    %v3525 = vlaneseq
    %v3526 = vshrl.u32 %v3525, 7
    %v3527 = vsub.s32 0, %v3526
    %v3528 = vrot.slane %v3042, %v3527
    %vm3529 = vcmp.gt.f32.partialorder %v3528, %v3024
    %vm3530 = vcmp.gt.f32.partialorder %v3528, %v3030
    %vm3531 = vcmp.gt.f32.partialorder %v3528, %v3036
    %vm3532 = vcmp.gt.f32.partialorder %v3528, %v3042
    %v3533 = vsel %vm3529, 1, 0
    %v3534 = vsel %vm3530, 1, 0
    %v3535 = vsel %vm3531, 1, 0
    %v3536 = vsel %vm3532, 1, 0
    %v3537 = vcvt.s32.f32 %v3533
    %v3538 = vcvt.s32.f32 %v3534
    %v3539 = vcvt.s32.f32 %v3535
    %v3540 = vcvt.s32.f32 %v3536
    %v3541 = vadd.f32 %v3521, %v3537
    %v3542 = vadd.f32 %v3522, %v3538
    %v3543 = vadd.f32 %v3523, %v3539
    %v3544 = vadd.f32 %v3524, %v3540
    %v3545 = vlaneseq
    %v3546 = vshrl.u32 %v3545, 7
    %v3547 = vsub.s32 1, %v3546
    %v3548 = vrot.slane %v3042, %v3547
    %vm3549 = vcmp.gt.f32.partialorder %v3548, %v3024
    %vm3550 = vcmp.gt.f32.partialorder %v3548, %v3030
    %vm3551 = vcmp.gt.f32.partialorder %v3548, %v3036
    %vm3552 = vcmp.gt.f32.partialorder %v3548, %v3042
    %v3553 = vsel %vm3549, 1, 0
    %v3554 = vsel %vm3550, 1, 0
    %v3555 = vsel %vm3551, 1, 0
    %v3556 = vsel %vm3552, 1, 0
    %v3557 = vcvt.s32.f32 %v3553
    %v3558 = vcvt.s32.f32 %v3554
    %v3559 = vcvt.s32.f32 %v3555
    %v3560 = vcvt.s32.f32 %v3556
    %v3561 = vadd.f32 %v3541, %v3557
    %v3562 = vadd.f32 %v3542, %v3558
    %v3563 = vadd.f32 %v3543, %v3559
    %v3564 = vadd.f32 %v3544, %v3560
    %v3565 = vlaneseq
    %v3566 = vshrl.u32 %v3565, 7
    %v3567 = vsub.s32 2, %v3566
    %v3568 = vrot.slane %v3042, %v3567
    %vm3569 = vcmp.gt.f32.partialorder %v3568, %v3024
    %vm3570 = vcmp.gt.f32.partialorder %v3568, %v3030
    %vm3571 = vcmp.gt.f32.partialorder %v3568, %v3036
    %vm3572 = vcmp.gt.f32.partialorder %v3568, %v3042
    %v3573 = vsel %vm3569, 1, 0
    %v3574 = vsel %vm3570, 1, 0
    %v3575 = vsel %vm3571, 1, 0
    %v3576 = vsel %vm3572, 1, 0
    %v3577 = vcvt.s32.f32 %v3573
    %v3578 = vcvt.s32.f32 %v3574
    %v3579 = vcvt.s32.f32 %v3575
    %v3580 = vcvt.s32.f32 %v3576
    %v3581 = vadd.f32 %v3561, %v3577
    %v3582 = vadd.f32 %v3562, %v3578
    %v3583 = vadd.f32 %v3563, %v3579
    %v3584 = vadd.f32 %v3564, %v3580
    %v3585 = vlaneseq
    %v3586 = vshrl.u32 %v3585, 7
    %v3587 = vsub.s32 3, %v3586
    %v3588 = vrot.slane %v3042, %v3587
    %vm3589 = vcmp.gt.f32.partialorder %v3588, %v3024
    %vm3590 = vcmp.gt.f32.partialorder %v3588, %v3030
    %vm3591 = vcmp.gt.f32.partialorder %v3588, %v3036
    %vm3592 = vcmp.gt.f32.partialorder %v3588, %v3042
    %v3593 = vsel %vm3589, 1, 0
    %v3594 = vsel %vm3590, 1, 0
    %v3595 = vsel %vm3591, 1, 0
    %v3596 = vsel %vm3592, 1, 0
    %v3597 = vcvt.s32.f32 %v3593
    %v3598 = vcvt.s32.f32 %v3594
    %v3599 = vcvt.s32.f32 %v3595
    %v3600 = vcvt.s32.f32 %v3596
    %v3601 = vadd.f32 %v3581, %v3597
    %v3602 = vadd.f32 %v3582, %v3598
    %v3603 = vadd.f32 %v3583, %v3599
    %v3604 = vadd.f32 %v3584, %v3600
    %v3605 = vlaneseq
    %v3606 = vshrl.u32 %v3605, 7
    %v3607 = vsub.s32 4, %v3606
    %v3608 = vrot.slane %v3042, %v3607
    %vm3609 = vcmp.gt.f32.partialorder %v3608, %v3024
    %vm3610 = vcmp.gt.f32.partialorder %v3608, %v3030
    %vm3611 = vcmp.gt.f32.partialorder %v3608, %v3036
    %vm3612 = vcmp.gt.f32.partialorder %v3608, %v3042
    %v3613 = vsel %vm3609, 1, 0
    %v3614 = vsel %vm3610, 1, 0
    %v3615 = vsel %vm3611, 1, 0
    %v3616 = vsel %vm3612, 1, 0
    %v3617 = vcvt.s32.f32 %v3613
    %v3618 = vcvt.s32.f32 %v3614
    %v3619 = vcvt.s32.f32 %v3615
    %v3620 = vcvt.s32.f32 %v3616
    %v3621 = vadd.f32 %v3601, %v3617
    %v3622 = vadd.f32 %v3602, %v3618
    %v3623 = vadd.f32 %v3603, %v3619
    %v3624 = vadd.f32 %v3604, %v3620
    %v3625 = vlaneseq
    %v3626 = vshrl.u32 %v3625, 7
    %v3627 = vsub.s32 5, %v3626
    %v3628 = vrot.slane %v3042, %v3627
    %vm3629 = vcmp.gt.f32.partialorder %v3628, %v3024
    %vm3630 = vcmp.gt.f32.partialorder %v3628, %v3030
    %vm3631 = vcmp.gt.f32.partialorder %v3628, %v3036
    %vm3632 = vcmp.gt.f32.partialorder %v3628, %v3042
    %v3633 = vsel %vm3629, 1, 0
    %v3634 = vsel %vm3630, 1, 0
    %v3635 = vsel %vm3631, 1, 0
    %v3636 = vsel %vm3632, 1, 0
    %v3637 = vcvt.s32.f32 %v3633
    %v3638 = vcvt.s32.f32 %v3634
    %v3639 = vcvt.s32.f32 %v3635
    %v3640 = vcvt.s32.f32 %v3636
    %v3641 = vadd.f32 %v3621, %v3637
    %v3642 = vadd.f32 %v3622, %v3638
    %v3643 = vadd.f32 %v3623, %v3639
    %v3644 = vadd.f32 %v3624, %v3640
    %v3645 = vlaneseq
    %v3646 = vshrl.u32 %v3645, 7
    %v3647 = vsub.s32 6, %v3646
    %v3648 = vrot.slane %v3042, %v3647
    %vm3649 = vcmp.gt.f32.partialorder %v3648, %v3024
    %vm3650 = vcmp.gt.f32.partialorder %v3648, %v3030
    %vm3651 = vcmp.gt.f32.partialorder %v3648, %v3036
    %vm3652 = vcmp.gt.f32.partialorder %v3648, %v3042
    %v3653 = vsel %vm3649, 1, 0
    %v3654 = vsel %vm3650, 1, 0
    %v3655 = vsel %vm3651, 1, 0
    %v3656 = vsel %vm3652, 1, 0
    %v3657 = vcvt.s32.f32 %v3653
    %v3658 = vcvt.s32.f32 %v3654
    %v3659 = vcvt.s32.f32 %v3655
    %v3660 = vcvt.s32.f32 %v3656
    %v3661 = vadd.f32 %v3641, %v3657
    %v3662 = vadd.f32 %v3642, %v3658
    %v3663 = vadd.f32 %v3643, %v3659
    %v3664 = vadd.f32 %v3644, %v3660
    %v3665 = vlaneseq
    %v3666 = vshrl.u32 %v3665, 7
    %v3667 = vsub.s32 7, %v3666
    %v3668 = vrot.slane %v3042, %v3667
    %vm3669 = vcmp.gt.f32.partialorder %v3668, %v3024
    %vm3670 = vcmp.gt.f32.partialorder %v3668, %v3030
    %vm3671 = vcmp.gt.f32.partialorder %v3668, %v3036
    %vm3672 = vcmp.gt.f32.partialorder %v3668, %v3042
    %v3673 = vsel %vm3669, 1, 0
    %v3674 = vsel %vm3670, 1, 0
    %v3675 = vsel %vm3671, 1, 0
    %v3676 = vsel %vm3672, 1, 0
    %v3677 = vcvt.s32.f32 %v3673
    %v3678 = vcvt.s32.f32 %v3674
    %v3679 = vcvt.s32.f32 %v3675
    %v3680 = vcvt.s32.f32 %v3676
    %v3681 = vadd.f32 %v3661, %v3677
    %v3682 = vadd.f32 %v3662, %v3678
    %v3683 = vadd.f32 %v3663, %v3679
    %v3684 = vadd.f32 %v3664, %v3680
    %vm3685 = vcmp.lt.f32.partialorder %v3681, 19.0
    %vm3686 = vcmp.lt.f32.partialorder %v3682, 19.0
    %vm3687 = vcmp.lt.f32.partialorder %v3683, 19.0
    %vm3688 = vcmp.lt.f32.partialorder %v3684, 19.0
    %v3689 = vsel %vm3685, %v3024, 0.0
    %v3690 = vsel %vm3686, %v3030, 0.0
    %v3691 = vsel %vm3687, %v3036, 0.0
    %v3692 = vsel %vm3688, %v3042, 0.0
    %3693 = vst [vmem:[#allocation9] sm:$0xff] %v3689
    %3694 = vst [vmem:[#allocation9 + $0x8] sm:$0xff] %v3690
    %3695 = vst [vmem:[#allocation9 + $0x10] sm:$0xff] %v3691
    %3696 = vst [vmem:[#allocation9 + $0x18] sm:$0xff] %v3692
    %3697 = vmatprep.subr.mxu0 0.0
    %v3698 = vand.u32 %v3689, 4294901760
    %3699 = vmatpush1.msra.mxu0 %v3698
    %3700 = vmatprep.subr.mxu0 0.0
    %v3701 = vand.u32 %v3690, 4294901760
    %3702 = vmatpush1.msra.mxu0 %v3701
    %3703 = vmatprep.subr.mxu0 0.0
    %v3704 = vand.u32 %v3691, 4294901760
    %3705 = vmatpush1.msra.mxu0 %v3704
    %3706 = vmatprep.subr.mxu0 0.0
    %v3707 = vand.u32 %v3692, 4294901760
    %3708 = vmatpush1.msra.mxu0 %v3707
    %3709 = vmatprep.subr.mxu0 0.0
    %3710 = vmatpush1.msra.mxu0 0.0
    %3711 = vmatprep.subr.mxu0 0.0
    %3712 = vmatpush1.msra.mxu0 0.0
    %3713 = vmatprep.subr.mxu0 0.0
    %3714 = vmatpush1.msra.mxu0 0.0
    %3715 = vmatprep.subr.mxu0 0.0
    %3716 = vmatpush1.msra.mxu0 0.0
    %3717 = vmatprep.subr.mxu0 0.0
    %3718 = vmatpush1.msra.mxu0 0.0
    %3719 = vmatprep.subr.mxu0 0.0
    %3720 = vmatpush1.msra.mxu0 0.0
    %3721 = vmatprep.subr.mxu0 0.0
    %3722 = vmatpush1.msra.mxu0 0.0
    %3723 = vmatprep.subr.mxu0 0.0
    %3724 = vmatpush1.msra.mxu0 0.0
    %3725 = vmatprep.subr.mxu0 0.0
    %3726 = vmatpush1.msra.mxu0 0.0
    %3727 = vmatprep.subr.mxu0 0.0
    %3728 = vmatpush1.msra.mxu0 0.0
    %3729 = vmatprep.subr.mxu0 0.0
    %3730 = vmatpush1.msra.mxu0 0.0
    %3731 = vmatprep.subr.mxu0 0.0
    %3732 = vmatpush1.msra.mxu0 0.0
    %3733 = vmatprep.subr.mxu0 0.0
    %3734 = vmatpush1.msra.mxu0 0.0
    %3735 = vmatprep.subr.mxu0 0.0
    %3736 = vmatpush1.msra.mxu0 0.0
    %3737 = vmatprep.subr.mxu0 0.0
    %3738 = vmatpush1.msra.mxu0 0.0
    %3739 = vmatprep.subr.mxu0 0.0
    %3740 = vmatpush1.msra.mxu0 0.0
    %3741 = vmatprep.subr.mxu0 0.0
    %3742 = vmatpush1.msra.mxu0 0.0
    %3743 = vmatprep.subr.mxu0 0.0
    %3744 = vmatpush1.msra.mxu0 0.0
    %3745 = vmatprep.subr.mxu0 0.0
    %3746 = vmatpush1.msra.mxu0 0.0
    %3747 = vmatprep.subr.mxu0 0.0
    %3748 = vmatpush1.msra.mxu0 0.0
    %3749 = vmatprep.subr.mxu0 0.0
    %3750 = vmatpush1.msra.mxu0 0.0
    %3751 = vmatprep.subr.mxu0 0.0
    %3752 = vmatpush1.msra.mxu0 0.0
    %3753 = vmatprep.subr.mxu0 0.0
    %3754 = vmatpush1.msra.mxu0 0.0
    %3755 = vmatprep.subr.mxu0 0.0
    %3756 = vmatpush1.msra.mxu0 0.0
    %3757 = vmatprep.subr.mxu0 0.0
    %3758 = vmatpush1.msra.mxu0 0.0
    %3759 = vmatprep.subr.mxu0 0.0
    %3760 = vmatpush1.msra.mxu0 0.0
    %3761 = vmatprep.subr.mxu0 0.0
    %3762 = vmatpush1.msra.mxu0 0.0
    %3763 = vmatprep.subr.mxu0 0.0
    %3764 = vmatpush1.msra.mxu0 0.0
    %3765 = vmatprep.mubr.f32.mxu0 0.0
    %v3766 = vand.u32 %v1854, 4294901760
    %v3767 = vsub.f32 %v1854, %v3766
    %v3768 = vand.u32 %v3767, 4294901760
    %v3769 = vsub.f32 %v3767, %v3768
    %v3770 = vand.u32 %v3769, 4294901760
    %3771 = vmatmul.mubr.f32.gmra.mrb[0].mxu0 %v3770
    %v3772 = vpop.f32.mrb[0].mxu0
    %v3773 = vadd.f32 %v1850, %v3772
    %v3774 = vpop.f32.mrb[0].mxu0
    %3775 = vdwg.mxu0
    %3776 = vmatprep.subr.mxu0 0.0
    %v3777 = vand.u32 %v3689, 4294901760
    %v3778 = vsub.f32 %v3689, %v3777
    %v3779 = vand.u32 %v3778, 4294901760
    %v3780 = vsub.f32 %v3778, %v3779
    %v3781 = vand.u32 %v3780, 4294901760
    %3782 = vmatpush1.msra.mxu0 %v3781
    %3783 = vmatprep.subr.mxu0 0.0
    %v3784 = vand.u32 %v3690, 4294901760
    %v3785 = vsub.f32 %v3690, %v3784
    %v3786 = vand.u32 %v3785, 4294901760
    %v3787 = vsub.f32 %v3785, %v3786
    %v3788 = vand.u32 %v3787, 4294901760
    %3789 = vmatpush1.msra.mxu0 %v3788
    %3790 = vmatprep.subr.mxu0 0.0
    %v3791 = vand.u32 %v3691, 4294901760
    %v3792 = vsub.f32 %v3691, %v3791
    %v3793 = vand.u32 %v3792, 4294901760
    %v3794 = vsub.f32 %v3792, %v3793
    %v3795 = vand.u32 %v3794, 4294901760
    %3796 = vmatpush1.msra.mxu0 %v3795
    %3797 = vmatprep.subr.mxu0 0.0
    %v3798 = vand.u32 %v3692, 4294901760
    %v3799 = vsub.f32 %v3692, %v3798
    %v3800 = vand.u32 %v3799, 4294901760
    %v3801 = vsub.f32 %v3799, %v3800
    %v3802 = vand.u32 %v3801, 4294901760
    %3803 = vmatpush1.msra.mxu0 %v3802
    %3804 = vmatprep.subr.mxu0 0.0
    %3805 = vmatpush1.msra.mxu0 0.0
    %3806 = vmatprep.subr.mxu0 0.0
    %3807 = vmatpush1.msra.mxu0 0.0
    %3808 = vmatprep.subr.mxu0 0.0
    %3809 = vmatpush1.msra.mxu0 0.0
    %3810 = vmatprep.subr.mxu0 0.0
    %3811 = vmatpush1.msra.mxu0 0.0
    %3812 = vmatprep.subr.mxu0 0.0
    %3813 = vmatpush1.msra.mxu0 0.0
    %3814 = vmatprep.subr.mxu0 0.0
    %3815 = vmatpush1.msra.mxu0 0.0
    %3816 = vmatprep.subr.mxu0 0.0
    %3817 = vmatpush1.msra.mxu0 0.0
    %3818 = vmatprep.subr.mxu0 0.0
    %3819 = vmatpush1.msra.mxu0 0.0
    %3820 = vmatprep.subr.mxu0 0.0
    %3821 = vmatpush1.msra.mxu0 0.0
    %3822 = vmatprep.subr.mxu0 0.0
    %3823 = vmatpush1.msra.mxu0 0.0
    %3824 = vmatprep.subr.mxu0 0.0
    %3825 = vmatpush1.msra.mxu0 0.0
    %3826 = vmatprep.subr.mxu0 0.0
    %3827 = vmatpush1.msra.mxu0 0.0
    %3828 = vmatprep.subr.mxu0 0.0
    %3829 = vmatpush1.msra.mxu0 0.0
    %3830 = vmatprep.subr.mxu0 0.0
    %3831 = vmatpush1.msra.mxu0 0.0
    %3832 = vmatprep.subr.mxu0 0.0
    %3833 = vmatpush1.msra.mxu0 0.0
    %3834 = vmatprep.subr.mxu0 0.0
    %3835 = vmatpush1.msra.mxu0 0.0
    %3836 = vmatprep.subr.mxu0 0.0
    %3837 = vmatpush1.msra.mxu0 0.0
    %3838 = vmatprep.subr.mxu0 0.0
    %3839 = vmatpush1.msra.mxu0 0.0
    %3840 = vmatprep.subr.mxu0 0.0
    %3841 = vmatpush1.msra.mxu0 0.0
    %3842 = vmatprep.subr.mxu0 0.0
    %3843 = vmatpush1.msra.mxu0 0.0
    %3844 = vmatprep.subr.mxu0 0.0
    %3845 = vmatpush1.msra.mxu0 0.0
    %3846 = vmatprep.subr.mxu0 0.0
    %3847 = vmatpush1.msra.mxu0 0.0
    %3848 = vmatprep.subr.mxu0 0.0
    %3849 = vmatpush1.msra.mxu0 0.0
    %3850 = vmatprep.subr.mxu0 0.0
    %3851 = vmatpush1.msra.mxu0 0.0
    %3852 = vmatprep.subr.mxu0 0.0
    %3853 = vmatpush1.msra.mxu0 0.0
    %3854 = vmatprep.subr.mxu0 0.0
    %3855 = vmatpush1.msra.mxu0 0.0
    %3856 = vmatprep.subr.mxu0 0.0
    %3857 = vmatpush1.msra.mxu0 0.0
    %3858 = vmatprep.subr.mxu0 0.0
    %3859 = vmatpush1.msra.mxu0 0.0
    %3860 = vmatprep.mubr.f32.mxu0 0.0
    %v3861 = vand.u32 %v1854, 4294901760
    %3862 = vmatmul.mubr.f32.gmra.mrb[0].mxu0 %v3861
    %v3863 = vpop.f32.mrb[0].mxu0
    %v3864 = vadd.f32 %v3773, %v3863
    %v3865 = vpop.f32.mrb[0].mxu0
    %3866 = vdwg.mxu0
    %3867 = vmatprep.subr.mxu0 0.0
    %v3868 = vand.u32 %v3689, 4294901760
    %v3869 = vsub.f32 %v3689, %v3868
    %3870 = vmatpush1.msra.mxu0 %v3869
    %3871 = vmatprep.subr.mxu0 0.0
    %v3872 = vand.u32 %v3690, 4294901760
    %v3873 = vsub.f32 %v3690, %v3872
    %3874 = vmatpush1.msra.mxu0 %v3873
    %3875 = vmatprep.subr.mxu0 0.0
    %v3876 = vand.u32 %v3691, 4294901760
    %v3877 = vsub.f32 %v3691, %v3876
    %3878 = vmatpush1.msra.mxu0 %v3877
    %3879 = vmatprep.subr.mxu0 0.0
    %v3880 = vand.u32 %v3692, 4294901760
    %v3881 = vsub.f32 %v3692, %v3880
    %3882 = vmatpush1.msra.mxu0 %v3881
    %3883 = vmatprep.subr.mxu0 0.0
    %3884 = vmatpush1.msra.mxu0 0.0
    %3885 = vmatprep.subr.mxu0 0.0
    %3886 = vmatpush1.msra.mxu0 0.0
    %3887 = vmatprep.subr.mxu0 0.0
    %3888 = vmatpush1.msra.mxu0 0.0
    %3889 = vmatprep.subr.mxu0 0.0
    %3890 = vmatpush1.msra.mxu0 0.0
    %3891 = vmatprep.subr.mxu0 0.0
    %3892 = vmatpush1.msra.mxu0 0.0
    %3893 = vmatprep.subr.mxu0 0.0
    %3894 = vmatpush1.msra.mxu0 0.0
    %3895 = vmatprep.subr.mxu0 0.0
    %3896 = vmatpush1.msra.mxu0 0.0
    %3897 = vmatprep.subr.mxu0 0.0
    %3898 = vmatpush1.msra.mxu0 0.0
    %3899 = vmatprep.subr.mxu0 0.0
    %3900 = vmatpush1.msra.mxu0 0.0
    %3901 = vmatprep.subr.mxu0 0.0
    %3902 = vmatpush1.msra.mxu0 0.0
    %3903 = vmatprep.subr.mxu0 0.0
    %3904 = vmatpush1.msra.mxu0 0.0
    %3905 = vmatprep.subr.mxu0 0.0
    %3906 = vmatpush1.msra.mxu0 0.0
    %3907 = vmatprep.subr.mxu0 0.0
    %3908 = vmatpush1.msra.mxu0 0.0
    %3909 = vmatprep.subr.mxu0 0.0
    %3910 = vmatpush1.msra.mxu0 0.0
    %3911 = vmatprep.subr.mxu0 0.0
    %3912 = vmatpush1.msra.mxu0 0.0
    %3913 = vmatprep.subr.mxu0 0.0
    %3914 = vmatpush1.msra.mxu0 0.0
    %3915 = vmatprep.subr.mxu0 0.0
    %3916 = vmatpush1.msra.mxu0 0.0
    %3917 = vmatprep.subr.mxu0 0.0
    %3918 = vmatpush1.msra.mxu0 0.0
    %3919 = vmatprep.subr.mxu0 0.0
    %3920 = vmatpush1.msra.mxu0 0.0
    %3921 = vmatprep.subr.mxu0 0.0
    %3922 = vmatpush1.msra.mxu0 0.0
    %3923 = vmatprep.subr.mxu0 0.0
    %3924 = vmatpush1.msra.mxu0 0.0
    %3925 = vmatprep.subr.mxu0 0.0
    %3926 = vmatpush1.msra.mxu0 0.0
    %3927 = vmatprep.subr.mxu0 0.0
    %3928 = vmatpush1.msra.mxu0 0.0
    %3929 = vmatprep.subr.mxu0 0.0
    %3930 = vmatpush1.msra.mxu0 0.0
    %3931 = vmatprep.subr.mxu0 0.0
    %3932 = vmatpush1.msra.mxu0 0.0
    %3933 = vmatprep.subr.mxu0 0.0
    %3934 = vmatpush1.msra.mxu0 0.0
    %3935 = vmatprep.subr.mxu0 0.0
    %3936 = vmatpush1.msra.mxu0 0.0
    %3937 = vmatprep.subr.mxu0 0.0
    %3938 = vmatpush1.msra.mxu0 0.0
    %3939 = vmatprep.mubr.f32.mxu0 0.0
    %v3940 = vand.u32 %v1854, 4294901760
    %v3941 = vsub.f32 %v1854, %v3940
    %3942 = vmatmul.mubr.f32.gmra.mrb[0].mxu0 %v3941
    %v3943 = vpop.f32.mrb[0].mxu0
    %v3944 = vadd.f32 %v3864, %v3943
    %v3945 = vpop.f32.mrb[0].mxu0
    %3946 = vdwg.mxu0
    %3947 = vmatprep.subr.mxu0 0.0
    %v3948 = vand.u32 %v3689, 4294901760
    %3949 = vmatpush1.msra.mxu0 %v3948
    %3950 = vmatprep.subr.mxu0 0.0
    %v3951 = vand.u32 %v3690, 4294901760
    %3952 = vmatpush1.msra.mxu0 %v3951
    %3953 = vmatprep.subr.mxu0 0.0
    %v3954 = vand.u32 %v3691, 4294901760
    %3955 = vmatpush1.msra.mxu0 %v3954
    %3956 = vmatprep.subr.mxu0 0.0
    %v3957 = vand.u32 %v3692, 4294901760
    %3958 = vmatpush1.msra.mxu0 %v3957
    %3959 = vmatprep.subr.mxu0 0.0
    %3960 = vmatpush1.msra.mxu0 0.0
    %3961 = vmatprep.subr.mxu0 0.0
    %3962 = vmatpush1.msra.mxu0 0.0
    %3963 = vmatprep.subr.mxu0 0.0
    %3964 = vmatpush1.msra.mxu0 0.0
    %3965 = vmatprep.subr.mxu0 0.0
    %3966 = vmatpush1.msra.mxu0 0.0
    %3967 = vmatprep.subr.mxu0 0.0
    %3968 = vmatpush1.msra.mxu0 0.0
    %3969 = vmatprep.subr.mxu0 0.0
    %3970 = vmatpush1.msra.mxu0 0.0
    %3971 = vmatprep.subr.mxu0 0.0
    %3972 = vmatpush1.msra.mxu0 0.0
    %3973 = vmatprep.subr.mxu0 0.0
    %3974 = vmatpush1.msra.mxu0 0.0
    %3975 = vmatprep.subr.mxu0 0.0
    %3976 = vmatpush1.msra.mxu0 0.0
    %3977 = vmatprep.subr.mxu0 0.0
    %3978 = vmatpush1.msra.mxu0 0.0
    %3979 = vmatprep.subr.mxu0 0.0
    %3980 = vmatpush1.msra.mxu0 0.0
    %3981 = vmatprep.subr.mxu0 0.0
    %3982 = vmatpush1.msra.mxu0 0.0
    %3983 = vmatprep.subr.mxu0 0.0
    %3984 = vmatpush1.msra.mxu0 0.0
    %3985 = vmatprep.subr.mxu0 0.0
    %3986 = vmatpush1.msra.mxu0 0.0
    %3987 = vmatprep.subr.mxu0 0.0
    %3988 = vmatpush1.msra.mxu0 0.0
    %3989 = vmatprep.subr.mxu0 0.0
    %3990 = vmatpush1.msra.mxu0 0.0
    %3991 = vmatprep.subr.mxu0 0.0
    %3992 = vmatpush1.msra.mxu0 0.0
    %3993 = vmatprep.subr.mxu0 0.0
    %3994 = vmatpush1.msra.mxu0 0.0
    %3995 = vmatprep.subr.mxu0 0.0
    %3996 = vmatpush1.msra.mxu0 0.0
    %3997 = vmatprep.subr.mxu0 0.0
    %3998 = vmatpush1.msra.mxu0 0.0
    %3999 = vmatprep.subr.mxu0 0.0
    %4000 = vmatpush1.msra.mxu0 0.0
    %4001 = vmatprep.subr.mxu0 0.0
    %4002 = vmatpush1.msra.mxu0 0.0
    %4003 = vmatprep.subr.mxu0 0.0
    %4004 = vmatpush1.msra.mxu0 0.0
    %4005 = vmatprep.subr.mxu0 0.0
    %4006 = vmatpush1.msra.mxu0 0.0
    %4007 = vmatprep.subr.mxu0 0.0
    %4008 = vmatpush1.msra.mxu0 0.0
    %4009 = vmatprep.subr.mxu0 0.0
    %4010 = vmatpush1.msra.mxu0 0.0
    %4011 = vmatprep.subr.mxu0 0.0
    %4012 = vmatpush1.msra.mxu0 0.0
    %4013 = vmatprep.subr.mxu0 0.0
    %4014 = vmatpush1.msra.mxu0 0.0
    %4015 = vmatprep.mubr.f32.mxu0 0.0
    %v4016 = vand.u32 %v1854, 4294901760
    %v4017 = vsub.f32 %v1854, %v4016
    %v4018 = vand.u32 %v4017, 4294901760
    %4019 = vmatmul.mubr.f32.gmra.mrb[0].mxu0 %v4018
    %v4020 = vpop.f32.mrb[0].mxu0
    %v4021 = vadd.f32 %v3944, %v4020
    %v4022 = vpop.f32.mrb[0].mxu0
    %4023 = vdwg.mxu0
    %4024 = vmatprep.subr.mxu0 0.0
    %v4025 = vand.u32 %v3689, 4294901760
    %v4026 = vsub.f32 %v3689, %v4025
    %v4027 = vand.u32 %v4026, 4294901760
    %4028 = vmatpush1.msra.mxu0 %v4027
    %4029 = vmatprep.subr.mxu0 0.0
    %v4030 = vand.u32 %v3690, 4294901760
    %v4031 = vsub.f32 %v3690, %v4030
    %v4032 = vand.u32 %v4031, 4294901760
    %4033 = vmatpush1.msra.mxu0 %v4032
    %4034 = vmatprep.subr.mxu0 0.0
    %v4035 = vand.u32 %v3691, 4294901760
    %v4036 = vsub.f32 %v3691, %v4035
    %v4037 = vand.u32 %v4036, 4294901760
    %4038 = vmatpush1.msra.mxu0 %v4037
    %4039 = vmatprep.subr.mxu0 0.0
    %v4040 = vand.u32 %v3692, 4294901760
    %v4041 = vsub.f32 %v3692, %v4040
    %v4042 = vand.u32 %v4041, 4294901760
    %4043 = vmatpush1.msra.mxu0 %v4042
    %4044 = vmatprep.subr.mxu0 0.0
    %4045 = vmatpush1.msra.mxu0 0.0
    %4046 = vmatprep.subr.mxu0 0.0
    %4047 = vmatpush1.msra.mxu0 0.0
    %4048 = vmatprep.subr.mxu0 0.0
    %4049 = vmatpush1.msra.mxu0 0.0
    %4050 = vmatprep.subr.mxu0 0.0
    %4051 = vmatpush1.msra.mxu0 0.0
    %4052 = vmatprep.subr.mxu0 0.0
    %4053 = vmatpush1.msra.mxu0 0.0
    %4054 = vmatprep.subr.mxu0 0.0
    %4055 = vmatpush1.msra.mxu0 0.0
    %4056 = vmatprep.subr.mxu0 0.0
    %4057 = vmatpush1.msra.mxu0 0.0
    %4058 = vmatprep.subr.mxu0 0.0
    %4059 = vmatpush1.msra.mxu0 0.0
    %4060 = vmatprep.subr.mxu0 0.0
    %4061 = vmatpush1.msra.mxu0 0.0
    %4062 = vmatprep.subr.mxu0 0.0
    %4063 = vmatpush1.msra.mxu0 0.0
    %4064 = vmatprep.subr.mxu0 0.0
    %4065 = vmatpush1.msra.mxu0 0.0
    %4066 = vmatprep.subr.mxu0 0.0
    %4067 = vmatpush1.msra.mxu0 0.0
    %4068 = vmatprep.subr.mxu0 0.0
    %4069 = vmatpush1.msra.mxu0 0.0
    %4070 = vmatprep.subr.mxu0 0.0
    %4071 = vmatpush1.msra.mxu0 0.0
    %4072 = vmatprep.subr.mxu0 0.0
    %4073 = vmatpush1.msra.mxu0 0.0
    %4074 = vmatprep.subr.mxu0 0.0
    %4075 = vmatpush1.msra.mxu0 0.0
    %4076 = vmatprep.subr.mxu0 0.0
    %4077 = vmatpush1.msra.mxu0 0.0
    %4078 = vmatprep.subr.mxu0 0.0
    %4079 = vmatpush1.msra.mxu0 0.0
    %4080 = vmatprep.subr.mxu0 0.0
    %4081 = vmatpush1.msra.mxu0 0.0
    %4082 = vmatprep.subr.mxu0 0.0
    %4083 = vmatpush1.msra.mxu0 0.0
    %4084 = vmatprep.subr.mxu0 0.0
    %4085 = vmatpush1.msra.mxu0 0.0
    %4086 = vmatprep.subr.mxu0 0.0
    %4087 = vmatpush1.msra.mxu0 0.0
    %4088 = vmatprep.subr.mxu0 0.0
    %4089 = vmatpush1.msra.mxu0 0.0
    %4090 = vmatprep.subr.mxu0 0.0
    %4091 = vmatpush1.msra.mxu0 0.0
    %4092 = vmatprep.subr.mxu0 0.0
    %4093 = vmatpush1.msra.mxu0 0.0
    %4094 = vmatprep.subr.mxu0 0.0
    %4095 = vmatpush1.msra.mxu0 0.0
    %4096 = vmatprep.subr.mxu0 0.0
    %4097 = vmatpush1.msra.mxu0 0.0
    %4098 = vmatprep.subr.mxu0 0.0
    %4099 = vmatpush1.msra.mxu0 0.0
    %4100 = vmatprep.mubr.f32.mxu0 0.0
    %v4101 = vand.u32 %v1854, 4294901760
    %4102 = vmatmul.mubr.f32.gmra.mrb[0].mxu0 %v4101
    %v4103 = vpop.f32.mrb[0].mxu0
    %v4104 = vadd.f32 %v4021, %v4103
    %v4105 = vpop.f32.mrb[0].mxu0
    %4106 = vdwg.mxu0
    %4107 = vmatprep.subr.mxu0 0.0
    %v4108 = vand.u32 %v3689, 4294901760
    %4109 = vmatpush1.msra.mxu0 %v4108
    %4110 = vmatprep.subr.mxu0 0.0
    %v4111 = vand.u32 %v3690, 4294901760
    %4112 = vmatpush1.msra.mxu0 %v4111
    %4113 = vmatprep.subr.mxu0 0.0
    %v4114 = vand.u32 %v3691, 4294901760
    %4115 = vmatpush1.msra.mxu0 %v4114
    %4116 = vmatprep.subr.mxu0 0.0
    %v4117 = vand.u32 %v3692, 4294901760
    %4118 = vmatpush1.msra.mxu0 %v4117
    %4119 = vmatprep.subr.mxu0 0.0
    %4120 = vmatpush1.msra.mxu0 0.0
    %4121 = vmatprep.subr.mxu0 0.0
    %4122 = vmatpush1.msra.mxu0 0.0
    %4123 = vmatprep.subr.mxu0 0.0
    %4124 = vmatpush1.msra.mxu0 0.0
    %4125 = vmatprep.subr.mxu0 0.0
    %4126 = vmatpush1.msra.mxu0 0.0
    %4127 = vmatprep.subr.mxu0 0.0
    %4128 = vmatpush1.msra.mxu0 0.0
    %4129 = vmatprep.subr.mxu0 0.0
    %4130 = vmatpush1.msra.mxu0 0.0
    %4131 = vmatprep.subr.mxu0 0.0
    %4132 = vmatpush1.msra.mxu0 0.0
    %4133 = vmatprep.subr.mxu0 0.0
    %4134 = vmatpush1.msra.mxu0 0.0
    %4135 = vmatprep.subr.mxu0 0.0
    %4136 = vmatpush1.msra.mxu0 0.0
    %4137 = vmatprep.subr.mxu0 0.0
    %4138 = vmatpush1.msra.mxu0 0.0
    %4139 = vmatprep.subr.mxu0 0.0
    %4140 = vmatpush1.msra.mxu0 0.0
    %4141 = vmatprep.subr.mxu0 0.0
    %4142 = vmatpush1.msra.mxu0 0.0
    %4143 = vmatprep.subr.mxu0 0.0
    %4144 = vmatpush1.msra.mxu0 0.0
    %4145 = vmatprep.subr.mxu0 0.0
    %4146 = vmatpush1.msra.mxu0 0.0
    %4147 = vmatprep.subr.mxu0 0.0
    %4148 = vmatpush1.msra.mxu0 0.0
    %4149 = vmatprep.subr.mxu0 0.0
    %4150 = vmatpush1.msra.mxu0 0.0
    %4151 = vmatprep.subr.mxu0 0.0
    %4152 = vmatpush1.msra.mxu0 0.0
    %4153 = vmatprep.subr.mxu0 0.0
    %4154 = vmatpush1.msra.mxu0 0.0
    %4155 = vmatprep.subr.mxu0 0.0
    %4156 = vmatpush1.msra.mxu0 0.0
    %4157 = vmatprep.subr.mxu0 0.0
    %4158 = vmatpush1.msra.mxu0 0.0
    %4159 = vmatprep.subr.mxu0 0.0
    %4160 = vmatpush1.msra.mxu0 0.0
    %4161 = vmatprep.subr.mxu0 0.0
    %4162 = vmatpush1.msra.mxu0 0.0
    %4163 = vmatprep.subr.mxu0 0.0
    %4164 = vmatpush1.msra.mxu0 0.0
    %4165 = vmatprep.subr.mxu0 0.0
    %4166 = vmatpush1.msra.mxu0 0.0
    %4167 = vmatprep.subr.mxu0 0.0
    %4168 = vmatpush1.msra.mxu0 0.0
    %4169 = vmatprep.subr.mxu0 0.0
    %4170 = vmatpush1.msra.mxu0 0.0
    %4171 = vmatprep.subr.mxu0 0.0
    %4172 = vmatpush1.msra.mxu0 0.0
    %4173 = vmatprep.subr.mxu0 0.0
    %4174 = vmatpush1.msra.mxu0 0.0
    %4175 = vmatprep.mubr.f32.mxu0 0.0
    %v4176 = vand.u32 %v1854, 4294901760
    %4177 = vmatmul.mubr.f32.gmra.mrb[0].mxu0 %v4176
    %v4178 = vpop.f32.mrb[0].mxu0
    %v4179 = vadd.f32 %v4104, %v4178
    %v4180 = vpop.f32.mrb[0].mxu0
    %4181 = vdwg.mxu0
    %s4182 = scalar_lea.vmem [#allocation11], 8
    %4183 = vst [vmem:[%s4182] sm:$0xff] %v4179
    %4184 = vst [vmem:[#allocation8] sm:$0xff] %v4179
    // Predicated region
    $region46: #{tpu_custom_call.1} parent=1 // pred_check
      _
    $region47: #{tpu_custom_call.1} parent=1 // pred_check_branch
      %4186 = sbr.rel (0) target = $region49
    $region48: #{tpu_custom_call.1} parent=1 // pred_region
      %s4188 = ssub.s32 128, 128
      %4189 = vsyncadd [#allocation5], %s4188
      %s4191 = sshll.u32 [#allocation8], 4
      %s4192 = int_to_ptr.vmem [resolvable:$true] %s4191
      %4194 = dma.vmem_to_hbm [thread:$0]  %s4192, 128, %s9, [#allocation5]
    $region49: #{tpu_custom_call.1} parent=1 // pred_fallthru
      _
    // Predicated region
    $region50: #{tpu_custom_call.1} parent=1 // pred_check
      _
    $region51: #{tpu_custom_call.1} parent=1 // pred_check_branch
      %4196 = sbr.rel (0) target = $region53
    $region52: #{tpu_custom_call.1} parent=1 // pred_region
      %s4198 = ssub.s32 512, 512
      %4199 = vsyncadd [#allocation10], %s4198
      %s4200 = sshll.u32 [#allocation9], 4
      %s4201 = int_to_ptr.vmem [resolvable:$true] %s4200
      %4206 = dma.vmem_to_hbm [thread:$0]  %s4201, 512, %s10, [#allocation10], 128, 128, 8
    $region53: #{tpu_custom_call.1} parent=1 // pred_fallthru
      _
    // Predicated region
    $region54: #{tpu_custom_call.1} parent=1 // pred_check
      _
    $region55: #{tpu_custom_call.1} parent=1 // pred_check_branch
      %4208 = sbr.rel (0) target = $region57
    $region56: #{tpu_custom_call.1} parent=1 // pred_region
      %s4210 = ssub.s32 256, 256
      %4211 = vsyncadd [#allocation10], %s4210
      %s4212 = sshll.u32 [#allocation11], 4
      %s4213 = int_to_ptr.vmem [resolvable:$true] %s4212
      %4218 = dma.vmem_to_hbm [thread:$0]  %s4213, 256, %s11, [#allocation10], 128, 128, 8
    $region57: #{tpu_custom_call.1} parent=1 // pred_fallthru
      _
    // Predicated region
    $region58: #{tpu_custom_call.1} parent=1 // pred_check
      _
    $region59: #{tpu_custom_call.1} parent=1 // pred_check_branch
      %4220 = sbr.rel (0) target = $region61
    $region60: #{tpu_custom_call.1} parent=1 // pred_region
      %4221 = dma.done [#allocation5], 128
    $region61: #{tpu_custom_call.1} parent=1 // pred_fallthru
      _
    // Predicated region
    $region62: #{tpu_custom_call.1} parent=1 // pred_check
      _
    $region63: #{tpu_custom_call.1} parent=1 // pred_check_branch
      %4223 = sbr.rel (0) target = $region65
    $region64: #{tpu_custom_call.1} parent=1 // pred_region
      %4224 = dma.done [#allocation10], 512
    $region65: #{tpu_custom_call.1} parent=1 // pred_fallthru
      _
    // Predicated region
    $region66: #{tpu_custom_call.1} parent=1 // pred_check
      _
    $region67: #{tpu_custom_call.1} parent=1 // pred_check_branch
      %4226 = sbr.rel (0) target = $region69
    $region68: #{tpu_custom_call.1} parent=1 // pred_region
      %4227 = dma.done [#allocation10], 256
    $region69: #{tpu_custom_call.1} parent=1 // pred_fallthru
      _
    %4228 = vsyncpa [#allocation4], 1
    %4229 = vsyncpa [#allocation7], 1
    %4230 = vsyncpa [#allocation5], 1
    %4231 = vsyncpa [#allocation10], 1

</llo_original>
